<compile_context>
chip_gen: v7x
topology: tpu7x:2x2x1
jax: 0.10.0
libtpu: 0.0.40
codegen_flags: <defaults>
</compile_context>

<pallas_src>
import functools

import jax
import jax.numpy as jnp
import numpy as np
from jax import lax
from jax.experimental import pallas as pl
from jax.experimental.pallas import tpu as pltpu

IN_FEATS = 39   # encoder_fc input features
ENC_DIM = 32    # encoder_fc output / LSTM input size
HIDDEN = 64     # LSTM hidden size per direction
OUT_DIM = 2     # final_fc output size


def _baseline_lstm_kernel(T, Bp,
                          x_ref, w_in_ref, whh_ref,
                          w_fin_ref, b_fin_ref,
                          out_ref):
    H = HIDDEN

    # Hoist loop-invariant operands (avoid per-unrolled-iteration ref reads).
    w_in = w_in_ref[...]        # (2F+1, 8H) fused encoder+input-gate weights (+bias row)
    whh = whh_ref[...]          # (2H, 8H)  block-diagonal recurrence weights, both dirs

    def step(s, carry):
        h_cat, c_cat = carry                    # (Bp, 2H) each, layout [fwd | bwd]
        row = pl.multiple_of(s * Bp, 8)         # sublane-aligned dynamic slice
        x_t = x_ref[pl.ds(row, Bp), :]          # (Bp, 2F+1): [c_t | c_{T-1-t} | 1]
        # x-side dot is independent of the carry -> off the serial critical path;
        # h-side dot is the recurrence.  Bias is inside w_in via the ones column.
        g = (jnp.dot(x_t, w_in, preferred_element_type=jnp.float32)
             + jnp.dot(h_cat, whh, preferred_element_type=jnp.float32))   # (Bp, 8H)
        # gate columns: [i_f i_b | f_f f_b | g_f g_b | o_f o_b] -> each group is a
        # lane-contiguous (Bp, 2H) slab covering both directions at once.
        i = jax.nn.sigmoid(g[:, 0 * H:2 * H])
        f = jax.nn.sigmoid(g[:, 2 * H:4 * H])
        gg = jnp.tanh(g[:, 4 * H:6 * H])
        o = jax.nn.sigmoid(g[:, 6 * H:8 * H])
        c_new = f * c_cat + i * gg
        h_new = o * jnp.tanh(c_new)
        return h_new, c_new

    z = jnp.zeros((Bp, 2 * H), jnp.float32)
    unroll = True if T <= 32 else 8
    _, c_cat = lax.fori_loop(0, T, step, (z, z), unroll=unroll)

    # `hidden` = concat of final cell states of both directions == c_cat.
    out = jnp.dot(c_cat, w_fin_ref[...],
                  preferred_element_type=jnp.float32) + b_fin_ref[...]
    out_ref[...] = out.astype(out_ref.dtype)


def _interleave_gate_cols(a_f, a_b):
    """Rearrange two per-direction (..., 4H) gate blocks (PyTorch order i|f|g|o)
    into a single (..., 8H) block laid out [i_f i_b | f_f f_b | g_f g_b | o_f o_b]."""
    H = HIDDEN
    parts = []
    for k in range(4):
        parts.append(a_f[..., k * H:(k + 1) * H])
        parts.append(a_b[..., k * H:(k + 1) * H])
    return jnp.concatenate(parts, axis=-1)


def baseline_lstm_forward(c, params):
    """c: (B, T, 39) float32 -> (B, 2) float32."""
    B, T, F = c.shape
    assert F == IN_FEATS
    H = HIDDEN
    Bp = max(8, -(-B // 8) * 8)     # pad batch/sublane dim to a multiple of 8

    # glue: batch-first -> time-major, zero-pad batch rows, build the doubled
    # feature layout [c_t | c_{T-1-t} | 1]; the ones column carries the fused bias.
    c_tm = jnp.transpose(c, (1, 0, 2))                        # (T, B, 39)
    if Bp != B:
        c_tm = jnp.pad(c_tm, ((0, 0), (0, Bp - B), (0, 0)))
    ones = jnp.ones((T, Bp, 1), jnp.float32)
    x2 = jnp.concatenate([c_tm, c_tm[::-1], ones], axis=-1)   # (T, Bp, 79)
    x_flat = x2.reshape(T * Bp, 2 * F + 1)

    # ---- algebraic fusion: fold encoder Linear + all biases into the input-gate
    # weights.  Row blocks: [0:39) fwd features, [39:78) bwd features, [78] bias. ----
    wcf = params["w_enc"] @ params["wih_f"]                   # (39, 4H)
    wcb = params["w_enc"] @ params["wih_b"]                   # (39, 4H)
    bcf = params["b_enc"] @ params["wih_f"] + params["b_f"]   # (1, 4H)
    bcb = params["b_enc"] @ params["wih_b"] + params["b_b"]   # (1, 4H)
    zf = jnp.zeros_like(wcf)
    w_in = jnp.concatenate([_interleave_gate_cols(wcf, zf),
                            _interleave_gate_cols(zf, wcb),
                            _interleave_gate_cols(bcf, bcb)], axis=0)    # (79, 8H)

    # block-diagonal recurrence weights for the fused (Bp,2H)x(2H,8H) step matmul
    zh = jnp.zeros_like(params["whh_f"])
    whh = jnp.concatenate([_interleave_gate_cols(params["whh_f"], zh),
                           _interleave_gate_cols(zh, params["whh_b"])], axis=0)  # (2H, 8H)

    # Keep everything f32: bf16 staging would double MXU throughput on v6e/v7x
    # but is skipped to preserve the tight rtol=1e-4 reference check.
    # Whole input sits in VMEM (no scratch buffer anymore): ~4 KB / timestep.
    x_vmem_bytes = T * Bp * 128 * 4        # last dim lane-pads 79 -> 128
    compiler_params = None
    if x_vmem_bytes > (12 << 20):
        compiler_params = pltpu.CompilerParams(
            vmem_limit_bytes=int(min(x_vmem_bytes + (8 << 20), 100 << 20)))

    vmem = pl.BlockSpec(memory_space=pltpu.MemorySpace.VMEM)
    kernel = functools.partial(_baseline_lstm_kernel, T, Bp)
    out = pl.pallas_call(
        kernel,
        out_shape=jax.ShapeDtypeStruct((Bp, OUT_DIM), jnp.float32),
        in_specs=[vmem] * 5,
        out_specs=vmem,
        compiler_params=compiler_params,
    )(x_flat, w_in, whh, params["w_fin"], params["b_fin"])
    return out[:B]


def init_params(key):
    """Deterministic synthetic init mirroring the PyTorch parameter shapes
    (weights stored transposed for right-multiplication, gate order i|f|g|o)."""
    ks = jax.random.split(key, 12)
    H, G = HIDDEN, 4 * HIDDEN

    def u(k, shape, bound):
        return jax.random.uniform(k, shape, jnp.float32, -bound, bound)

    k_enc = 1.0 / np.sqrt(IN_FEATS)
    k_lstm = 1.0 / np.sqrt(H)
    k_fin = 1.0 / np.sqrt(2 * H)
    return dict(
        w_enc=u(ks[0], (IN_FEATS, ENC_DIM), k_enc),
        b_enc=u(ks[1], (1, ENC_DIM), k_enc),
        wih_f=u(ks[2], (ENC_DIM, G), k_lstm),
        whh_f=u(ks[3], (H, G), k_lstm),
        b_f=u(ks[4], (1, G), k_lstm) + u(ks[5], (1, G), k_lstm),   # bias_ih + bias_hh
        wih_b=u(ks[6], (ENC_DIM, G), k_lstm),
        whh_b=u(ks[7], (H, G), k_lstm),
        b_b=u(ks[8], (1, G), k_lstm) + u(ks[9], (1, G), k_lstm),
        w_fin=u(ks[10], (2 * H, OUT_DIM), k_fin),
        b_fin=u(ks[11], (1, OUT_DIM), k_fin),
    )


def reference_forward(c, p):
    """Pure-JAX reference replicating the same semantics (for validation)."""
    B, T, _ = c.shape
    H = HIDDEN
    x = c @ p["w_enc"] + p["b_enc"]

    def cell(x_t, h, cst, wih, whh, b):
        g = x_t @ wih + h @ whh + b
        i = jax.nn.sigmoid(g[:, :H])
        f = jax.nn.sigmoid(g[:, H:2 * H])
        gg = jnp.tanh(g[:, 2 * H:3 * H])
        o = jax.nn.sigmoid(g[:, 3 * H:])
        cst = f * cst + i * gg
        return o * jnp.tanh(cst), cst

    h_f = c_f = h_b = c_b = jnp.zeros((B, H), jnp.float32)
    for t in range(T):
        h_f, c_f = cell(x[:, t, :], h_f, c_f, p["wih_f"], p["whh_f"], p["b_f"])
        h_b, c_b = cell(x[:, T - 1 - t, :], h_b, c_b, p["wih_b"], p["whh_b"], p["b_b"])
    hidden = jnp.concatenate([c_f, c_b], axis=1)
    return hidden @ p["w_fin"] + p["b_fin"]


if __name__ == "__main__":
    key = jax.random.PRNGKey(0)
    pkey, xkey = jax.random.split(key)
    params = init_params(pkey)

    B, T = 2, 8
    c = jax.random.normal(xkey, (B, T, IN_FEATS), jnp.float32)

    out = baseline_lstm_forward(c, params)
    out = jax.block_until_ready(out)
    assert out.shape == (B, OUT_DIM)

    ref = reference_forward(c, params)
    np.testing.assert_allclose(np.asarray(out), np.asarray(ref), rtol=1e-4, atol=1e-4)

    print("KERNEL_OK")
</pallas_src>

<mosaic_0001>
module attributes {stable_mosaic.version = 11 : i64} {
  func.func @_baseline_lstm_kernel(%arg0: memref<64x79xf32, #tpu.memory_space<vmem>>, %arg1: memref<79x512xf32, #tpu.memory_space<vmem>>, %arg2: memref<128x512xf32, #tpu.memory_space<vmem>>, %arg3: memref<128x2xf32, #tpu.memory_space<vmem>>, %arg4: memref<1x2xf32, #tpu.memory_space<vmem>>, %arg5: memref<8x2xf32, #tpu.memory_space<vmem>>) attributes {dimension_semantics = [], scalar_prefetch = 0 : i64, scratch_operands = 0 : i64, tpu.core_type = #tpu.core_type<tc>} {
    %c0 = arith.constant 0 : index
    %c0_0 = arith.constant 0 : index
    %0 = vector.load %arg1[%c0, %c0_0] : memref<79x512xf32, #tpu.memory_space<vmem>>, vector<79x512xf32>
    %c0_1 = arith.constant 0 : index
    %c0_2 = arith.constant 0 : index
    %1 = vector.load %arg2[%c0_1, %c0_2] : memref<128x512xf32, #tpu.memory_space<vmem>>, vector<128x512xf32>
    %cst = arith.constant 0.000000e+00 : f32
    %2 = vector.broadcast %cst : f32 to vector<8x128xf32>
    %c0_i32 = arith.constant 0 : i32
    %c8_i32 = arith.constant 8 : i32
    %3 = arith.muli %c0_i32, %c8_i32 : i32
    %4 = tpu.assume_multiple %3, 8 : i32
    %5 = arith.index_cast %4 : i32 to index
    %c0_3 = arith.constant 0 : index
    %6 = vector.load %arg0[%5, %c0_3] : memref<64x79xf32, #tpu.memory_space<vmem>>, vector<8x79xf32>
    %cst_4 = arith.constant dense<0.000000e+00> : vector<8x512xf32>
    %7 = tpu.matmul %6, %0, %cst_4 {dimension_numbers = #tpu.dot_dimension_numbers<[1], [0], [0], [1], [0, 0, 1, 1], [], []>} : vector<8x79xf32>, vector<79x512xf32>, vector<8x512xf32> -> vector<8x512xf32>
    %cst_5 = arith.constant dense<0.000000e+00> : vector<8x512xf32>
    %8 = tpu.matmul %2, %1, %cst_5 {dimension_numbers = #tpu.dot_dimension_numbers<[1], [0], [0], [1], [0, 0, 1, 1], [], []>} : vector<8x128xf32>, vector<128x512xf32>, vector<8x512xf32> -> vector<8x512xf32>
    %9 = arith.addf %7, %8 : vector<8x512xf32>
    %10 = vector.extract_strided_slice %9 {offsets = [0, 0], sizes = [8, 128], strides = [1, 1]} : vector<8x512xf32> to vector<8x128xf32>
    %11 = arith.negf %10 : vector<8x128xf32>
    %12 = math.exp %11 : vector<8x128xf32>
    %cst_6 = arith.constant 1.000000e+00 : f32
    %13 = vector.broadcast %cst_6 : f32 to vector<8x128xf32>
    %14 = arith.addf %13, %12 : vector<8x128xf32>
    %15 = arith.divf %13, %14 : vector<8x128xf32>
    %16 = vector.extract_strided_slice %9 {offsets = [0, 128], sizes = [8, 128], strides = [1, 1]} : vector<8x512xf32> to vector<8x128xf32>
    %17 = arith.negf %16 : vector<8x128xf32>
    %18 = math.exp %17 : vector<8x128xf32>
    %cst_7 = arith.constant 1.000000e+00 : f32
    %19 = vector.broadcast %cst_7 : f32 to vector<8x128xf32>
    %20 = arith.addf %19, %18 : vector<8x128xf32>
    %21 = arith.divf %19, %20 : vector<8x128xf32>
    %22 = vector.extract_strided_slice %9 {offsets = [0, 256], sizes = [8, 128], strides = [1, 1]} : vector<8x512xf32> to vector<8x128xf32>
    %23 = math.tanh %22 : vector<8x128xf32>
    %24 = vector.extract_strided_slice %9 {offsets = [0, 384], sizes = [8, 128], strides = [1, 1]} : vector<8x512xf32> to vector<8x128xf32>
    %25 = arith.negf %24 : vector<8x128xf32>
    %26 = math.exp %25 : vector<8x128xf32>
    %cst_8 = arith.constant 1.000000e+00 : f32
    %27 = vector.broadcast %cst_8 : f32 to vector<8x128xf32>
    %28 = arith.addf %27, %26 : vector<8x128xf32>
    %29 = arith.divf %27, %28 : vector<8x128xf32>
    %30 = arith.mulf %21, %2 : vector<8x128xf32>
    %31 = arith.mulf %15, %23 : vector<8x128xf32>
    %32 = arith.addf %30, %31 : vector<8x128xf32>
    %33 = math.tanh %32 : vector<8x128xf32>
    %34 = arith.mulf %29, %33 : vector<8x128xf32>
    %c1_i32 = arith.constant 1 : i32
    %c8_i32_9 = arith.constant 8 : i32
    %35 = arith.muli %c1_i32, %c8_i32_9 : i32
    %36 = tpu.assume_multiple %35, 8 : i32
    %37 = arith.index_cast %36 : i32 to index
    %c0_10 = arith.constant 0 : index
    %38 = vector.load %arg0[%37, %c0_10] : memref<64x79xf32, #tpu.memory_space<vmem>>, vector<8x79xf32>
    %cst_11 = arith.constant dense<0.000000e+00> : vector<8x512xf32>
    %39 = tpu.matmul %38, %0, %cst_11 {dimension_numbers = #tpu.dot_dimension_numbers<[1], [0], [0], [1], [0, 0, 1, 1], [], []>} : vector<8x79xf32>, vector<79x512xf32>, vector<8x512xf32> -> vector<8x512xf32>
    %cst_12 = arith.constant dense<0.000000e+00> : vector<8x512xf32>
    %40 = tpu.matmul %34, %1, %cst_12 {dimension_numbers = #tpu.dot_dimension_numbers<[1], [0], [0], [1], [0, 0, 1, 1], [], []>} : vector<8x128xf32>, vector<128x512xf32>, vector<8x512xf32> -> vector<8x512xf32>
    %41 = arith.addf %39, %40 : vector<8x512xf32>
    %42 = vector.extract_strided_slice %41 {offsets = [0, 0], sizes = [8, 128], strides = [1, 1]} : vector<8x512xf32> to vector<8x128xf32>
    %43 = arith.negf %42 : vector<8x128xf32>
    %44 = math.exp %43 : vector<8x128xf32>
    %cst_13 = arith.constant 1.000000e+00 : f32
    %45 = vector.broadcast %cst_13 : f32 to vector<8x128xf32>
    %46 = arith.addf %45, %44 : vector<8x128xf32>
    %47 = arith.divf %45, %46 : vector<8x128xf32>
    %48 = vector.extract_strided_slice %41 {offsets = [0, 128], sizes = [8, 128], strides = [1, 1]} : vector<8x512xf32> to vector<8x128xf32>
    %49 = arith.negf %48 : vector<8x128xf32>
    %50 = math.exp %49 : vector<8x128xf32>
    %cst_14 = arith.constant 1.000000e+00 : f32
    %51 = vector.broadcast %cst_14 : f32 to vector<8x128xf32>
    %52 = arith.addf %51, %50 : vector<8x128xf32>
    %53 = arith.divf %51, %52 : vector<8x128xf32>
    %54 = vector.extract_strided_slice %41 {offsets = [0, 256], sizes = [8, 128], strides = [1, 1]} : vector<8x512xf32> to vector<8x128xf32>
    %55 = math.tanh %54 : vector<8x128xf32>
    %56 = vector.extract_strided_slice %41 {offsets = [0, 384], sizes = [8, 128], strides = [1, 1]} : vector<8x512xf32> to vector<8x128xf32>
    %57 = arith.negf %56 : vector<8x128xf32>
    %58 = math.exp %57 : vector<8x128xf32>
    %cst_15 = arith.constant 1.000000e+00 : f32
    %59 = vector.broadcast %cst_15 : f32 to vector<8x128xf32>
    %60 = arith.addf %59, %58 : vector<8x128xf32>
    %61 = arith.divf %59, %60 : vector<8x128xf32>
    %62 = arith.mulf %53, %32 : vector<8x128xf32>
    %63 = arith.mulf %47, %55 : vector<8x128xf32>
    %64 = arith.addf %62, %63 : vector<8x128xf32>
    %65 = math.tanh %64 : vector<8x128xf32>
    %66 = arith.mulf %61, %65 : vector<8x128xf32>
    %c2_i32 = arith.constant 2 : i32
    %c8_i32_16 = arith.constant 8 : i32
    %67 = arith.muli %c2_i32, %c8_i32_16 : i32
    %68 = tpu.assume_multiple %67, 8 : i32
    %69 = arith.index_cast %68 : i32 to index
    %c0_17 = arith.constant 0 : index
    %70 = vector.load %arg0[%69, %c0_17] : memref<64x79xf32, #tpu.memory_space<vmem>>, vector<8x79xf32>
    %cst_18 = arith.constant dense<0.000000e+00> : vector<8x512xf32>
    %71 = tpu.matmul %70, %0, %cst_18 {dimension_numbers = #tpu.dot_dimension_numbers<[1], [0], [0], [1], [0, 0, 1, 1], [], []>} : vector<8x79xf32>, vector<79x512xf32>, vector<8x512xf32> -> vector<8x512xf32>
    %cst_19 = arith.constant dense<0.000000e+00> : vector<8x512xf32>
    %72 = tpu.matmul %66, %1, %cst_19 {dimension_numbers = #tpu.dot_dimension_numbers<[1], [0], [0], [1], [0, 0, 1, 1], [], []>} : vector<8x128xf32>, vector<128x512xf32>, vector<8x512xf32> -> vector<8x512xf32>
    %73 = arith.addf %71, %72 : vector<8x512xf32>
    %74 = vector.extract_strided_slice %73 {offsets = [0, 0], sizes = [8, 128], strides = [1, 1]} : vector<8x512xf32> to vector<8x128xf32>
    %75 = arith.negf %74 : vector<8x128xf32>
    %76 = math.exp %75 : vector<8x128xf32>
    %cst_20 = arith.constant 1.000000e+00 : f32
    %77 = vector.broadcast %cst_20 : f32 to vector<8x128xf32>
    %78 = arith.addf %77, %76 : vector<8x128xf32>
    %79 = arith.divf %77, %78 : vector<8x128xf32>
    %80 = vector.extract_strided_slice %73 {offsets = [0, 128], sizes = [8, 128], strides = [1, 1]} : vector<8x512xf32> to vector<8x128xf32>
    %81 = arith.negf %80 : vector<8x128xf32>
    %82 = math.exp %81 : vector<8x128xf32>
    %cst_21 = arith.constant 1.000000e+00 : f32
    %83 = vector.broadcast %cst_21 : f32 to vector<8x128xf32>
    %84 = arith.addf %83, %82 : vector<8x128xf32>
    %85 = arith.divf %83, %84 : vector<8x128xf32>
    %86 = vector.extract_strided_slice %73 {offsets = [0, 256], sizes = [8, 128], strides = [1, 1]} : vector<8x512xf32> to vector<8x128xf32>
    %87 = math.tanh %86 : vector<8x128xf32>
    %88 = vector.extract_strided_slice %73 {offsets = [0, 384], sizes = [8, 128], strides = [1, 1]} : vector<8x512xf32> to vector<8x128xf32>
    %89 = arith.negf %88 : vector<8x128xf32>
    %90 = math.exp %89 : vector<8x128xf32>
    %cst_22 = arith.constant 1.000000e+00 : f32
    %91 = vector.broadcast %cst_22 : f32 to vector<8x128xf32>
    %92 = arith.addf %91, %90 : vector<8x128xf32>
    %93 = arith.divf %91, %92 : vector<8x128xf32>
    %94 = arith.mulf %85, %64 : vector<8x128xf32>
    %95 = arith.mulf %79, %87 : vector<8x128xf32>
    %96 = arith.addf %94, %95 : vector<8x128xf32>
    %97 = math.tanh %96 : vector<8x128xf32>
    %98 = arith.mulf %93, %97 : vector<8x128xf32>
    %c3_i32 = arith.constant 3 : i32
    %c8_i32_23 = arith.constant 8 : i32
    %99 = arith.muli %c3_i32, %c8_i32_23 : i32
    %100 = tpu.assume_multiple %99, 8 : i32
    %101 = arith.index_cast %100 : i32 to index
    %c0_24 = arith.constant 0 : index
    %102 = vector.load %arg0[%101, %c0_24] : memref<64x79xf32, #tpu.memory_space<vmem>>, vector<8x79xf32>
    %cst_25 = arith.constant dense<0.000000e+00> : vector<8x512xf32>
    %103 = tpu.matmul %102, %0, %cst_25 {dimension_numbers = #tpu.dot_dimension_numbers<[1], [0], [0], [1], [0, 0, 1, 1], [], []>} : vector<8x79xf32>, vector<79x512xf32>, vector<8x512xf32> -> vector<8x512xf32>
    %cst_26 = arith.constant dense<0.000000e+00> : vector<8x512xf32>
    %104 = tpu.matmul %98, %1, %cst_26 {dimension_numbers = #tpu.dot_dimension_numbers<[1], [0], [0], [1], [0, 0, 1, 1], [], []>} : vector<8x128xf32>, vector<128x512xf32>, vector<8x512xf32> -> vector<8x512xf32>
    %105 = arith.addf %103, %104 : vector<8x512xf32>
    %106 = vector.extract_strided_slice %105 {offsets = [0, 0], sizes = [8, 128], strides = [1, 1]} : vector<8x512xf32> to vector<8x128xf32>
    %107 = arith.negf %106 : vector<8x128xf32>
    %108 = math.exp %107 : vector<8x128xf32>
    %cst_27 = arith.constant 1.000000e+00 : f32
    %109 = vector.broadcast %cst_27 : f32 to vector<8x128xf32>
    %110 = arith.addf %109, %108 : vector<8x128xf32>
    %111 = arith.divf %109, %110 : vector<8x128xf32>
    %112 = vector.extract_strided_slice %105 {offsets = [0, 128], sizes = [8, 128], strides = [1, 1]} : vector<8x512xf32> to vector<8x128xf32>
    %113 = arith.negf %112 : vector<8x128xf32>
    %114 = math.exp %113 : vector<8x128xf32>
    %cst_28 = arith.constant 1.000000e+00 : f32
    %115 = vector.broadcast %cst_28 : f32 to vector<8x128xf32>
    %116 = arith.addf %115, %114 : vector<8x128xf32>
    %117 = arith.divf %115, %116 : vector<8x128xf32>
    %118 = vector.extract_strided_slice %105 {offsets = [0, 256], sizes = [8, 128], strides = [1, 1]} : vector<8x512xf32> to vector<8x128xf32>
    %119 = math.tanh %118 : vector<8x128xf32>
    %120 = vector.extract_strided_slice %105 {offsets = [0, 384], sizes = [8, 128], strides = [1, 1]} : vector<8x512xf32> to vector<8x128xf32>
    %121 = arith.negf %120 : vector<8x128xf32>
    %122 = math.exp %121 : vector<8x128xf32>
    %cst_29 = arith.constant 1.000000e+00 : f32
    %123 = vector.broadcast %cst_29 : f32 to vector<8x128xf32>
    %124 = arith.addf %123, %122 : vector<8x128xf32>
    %125 = arith.divf %123, %124 : vector<8x128xf32>
    %126 = arith.mulf %117, %96 : vector<8x128xf32>
    %127 = arith.mulf %111, %119 : vector<8x128xf32>
    %128 = arith.addf %126, %127 : vector<8x128xf32>
    %129 = math.tanh %128 : vector<8x128xf32>
    %130 = arith.mulf %125, %129 : vector<8x128xf32>
    %c4_i32 = arith.constant 4 : i32
    %c8_i32_30 = arith.constant 8 : i32
    %131 = arith.muli %c4_i32, %c8_i32_30 : i32
    %132 = tpu.assume_multiple %131, 8 : i32
    %133 = arith.index_cast %132 : i32 to index
    %c0_31 = arith.constant 0 : index
    %134 = vector.load %arg0[%133, %c0_31] : memref<64x79xf32, #tpu.memory_space<vmem>>, vector<8x79xf32>
    %cst_32 = arith.constant dense<0.000000e+00> : vector<8x512xf32>
    %135 = tpu.matmul %134, %0, %cst_32 {dimension_numbers = #tpu.dot_dimension_numbers<[1], [0], [0], [1], [0, 0, 1, 1], [], []>} : vector<8x79xf32>, vector<79x512xf32>, vector<8x512xf32> -> vector<8x512xf32>
    %cst_33 = arith.constant dense<0.000000e+00> : vector<8x512xf32>
    %136 = tpu.matmul %130, %1, %cst_33 {dimension_numbers = #tpu.dot_dimension_numbers<[1], [0], [0], [1], [0, 0, 1, 1], [], []>} : vector<8x128xf32>, vector<128x512xf32>, vector<8x512xf32> -> vector<8x512xf32>
    %137 = arith.addf %135, %136 : vector<8x512xf32>
    %138 = vector.extract_strided_slice %137 {offsets = [0, 0], sizes = [8, 128], strides = [1, 1]} : vector<8x512xf32> to vector<8x128xf32>
    %139 = arith.negf %138 : vector<8x128xf32>
    %140 = math.exp %139 : vector<8x128xf32>
    %cst_34 = arith.constant 1.000000e+00 : f32
    %141 = vector.broadcast %cst_34 : f32 to vector<8x128xf32>
    %142 = arith.addf %141, %140 : vector<8x128xf32>
    %143 = arith.divf %141, %142 : vector<8x128xf32>
    %144 = vector.extract_strided_slice %137 {offsets = [0, 128], sizes = [8, 128], strides = [1, 1]} : vector<8x512xf32> to vector<8x128xf32>
    %145 = arith.negf %144 : vector<8x128xf32>
    %146 = math.exp %145 : vector<8x128xf32>
    %cst_35 = arith.constant 1.000000e+00 : f32
    %147 = vector.broadcast %cst_35 : f32 to vector<8x128xf32>
    %148 = arith.addf %147, %146 : vector<8x128xf32>
    %149 = arith.divf %147, %148 : vector<8x128xf32>
    %150 = vector.extract_strided_slice %137 {offsets = [0, 256], sizes = [8, 128], strides = [1, 1]} : vector<8x512xf32> to vector<8x128xf32>
    %151 = math.tanh %150 : vector<8x128xf32>
    %152 = vector.extract_strided_slice %137 {offsets = [0, 384], sizes = [8, 128], strides = [1, 1]} : vector<8x512xf32> to vector<8x128xf32>
    %153 = arith.negf %152 : vector<8x128xf32>
    %154 = math.exp %153 : vector<8x128xf32>
    %cst_36 = arith.constant 1.000000e+00 : f32
    %155 = vector.broadcast %cst_36 : f32 to vector<8x128xf32>
    %156 = arith.addf %155, %154 : vector<8x128xf32>
    %157 = arith.divf %155, %156 : vector<8x128xf32>
    %158 = arith.mulf %149, %128 : vector<8x128xf32>
    %159 = arith.mulf %143, %151 : vector<8x128xf32>
    %160 = arith.addf %158, %159 : vector<8x128xf32>
    %161 = math.tanh %160 : vector<8x128xf32>
    %162 = arith.mulf %157, %161 : vector<8x128xf32>
    %c5_i32 = arith.constant 5 : i32
    %c8_i32_37 = arith.constant 8 : i32
    %163 = arith.muli %c5_i32, %c8_i32_37 : i32
    %164 = tpu.assume_multiple %163, 8 : i32
    %165 = arith.index_cast %164 : i32 to index
    %c0_38 = arith.constant 0 : index
    %166 = vector.load %arg0[%165, %c0_38] : memref<64x79xf32, #tpu.memory_space<vmem>>, vector<8x79xf32>
    %cst_39 = arith.constant dense<0.000000e+00> : vector<8x512xf32>
    %167 = tpu.matmul %166, %0, %cst_39 {dimension_numbers = #tpu.dot_dimension_numbers<[1], [0], [0], [1], [0, 0, 1, 1], [], []>} : vector<8x79xf32>, vector<79x512xf32>, vector<8x512xf32> -> vector<8x512xf32>
    %cst_40 = arith.constant dense<0.000000e+00> : vector<8x512xf32>
    %168 = tpu.matmul %162, %1, %cst_40 {dimension_numbers = #tpu.dot_dimension_numbers<[1], [0], [0], [1], [0, 0, 1, 1], [], []>} : vector<8x128xf32>, vector<128x512xf32>, vector<8x512xf32> -> vector<8x512xf32>
    %169 = arith.addf %167, %168 : vector<8x512xf32>
    %170 = vector.extract_strided_slice %169 {offsets = [0, 0], sizes = [8, 128], strides = [1, 1]} : vector<8x512xf32> to vector<8x128xf32>
    %171 = arith.negf %170 : vector<8x128xf32>
    %172 = math.exp %171 : vector<8x128xf32>
    %cst_41 = arith.constant 1.000000e+00 : f32
    %173 = vector.broadcast %cst_41 : f32 to vector<8x128xf32>
    %174 = arith.addf %173, %172 : vector<8x128xf32>
    %175 = arith.divf %173, %174 : vector<8x128xf32>
    %176 = vector.extract_strided_slice %169 {offsets = [0, 128], sizes = [8, 128], strides = [1, 1]} : vector<8x512xf32> to vector<8x128xf32>
    %177 = arith.negf %176 : vector<8x128xf32>
    %178 = math.exp %177 : vector<8x128xf32>
    %cst_42 = arith.constant 1.000000e+00 : f32
    %179 = vector.broadcast %cst_42 : f32 to vector<8x128xf32>
    %180 = arith.addf %179, %178 : vector<8x128xf32>
    %181 = arith.divf %179, %180 : vector<8x128xf32>
    %182 = vector.extract_strided_slice %169 {offsets = [0, 256], sizes = [8, 128], strides = [1, 1]} : vector<8x512xf32> to vector<8x128xf32>
    %183 = math.tanh %182 : vector<8x128xf32>
    %184 = vector.extract_strided_slice %169 {offsets = [0, 384], sizes = [8, 128], strides = [1, 1]} : vector<8x512xf32> to vector<8x128xf32>
    %185 = arith.negf %184 : vector<8x128xf32>
    %186 = math.exp %185 : vector<8x128xf32>
    %cst_43 = arith.constant 1.000000e+00 : f32
    %187 = vector.broadcast %cst_43 : f32 to vector<8x128xf32>
    %188 = arith.addf %187, %186 : vector<8x128xf32>
    %189 = arith.divf %187, %188 : vector<8x128xf32>
    %190 = arith.mulf %181, %160 : vector<8x128xf32>
    %191 = arith.mulf %175, %183 : vector<8x128xf32>
    %192 = arith.addf %190, %191 : vector<8x128xf32>
    %193 = math.tanh %192 : vector<8x128xf32>
    %194 = arith.mulf %189, %193 : vector<8x128xf32>
    %c6_i32 = arith.constant 6 : i32
    %c8_i32_44 = arith.constant 8 : i32
    %195 = arith.muli %c6_i32, %c8_i32_44 : i32
    %196 = tpu.assume_multiple %195, 8 : i32
    %197 = arith.index_cast %196 : i32 to index
    %c0_45 = arith.constant 0 : index
    %198 = vector.load %arg0[%197, %c0_45] : memref<64x79xf32, #tpu.memory_space<vmem>>, vector<8x79xf32>
    %cst_46 = arith.constant dense<0.000000e+00> : vector<8x512xf32>
    %199 = tpu.matmul %198, %0, %cst_46 {dimension_numbers = #tpu.dot_dimension_numbers<[1], [0], [0], [1], [0, 0, 1, 1], [], []>} : vector<8x79xf32>, vector<79x512xf32>, vector<8x512xf32> -> vector<8x512xf32>
    %cst_47 = arith.constant dense<0.000000e+00> : vector<8x512xf32>
    %200 = tpu.matmul %194, %1, %cst_47 {dimension_numbers = #tpu.dot_dimension_numbers<[1], [0], [0], [1], [0, 0, 1, 1], [], []>} : vector<8x128xf32>, vector<128x512xf32>, vector<8x512xf32> -> vector<8x512xf32>
    %201 = arith.addf %199, %200 : vector<8x512xf32>
    %202 = vector.extract_strided_slice %201 {offsets = [0, 0], sizes = [8, 128], strides = [1, 1]} : vector<8x512xf32> to vector<8x128xf32>
    %203 = arith.negf %202 : vector<8x128xf32>
    %204 = math.exp %203 : vector<8x128xf32>
    %cst_48 = arith.constant 1.000000e+00 : f32
    %205 = vector.broadcast %cst_48 : f32 to vector<8x128xf32>
    %206 = arith.addf %205, %204 : vector<8x128xf32>
    %207 = arith.divf %205, %206 : vector<8x128xf32>
    %208 = vector.extract_strided_slice %201 {offsets = [0, 128], sizes = [8, 128], strides = [1, 1]} : vector<8x512xf32> to vector<8x128xf32>
    %209 = arith.negf %208 : vector<8x128xf32>
    %210 = math.exp %209 : vector<8x128xf32>
    %cst_49 = arith.constant 1.000000e+00 : f32
    %211 = vector.broadcast %cst_49 : f32 to vector<8x128xf32>
    %212 = arith.addf %211, %210 : vector<8x128xf32>
    %213 = arith.divf %211, %212 : vector<8x128xf32>
    %214 = vector.extract_strided_slice %201 {offsets = [0, 256], sizes = [8, 128], strides = [1, 1]} : vector<8x512xf32> to vector<8x128xf32>
    %215 = math.tanh %214 : vector<8x128xf32>
    %216 = vector.extract_strided_slice %201 {offsets = [0, 384], sizes = [8, 128], strides = [1, 1]} : vector<8x512xf32> to vector<8x128xf32>
    %217 = arith.negf %216 : vector<8x128xf32>
    %218 = math.exp %217 : vector<8x128xf32>
    %cst_50 = arith.constant 1.000000e+00 : f32
    %219 = vector.broadcast %cst_50 : f32 to vector<8x128xf32>
    %220 = arith.addf %219, %218 : vector<8x128xf32>
    %221 = arith.divf %219, %220 : vector<8x128xf32>
    %222 = arith.mulf %213, %192 : vector<8x128xf32>
    %223 = arith.mulf %207, %215 : vector<8x128xf32>
    %224 = arith.addf %222, %223 : vector<8x128xf32>
    %225 = math.tanh %224 : vector<8x128xf32>
    %226 = arith.mulf %221, %225 : vector<8x128xf32>
    %c7_i32 = arith.constant 7 : i32
    %c8_i32_51 = arith.constant 8 : i32
    %227 = arith.muli %c7_i32, %c8_i32_51 : i32
    %228 = tpu.assume_multiple %227, 8 : i32
    %229 = arith.index_cast %228 : i32 to index
    %c0_52 = arith.constant 0 : index
    %230 = vector.load %arg0[%229, %c0_52] : memref<64x79xf32, #tpu.memory_space<vmem>>, vector<8x79xf32>
    %cst_53 = arith.constant dense<0.000000e+00> : vector<8x512xf32>
    %231 = tpu.matmul %230, %0, %cst_53 {dimension_numbers = #tpu.dot_dimension_numbers<[1], [0], [0], [1], [0, 0, 1, 1], [], []>} : vector<8x79xf32>, vector<79x512xf32>, vector<8x512xf32> -> vector<8x512xf32>
    %cst_54 = arith.constant dense<0.000000e+00> : vector<8x512xf32>
    %232 = tpu.matmul %226, %1, %cst_54 {dimension_numbers = #tpu.dot_dimension_numbers<[1], [0], [0], [1], [0, 0, 1, 1], [], []>} : vector<8x128xf32>, vector<128x512xf32>, vector<8x512xf32> -> vector<8x512xf32>
    %233 = arith.addf %231, %232 : vector<8x512xf32>
    %234 = vector.extract_strided_slice %233 {offsets = [0, 0], sizes = [8, 128], strides = [1, 1]} : vector<8x512xf32> to vector<8x128xf32>
    %235 = arith.negf %234 : vector<8x128xf32>
    %236 = math.exp %235 : vector<8x128xf32>
    %cst_55 = arith.constant 1.000000e+00 : f32
    %237 = vector.broadcast %cst_55 : f32 to vector<8x128xf32>
    %238 = arith.addf %237, %236 : vector<8x128xf32>
    %239 = arith.divf %237, %238 : vector<8x128xf32>
    %240 = vector.extract_strided_slice %233 {offsets = [0, 128], sizes = [8, 128], strides = [1, 1]} : vector<8x512xf32> to vector<8x128xf32>
    %241 = arith.negf %240 : vector<8x128xf32>
    %242 = math.exp %241 : vector<8x128xf32>
    %cst_56 = arith.constant 1.000000e+00 : f32
    %243 = vector.broadcast %cst_56 : f32 to vector<8x128xf32>
    %244 = arith.addf %243, %242 : vector<8x128xf32>
    %245 = arith.divf %243, %244 : vector<8x128xf32>
    %246 = vector.extract_strided_slice %233 {offsets = [0, 256], sizes = [8, 128], strides = [1, 1]} : vector<8x512xf32> to vector<8x128xf32>
    %247 = math.tanh %246 : vector<8x128xf32>
    %248 = vector.extract_strided_slice %233 {offsets = [0, 384], sizes = [8, 128], strides = [1, 1]} : vector<8x512xf32> to vector<8x128xf32>
    %249 = arith.negf %248 : vector<8x128xf32>
    %250 = math.exp %249 : vector<8x128xf32>
    %cst_57 = arith.constant 1.000000e+00 : f32
    %251 = vector.broadcast %cst_57 : f32 to vector<8x128xf32>
    %252 = arith.addf %251, %250 : vector<8x128xf32>
    %253 = arith.divf %251, %252 : vector<8x128xf32>
    %254 = arith.mulf %245, %224 : vector<8x128xf32>
    %255 = arith.mulf %239, %247 : vector<8x128xf32>
    %256 = arith.addf %254, %255 : vector<8x128xf32>
    %257 = math.tanh %256 : vector<8x128xf32>
    %258 = arith.mulf %253, %257 : vector<8x128xf32>
    %c8_i32_58 = arith.constant 8 : i32
    %c0_59 = arith.constant 0 : index
    %c0_60 = arith.constant 0 : index
    %259 = vector.load %arg3[%c0_59, %c0_60] : memref<128x2xf32, #tpu.memory_space<vmem>>, vector<128x2xf32>
    %cst_61 = arith.constant dense<0.000000e+00> : vector<8x2xf32>
    %260 = tpu.matmul %256, %259, %cst_61 {dimension_numbers = #tpu.dot_dimension_numbers<[1], [0], [0], [1], [0, 0, 1, 1], [], []>} : vector<8x128xf32>, vector<128x2xf32>, vector<8x2xf32> -> vector<8x2xf32>
    %c0_62 = arith.constant 0 : index
    %c0_63 = arith.constant 0 : index
    %261 = vector.load %arg4[%c0_62, %c0_63] : memref<1x2xf32, #tpu.memory_space<vmem>>, vector<1x2xf32>
    %262 = vector.broadcast %261 : vector<1x2xf32> to vector<8x2xf32>
    %263 = arith.addf %260, %262 : vector<8x2xf32>
    %c0_64 = arith.constant 0 : index
    %c0_65 = arith.constant 0 : index
    %264 = vector.load %arg5[%c0_64, %c0_65] : memref<8x2xf32, #tpu.memory_space<vmem>>, vector<8x2xf32>
    tpu.vector_store %arg5[%c0_64, %c0_65], %263 {strides = array<i32>} : memref<8x2xf32, #tpu.memory_space<vmem>>, vector<8x2xf32>,
    return
  }
}

</mosaic_0001>

<llo_original>
// kernel: tpu_custom_call.1
$region0: #{tpu_custom_call.1}
  #allocation0 [shape = 'u32[]', space=smem, size = 0x4, offset = 0x4, fixed_abs, tag = 'smem constant byte address 0x4 - core index']
  #allocation1 [shape = 'u32[144,128]{1,0:T(1,128)}', space=vmem, size = 0x12000, scoped, tag = 'internal scratch']
  %s0 = inlined_call_operand.vmem [shape: f32[64,79], index: 0, kind: input, shape index: {}]
  %s1 = inlined_call_operand.hbm [shape: f32[79,512], index: 1, kind: input, shape index: {}]
  %s2 = inlined_call_operand.hbm [shape: f32[128,512], index: 2, kind: input, shape index: {}]
  %s3 = inlined_call_operand.vmem [shape: f32[128,2], index: 3, kind: input, shape index: {}]
  %s4 = inlined_call_operand.vmem [shape: f32[1,2], index: 4, kind: input, shape index: {}]
  %s5 = inlined_call_operand.vmem [shape: f32[8,2], index: 5, kind: output, shape index: {}]
  %s6 = sld [smem:[#allocation0]]
  $region38: #{tpu_custom_call.1} parent=0
    _
  %s8 = ssub.s32 1, %s6
  %s9 = scalar_select 0, %s8, %s6
  $region1: #{tpu_custom_call.1} parent=0
    #allocation2 [shape = 'u8[163840]{0}', space=vmem, size = 0x28000, scoped, tag = 'input window, operand 1, single buffered']
    #allocation3 [shape = 's32[1]{0}', space=sflag, size = 0x4, scoped, tag = 'scoped memory for tpu_custom_call.1']
    #allocation4 [shape = 'u8[262144]{0}', space=vmem, size = 0x40000, scoped, tag = 'input window, operand 2, single buffered']
    #allocation5 [shape = 's32[1]{0}', space=sflag, size = 0x4, scoped, tag = 'scoped memory for tpu_custom_call.1']
    %10 = vsyncpa [#allocation3], 0
    %11 = vsyncpa [#allocation5], 0
    // Predicated region
    $region2: #{tpu_custom_call.1} parent=1 // pred_check
      _
    $region3: #{tpu_custom_call.1} parent=1 // pred_check_branch
      %13 = sbr.rel (0) target = $region5
    $region4: #{tpu_custom_call.1} parent=1 // pred_region
      _
    $region5: #{tpu_custom_call.1} parent=1 // pred_fallthru
      _
    // Predicated region
    $region6: #{tpu_custom_call.1} parent=1 // pred_check
      _
    $region7: #{tpu_custom_call.1} parent=1 // pred_check_branch
      %15 = sbr.rel (0) target = $region9
    $region8: #{tpu_custom_call.1} parent=1 // pred_region
      %s17 = ssub.s32 5120, 5120
      %18 = vsyncadd [#allocation3], %s17
      %s19 = sshll.u32 [#allocation2], 4
      %s20 = int_to_ptr.vmem [resolvable:$true] %s19
      %25 = dma.hbm_to_vmem [thread:$0]  %s1, 5120, %s20, [#allocation3], 512, 512, 32
    $region9: #{tpu_custom_call.1} parent=1 // pred_fallthru
      _
    // Predicated region
    $region10: #{tpu_custom_call.1} parent=1 // pred_check
      _
    $region11: #{tpu_custom_call.1} parent=1 // pred_check_branch
      %27 = sbr.rel (0) target = $region13
    $region12: #{tpu_custom_call.1} parent=1 // pred_region
      %s29 = ssub.s32 8192, 8192
      %30 = vsyncadd [#allocation5], %s29
      %s31 = sshll.u32 [#allocation4], 4
      %s32 = int_to_ptr.vmem [resolvable:$true] %s31
      %37 = dma.hbm_to_vmem [thread:$0]  %s2, 8192, %s32, [#allocation5], 512, 512, 32
    $region13: #{tpu_custom_call.1} parent=1 // pred_fallthru
      _
    // Predicated region
    $region14: #{tpu_custom_call.1} parent=1 // pred_check
      _
    $region15: #{tpu_custom_call.1} parent=1 // pred_check_branch
      %39 = sbr.rel (0) target = $region17
    $region16: #{tpu_custom_call.1} parent=1 // pred_region
      _
    $region17: #{tpu_custom_call.1} parent=1 // pred_fallthru
      _
    // Predicated region
    $region18: #{tpu_custom_call.1} parent=1 // pred_check
      _
    $region19: #{tpu_custom_call.1} parent=1 // pred_check_branch
      %41 = sbr.rel (0) target = $region21
    $region20: #{tpu_custom_call.1} parent=1 // pred_region
      _
    $region21: #{tpu_custom_call.1} parent=1 // pred_fallthru
      _
    // Predicated region
    $region22: #{tpu_custom_call.1} parent=1 // pred_check
      _
    $region23: #{tpu_custom_call.1} parent=1 // pred_check_branch
      %43 = sbr.rel (0) target = $region25
    $region24: #{tpu_custom_call.1} parent=1 // pred_region
      %44 = dma.done [#allocation3], 5120
    $region25: #{tpu_custom_call.1} parent=1 // pred_fallthru
      _
    // Predicated region
    $region26: #{tpu_custom_call.1} parent=1 // pred_check
      _
    $region27: #{tpu_custom_call.1} parent=1 // pred_check_branch
      %46 = sbr.rel (0) target = $region29
    $region28: #{tpu_custom_call.1} parent=1 // pred_region
      %47 = dma.done [#allocation5], 8192
    $region29: #{tpu_custom_call.1} parent=1 // pred_fallthru
      _
    %v48 = vld [vmem:[#allocation2] sm:$0xff]
    %v49 = vld [vmem:[#allocation2 + $0x8] sm:$0xff]
    %v50 = vld [vmem:[#allocation2 + $0x10] sm:$0xff]
    %v51 = vld [vmem:[#allocation2 + $0x18] sm:$0xff]
    %v52 = vld [vmem:[#allocation2 + $0x20] sm:$0xff]
    %v53 = vld [vmem:[#allocation2 + $0x28] sm:$0xff]
    %v54 = vld [vmem:[#allocation2 + $0x30] sm:$0xff]
    %v55 = vld [vmem:[#allocation2 + $0x38] sm:$0xff]
    %v56 = vld [vmem:[#allocation2 + $0x40] sm:$0xff]
    %v57 = vld [vmem:[#allocation2 + $0x48] sm:$0xff]
    %v58 = vld [vmem:[#allocation2 + $0x50] sm:$0xff]
    %v59 = vld [vmem:[#allocation2 + $0x58] sm:$0xff]
    %v60 = vld [vmem:[#allocation2 + $0x60] sm:$0xff]
    %v61 = vld [vmem:[#allocation2 + $0x68] sm:$0xff]
    %v62 = vld [vmem:[#allocation2 + $0x70] sm:$0xff]
    %v63 = vld [vmem:[#allocation2 + $0x78] sm:$0xff]
    %v64 = vld [vmem:[#allocation2 + $0x80] sm:$0xff]
    %v65 = vld [vmem:[#allocation2 + $0x88] sm:$0xff]
    %v66 = vld [vmem:[#allocation2 + $0x90] sm:$0xff]
    %v67 = vld [vmem:[#allocation2 + $0x98] sm:$0xff]
    %v68 = vld [vmem:[#allocation2 + $0xa0] sm:$0xff]
    %v69 = vld [vmem:[#allocation2 + $0xa8] sm:$0xff]
    %v70 = vld [vmem:[#allocation2 + $0xb0] sm:$0xff]
    %v71 = vld [vmem:[#allocation2 + $0xb8] sm:$0xff]
    %v72 = vld [vmem:[#allocation2 + $0xc0] sm:$0xff]
    %v73 = vld [vmem:[#allocation2 + $0xc8] sm:$0xff]
    %v74 = vld [vmem:[#allocation2 + $0xd0] sm:$0xff]
    %v75 = vld [vmem:[#allocation2 + $0xd8] sm:$0xff]
    %v76 = vld [vmem:[#allocation2 + $0xe0] sm:$0xff]
    %v77 = vld [vmem:[#allocation2 + $0xe8] sm:$0xff]
    %v78 = vld [vmem:[#allocation2 + $0xf0] sm:$0xff]
    %v79 = vld [vmem:[#allocation2 + $0xf8] sm:$0xff]
    %v80 = vld [vmem:[#allocation2 + $0x100] sm:$0xff]
    %v81 = vld [vmem:[#allocation2 + $0x108] sm:$0xff]
    %v82 = vld [vmem:[#allocation2 + $0x110] sm:$0xff]
    %v83 = vld [vmem:[#allocation2 + $0x118] sm:$0xff]
    %v84 = vld [vmem:[#allocation2 + $0x120] sm:$0x7f]
    %v85 = vld [vmem:[#allocation2 + $0x128] sm:$0x7f]
    %v86 = vld [vmem:[#allocation2 + $0x130] sm:$0x7f]
    %v87 = vld [vmem:[#allocation2 + $0x138] sm:$0x7f]
    %v88 = vld [vmem:[#allocation4] sm:$0xff]
    %v89 = vld [vmem:[#allocation4 + $0x8] sm:$0xff]
    %v90 = vld [vmem:[#allocation4 + $0x10] sm:$0xff]
    %v91 = vld [vmem:[#allocation4 + $0x18] sm:$0xff]
    %v92 = vld [vmem:[#allocation4 + $0x20] sm:$0xff]
    %v93 = vld [vmem:[#allocation4 + $0x28] sm:$0xff]
    %v94 = vld [vmem:[#allocation4 + $0x30] sm:$0xff]
    %v95 = vld [vmem:[#allocation4 + $0x38] sm:$0xff]
    %v96 = vld [vmem:[#allocation4 + $0x40] sm:$0xff]
    %v97 = vld [vmem:[#allocation4 + $0x48] sm:$0xff]
    %v98 = vld [vmem:[#allocation4 + $0x50] sm:$0xff]
    %v99 = vld [vmem:[#allocation4 + $0x58] sm:$0xff]
    %v100 = vld [vmem:[#allocation4 + $0x60] sm:$0xff]
    %v101 = vld [vmem:[#allocation4 + $0x68] sm:$0xff]
    %v102 = vld [vmem:[#allocation4 + $0x70] sm:$0xff]
    %v103 = vld [vmem:[#allocation4 + $0x78] sm:$0xff]
    %v104 = vld [vmem:[#allocation4 + $0x80] sm:$0xff]
    %v105 = vld [vmem:[#allocation4 + $0x88] sm:$0xff]
    %v106 = vld [vmem:[#allocation4 + $0x90] sm:$0xff]
    %v107 = vld [vmem:[#allocation4 + $0x98] sm:$0xff]
    %v108 = vld [vmem:[#allocation4 + $0xa0] sm:$0xff]
    %v109 = vld [vmem:[#allocation4 + $0xa8] sm:$0xff]
    %v110 = vld [vmem:[#allocation4 + $0xb0] sm:$0xff]
    %v111 = vld [vmem:[#allocation4 + $0xb8] sm:$0xff]
    %v112 = vld [vmem:[#allocation4 + $0xc0] sm:$0xff]
    %v113 = vld [vmem:[#allocation4 + $0xc8] sm:$0xff]
    %v114 = vld [vmem:[#allocation4 + $0xd0] sm:$0xff]
    %v115 = vld [vmem:[#allocation4 + $0xd8] sm:$0xff]
    %v116 = vld [vmem:[#allocation4 + $0xe0] sm:$0xff]
    %v117 = vld [vmem:[#allocation4 + $0xe8] sm:$0xff]
    %v118 = vld [vmem:[#allocation4 + $0xf0] sm:$0xff]
    %v119 = vld [vmem:[#allocation4 + $0xf8] sm:$0xff]
    %v120 = vld [vmem:[#allocation4 + $0x100] sm:$0xff]
    %v121 = vld [vmem:[#allocation4 + $0x108] sm:$0xff]
    %v122 = vld [vmem:[#allocation4 + $0x110] sm:$0xff]
    %v123 = vld [vmem:[#allocation4 + $0x118] sm:$0xff]
    %v124 = vld [vmem:[#allocation4 + $0x120] sm:$0xff]
    %v125 = vld [vmem:[#allocation4 + $0x128] sm:$0xff]
    %v126 = vld [vmem:[#allocation4 + $0x130] sm:$0xff]
    %v127 = vld [vmem:[#allocation4 + $0x138] sm:$0xff]
    %v128 = vld [vmem:[#allocation4 + $0x140] sm:$0xff]
    %v129 = vld [vmem:[#allocation4 + $0x148] sm:$0xff]
    %v130 = vld [vmem:[#allocation4 + $0x150] sm:$0xff]
    %v131 = vld [vmem:[#allocation4 + $0x158] sm:$0xff]
    %v132 = vld [vmem:[#allocation4 + $0x160] sm:$0xff]
    %v133 = vld [vmem:[#allocation4 + $0x168] sm:$0xff]
    %v134 = vld [vmem:[#allocation4 + $0x170] sm:$0xff]
    %v135 = vld [vmem:[#allocation4 + $0x178] sm:$0xff]
    %v136 = vld [vmem:[#allocation4 + $0x180] sm:$0xff]
    %v137 = vld [vmem:[#allocation4 + $0x188] sm:$0xff]
    %v138 = vld [vmem:[#allocation4 + $0x190] sm:$0xff]
    %v139 = vld [vmem:[#allocation4 + $0x198] sm:$0xff]
    %v140 = vld [vmem:[#allocation4 + $0x1a0] sm:$0xff]
    %v141 = vld [vmem:[#allocation4 + $0x1a8] sm:$0xff]
    %v142 = vld [vmem:[#allocation4 + $0x1b0] sm:$0xff]
    %v143 = vld [vmem:[#allocation4 + $0x1b8] sm:$0xff]
    %v144 = vld [vmem:[#allocation4 + $0x1c0] sm:$0xff]
    %v145 = vld [vmem:[#allocation4 + $0x1c8] sm:$0xff]
    %v146 = vld [vmem:[#allocation4 + $0x1d0] sm:$0xff]
    %v147 = vld [vmem:[#allocation4 + $0x1d8] sm:$0xff]
    %v148 = vld [vmem:[#allocation4 + $0x1e0] sm:$0xff]
    %v149 = vld [vmem:[#allocation4 + $0x1e8] sm:$0xff]
    %v150 = vld [vmem:[#allocation4 + $0x1f0] sm:$0xff]
    %v151 = vld [vmem:[#allocation4 + $0x1f8] sm:$0xff]
    %v152 = vld [vmem:[%s0] sm:$0xff]
    %153 = vmatprep.subr.mxu0 %v89
    %154 = vmatpush1.msra.mxu0 %v88
    %155 = vmatprep.subr.mxu0 %v93
    %156 = vmatpush1.msra.mxu0 %v92
    %157 = vmatprep.subr.mxu0 %v97
    %158 = vmatpush1.msra.mxu0 %v96
    %159 = vmatprep.subr.mxu0 %v101
    %160 = vmatpush1.msra.mxu0 %v100
    %161 = vmatprep.subr.mxu0 %v105
    %162 = vmatpush1.msra.mxu0 %v104
    %163 = vmatprep.subr.mxu0 %v109
    %164 = vmatpush1.msra.mxu0 %v108
    %165 = vmatprep.subr.mxu0 %v113
    %166 = vmatpush1.msra.mxu0 %v112
    %167 = vmatprep.subr.mxu0 %v117
    %168 = vmatpush1.msra.mxu0 %v116
    %169 = vmatprep.subr.mxu0 %v121
    %170 = vmatpush1.msra.mxu0 %v120
    %171 = vmatprep.subr.mxu0 %v125
    %172 = vmatpush1.msra.mxu0 %v124
    %173 = vmatprep.subr.mxu0 %v129
    %174 = vmatpush1.msra.mxu0 %v128
    %175 = vmatprep.subr.mxu0 %v133
    %176 = vmatpush1.msra.mxu0 %v132
    %177 = vmatprep.subr.mxu0 %v137
    %178 = vmatpush1.msra.mxu0 %v136
    %179 = vmatprep.subr.mxu0 %v141
    %180 = vmatpush1.msra.mxu0 %v140
    %181 = vmatprep.subr.mxu0 %v145
    %182 = vmatpush1.msra.mxu0 %v144
    %183 = vmatprep.subr.mxu0 %v149
    %184 = vmatpush1.msra.mxu0 %v148
    %185 = vmatprep.subr.mxu0 0.0
    %186 = vmatpush1.msra.mxu0 0.0
    %187 = vmatprep.subr.mxu0 0.0
    %188 = vmatpush1.msra.mxu0 0.0
    %189 = vmatprep.subr.mxu0 0.0
    %190 = vmatpush1.msra.mxu0 0.0
    %191 = vmatprep.subr.mxu0 0.0
    %192 = vmatpush1.msra.mxu0 0.0
    %193 = vmatprep.subr.mxu0 0.0
    %194 = vmatpush1.msra.mxu0 0.0
    %195 = vmatprep.subr.mxu0 0.0
    %196 = vmatpush1.msra.mxu0 0.0
    %197 = vmatprep.subr.mxu0 0.0
    %198 = vmatpush1.msra.mxu0 0.0
    %199 = vmatprep.subr.mxu0 0.0
    %200 = vmatpush1.msra.mxu0 0.0
    %201 = vmatprep.subr.mxu0 0.0
    %202 = vmatpush1.msra.mxu0 0.0
    %203 = vmatprep.subr.mxu0 0.0
    %204 = vmatpush1.msra.mxu0 0.0
    %205 = vmatprep.subr.mxu0 0.0
    %206 = vmatpush1.msra.mxu0 0.0
    %207 = vmatprep.subr.mxu0 0.0
    %208 = vmatpush1.msra.mxu0 0.0
    %209 = vmatprep.subr.mxu0 0.0
    %210 = vmatpush1.msra.mxu0 0.0
    %211 = vmatprep.subr.mxu0 0.0
    %212 = vmatpush1.msra.mxu0 0.0
    %213 = vmatprep.subr.mxu0 0.0
    %214 = vmatpush1.msra.mxu0 0.0
    %215 = vmatprep.subr.mxu0 0.0
    %216 = vmatpush1.msra.mxu0 0.0
    %217 = vmatprep.mubr.f32.mxu0 0.0
    %218 = vmatmul.mubr.f32.gmra.mrb[0].mxu0 0.0
    %v219 = vpop.f32.mrb[0].mxu0
    %v220 = vadd.f32 0.0, %v219
    %v221 = vpop.f32.mrb[0].mxu0
    %v222 = vadd.f32 0.0, %v221
    %223 = vdwg.mxu0
    %224 = vmatprep.subr.mxu0 %v91
    %225 = vmatpush1.msra.mxu0 %v90
    %226 = vmatprep.subr.mxu0 %v95
    %227 = vmatpush1.msra.mxu0 %v94
    %228 = vmatprep.subr.mxu0 %v99
    %229 = vmatpush1.msra.mxu0 %v98
    %230 = vmatprep.subr.mxu0 %v103
    %231 = vmatpush1.msra.mxu0 %v102
    %232 = vmatprep.subr.mxu0 %v107
    %233 = vmatpush1.msra.mxu0 %v106
    %234 = vmatprep.subr.mxu0 %v111
    %235 = vmatpush1.msra.mxu0 %v110
    %236 = vmatprep.subr.mxu0 %v115
    %237 = vmatpush1.msra.mxu0 %v114
    %238 = vmatprep.subr.mxu0 %v119
    %239 = vmatpush1.msra.mxu0 %v118
    %240 = vmatprep.subr.mxu0 %v123
    %241 = vmatpush1.msra.mxu0 %v122
    %242 = vmatprep.subr.mxu0 %v127
    %243 = vmatpush1.msra.mxu0 %v126
    %244 = vmatprep.subr.mxu0 %v131
    %245 = vmatpush1.msra.mxu0 %v130
    %246 = vmatprep.subr.mxu0 %v135
    %247 = vmatpush1.msra.mxu0 %v134
    %248 = vmatprep.subr.mxu0 %v139
    %249 = vmatpush1.msra.mxu0 %v138
    %250 = vmatprep.subr.mxu0 %v143
    %251 = vmatpush1.msra.mxu0 %v142
    %252 = vmatprep.subr.mxu0 %v147
    %253 = vmatpush1.msra.mxu0 %v146
    %254 = vmatprep.subr.mxu0 %v151
    %255 = vmatpush1.msra.mxu0 %v150
    %256 = vmatprep.subr.mxu0 0.0
    %257 = vmatpush1.msra.mxu0 0.0
    %258 = vmatprep.subr.mxu0 0.0
    %259 = vmatpush1.msra.mxu0 0.0
    %260 = vmatprep.subr.mxu0 0.0
    %261 = vmatpush1.msra.mxu0 0.0
    %262 = vmatprep.subr.mxu0 0.0
    %263 = vmatpush1.msra.mxu0 0.0
    %264 = vmatprep.subr.mxu0 0.0
    %265 = vmatpush1.msra.mxu0 0.0
    %266 = vmatprep.subr.mxu0 0.0
    %267 = vmatpush1.msra.mxu0 0.0
    %268 = vmatprep.subr.mxu0 0.0
    %269 = vmatpush1.msra.mxu0 0.0
    %270 = vmatprep.subr.mxu0 0.0
    %271 = vmatpush1.msra.mxu0 0.0
    %272 = vmatprep.subr.mxu0 0.0
    %273 = vmatpush1.msra.mxu0 0.0
    %274 = vmatprep.subr.mxu0 0.0
    %275 = vmatpush1.msra.mxu0 0.0
    %276 = vmatprep.subr.mxu0 0.0
    %277 = vmatpush1.msra.mxu0 0.0
    %278 = vmatprep.subr.mxu0 0.0
    %279 = vmatpush1.msra.mxu0 0.0
    %280 = vmatprep.subr.mxu0 0.0
    %281 = vmatpush1.msra.mxu0 0.0
    %282 = vmatprep.subr.mxu0 0.0
    %283 = vmatpush1.msra.mxu0 0.0
    %284 = vmatprep.subr.mxu0 0.0
    %285 = vmatpush1.msra.mxu0 0.0
    %286 = vmatprep.subr.mxu0 0.0
    %287 = vmatpush1.msra.mxu0 0.0
    %288 = vmatprep.mubr.f32.mxu0 0.0
    %289 = vmatmul.mubr.f32.gmra.mrb[0].mxu0 0.0
    %v290 = vpop.f32.mrb[0].mxu0
    %v291 = vadd.f32 0.0, %v290
    %v292 = vpop.f32.mrb[0].mxu0
    %v293 = vadd.f32 0.0, %v292
    %294 = vdwg.mxu0
    %vm295 = vcmask 646144
    %v297 = vsel %vm295, %v152, 0
    %vm299 = vcmask 1046528
    %v301 = vsel %vm299, %v84, 0
    %v304 = vsel %vm299, %v85, 0
    %v307 = vsel %vm299, %v86, 0
    %v310 = vsel %vm299, %v87, 0
    %312 = vmatprep.subr.mxu0 %v49
    %313 = vmatpush1.msra.mxu0 %v48
    %314 = vmatprep.subr.mxu0 %v53
    %315 = vmatpush1.msra.mxu0 %v52
    %316 = vmatprep.subr.mxu0 %v57
    %317 = vmatpush1.msra.mxu0 %v56
    %318 = vmatprep.subr.mxu0 %v61
    %319 = vmatpush1.msra.mxu0 %v60
    %320 = vmatprep.subr.mxu0 %v65
    %321 = vmatpush1.msra.mxu0 %v64
    %322 = vmatprep.subr.mxu0 %v69
    %323 = vmatpush1.msra.mxu0 %v68
    %324 = vmatprep.subr.mxu0 %v73
    %325 = vmatpush1.msra.mxu0 %v72
    %326 = vmatprep.subr.mxu0 %v77
    %327 = vmatpush1.msra.mxu0 %v76
    %328 = vmatprep.subr.mxu0 %v81
    %329 = vmatpush1.msra.mxu0 %v80
    %330 = vmatprep.subr.mxu0 %v304
    %331 = vmatpush1.msra.mxu0 %v301
    %332 = vmatprep.subr.mxu0 0.0
    %333 = vmatpush1.msra.mxu0 0.0
    %334 = vmatprep.subr.mxu0 0.0
    %335 = vmatpush1.msra.mxu0 0.0
    %336 = vmatprep.subr.mxu0 0.0
    %337 = vmatpush1.msra.mxu0 0.0
    %338 = vmatprep.subr.mxu0 0.0
    %339 = vmatpush1.msra.mxu0 0.0
    %340 = vmatprep.subr.mxu0 0.0
    %341 = vmatpush1.msra.mxu0 0.0
    %342 = vmatprep.subr.mxu0 0.0
    %343 = vmatpush1.msra.mxu0 0.0
    %344 = vmatprep.subr.mxu0 0.0
    %345 = vmatpush1.msra.mxu0 0.0
    %346 = vmatprep.subr.mxu0 0.0
    %347 = vmatpush1.msra.mxu0 0.0
    %348 = vmatprep.subr.mxu0 0.0
    %349 = vmatpush1.msra.mxu0 0.0
    %350 = vmatprep.subr.mxu0 0.0
    %351 = vmatpush1.msra.mxu0 0.0
    %352 = vmatprep.subr.mxu0 0.0
    %353 = vmatpush1.msra.mxu0 0.0
    %354 = vmatprep.subr.mxu0 0.0
    %355 = vmatpush1.msra.mxu0 0.0
    %356 = vmatprep.subr.mxu0 0.0
    %357 = vmatpush1.msra.mxu0 0.0
    %358 = vmatprep.subr.mxu0 0.0
    %359 = vmatpush1.msra.mxu0 0.0
    %360 = vmatprep.subr.mxu0 0.0
    %361 = vmatpush1.msra.mxu0 0.0
    %362 = vmatprep.subr.mxu0 0.0
    %363 = vmatpush1.msra.mxu0 0.0
    %364 = vmatprep.subr.mxu0 0.0
    %365 = vmatpush1.msra.mxu0 0.0
    %366 = vmatprep.subr.mxu0 0.0
    %367 = vmatpush1.msra.mxu0 0.0
    %368 = vmatprep.subr.mxu0 0.0
    %369 = vmatpush1.msra.mxu0 0.0
    %370 = vmatprep.subr.mxu0 0.0
    %371 = vmatpush1.msra.mxu0 0.0
    %372 = vmatprep.subr.mxu0 0.0
    %373 = vmatpush1.msra.mxu0 0.0
    %374 = vmatprep.subr.mxu0 0.0
    %375 = vmatpush1.msra.mxu0 0.0
    %376 = vmatprep.mubr.f32.mxu0 0.0
    %377 = vmatmul.mubr.f32.gmra.mrb[0].mxu0 %v297
    %v378 = vpop.f32.mrb[0].mxu0
    %v379 = vadd.f32 %v220, %v378
    %v380 = vpop.f32.mrb[0].mxu0
    %v381 = vadd.f32 %v222, %v380
    %382 = vdwg.mxu0
    %383 = vmatprep.subr.mxu0 %v51
    %384 = vmatpush1.msra.mxu0 %v50
    %385 = vmatprep.subr.mxu0 %v55
    %386 = vmatpush1.msra.mxu0 %v54
    %387 = vmatprep.subr.mxu0 %v59
    %388 = vmatpush1.msra.mxu0 %v58
    %389 = vmatprep.subr.mxu0 %v63
    %390 = vmatpush1.msra.mxu0 %v62
    %391 = vmatprep.subr.mxu0 %v67
    %392 = vmatpush1.msra.mxu0 %v66
    %393 = vmatprep.subr.mxu0 %v71
    %394 = vmatpush1.msra.mxu0 %v70
    %395 = vmatprep.subr.mxu0 %v75
    %396 = vmatpush1.msra.mxu0 %v74
    %397 = vmatprep.subr.mxu0 %v79
    %398 = vmatpush1.msra.mxu0 %v78
    %399 = vmatprep.subr.mxu0 %v83
    %400 = vmatpush1.msra.mxu0 %v82
    %401 = vmatprep.subr.mxu0 %v310
    %402 = vmatpush1.msra.mxu0 %v307
    %403 = vmatprep.subr.mxu0 0.0
    %404 = vmatpush1.msra.mxu0 0.0
    %405 = vmatprep.subr.mxu0 0.0
    %406 = vmatpush1.msra.mxu0 0.0
    %407 = vmatprep.subr.mxu0 0.0
    %408 = vmatpush1.msra.mxu0 0.0
    %409 = vmatprep.subr.mxu0 0.0
    %410 = vmatpush1.msra.mxu0 0.0
    %411 = vmatprep.subr.mxu0 0.0
    %412 = vmatpush1.msra.mxu0 0.0
    %413 = vmatprep.subr.mxu0 0.0
    %414 = vmatpush1.msra.mxu0 0.0
    %415 = vmatprep.subr.mxu0 0.0
    %416 = vmatpush1.msra.mxu0 0.0
    %417 = vmatprep.subr.mxu0 0.0
    %418 = vmatpush1.msra.mxu0 0.0
    %419 = vmatprep.subr.mxu0 0.0
    %420 = vmatpush1.msra.mxu0 0.0
    %421 = vmatprep.subr.mxu0 0.0
    %422 = vmatpush1.msra.mxu0 0.0
    %423 = vmatprep.subr.mxu0 0.0
    %424 = vmatpush1.msra.mxu0 0.0
    %425 = vmatprep.subr.mxu0 0.0
    %426 = vmatpush1.msra.mxu0 0.0
    %427 = vmatprep.subr.mxu0 0.0
    %428 = vmatpush1.msra.mxu0 0.0
    %429 = vmatprep.subr.mxu0 0.0
    %430 = vmatpush1.msra.mxu0 0.0
    %431 = vmatprep.subr.mxu0 0.0
    %432 = vmatpush1.msra.mxu0 0.0
    %433 = vmatprep.subr.mxu0 0.0
    %434 = vmatpush1.msra.mxu0 0.0
    %435 = vmatprep.subr.mxu0 0.0
    %436 = vmatpush1.msra.mxu0 0.0
    %437 = vmatprep.subr.mxu0 0.0
    %438 = vmatpush1.msra.mxu0 0.0
    %439 = vmatprep.subr.mxu0 0.0
    %440 = vmatpush1.msra.mxu0 0.0
    %441 = vmatprep.subr.mxu0 0.0
    %442 = vmatpush1.msra.mxu0 0.0
    %443 = vmatprep.subr.mxu0 0.0
    %444 = vmatpush1.msra.mxu0 0.0
    %445 = vmatprep.subr.mxu0 0.0
    %446 = vmatpush1.msra.mxu0 0.0
    %447 = vmatprep.mubr.f32.mxu0 0.0
    %448 = vmatmul.mubr.f32.gmra.mrb[0].mxu0 %v297
    %v449 = vpop.f32.mrb[0].mxu0
    %v450 = vadd.f32 %v291, %v449
    %v451 = vpop.f32.mrb[0].mxu0
    %v452 = vadd.f32 %v293, %v451
    %453 = vdwg.mxu0
    %v454 = vxor.u32 %v379, 2147483648
    %v455 = vmul.f32 %v454, 1.442695
    %v456 = vpow.pop %v455
    %v457 = vadd.f32 %v456, 1.0
    %v458 = vrcp.pop %v457
    %v459 = vmul.f32 1.0, %v458
    %v460 = vxor.u32 %v381, 2147483648
    %v461 = vmul.f32 %v460, 1.442695
    %v462 = vpow.pop %v461
    %v463 = vadd.f32 %v462, 1.0
    %v464 = vrcp.pop %v463
    %v465 = vmul.f32 1.0, %v464
    %v466 = vtanh.pop %v450
    %v467 = vxor.u32 %v452, 2147483648
    %v468 = vmul.f32 %v467, 1.442695
    %v469 = vpow.pop %v468
    %v470 = vadd.f32 %v469, 1.0
    %v471 = vrcp.pop %v470
    %v472 = vmul.f32 1.0, %v471
    %v473 = vmul.f32 %v465, 0.0
    %v474 = vmul.f32 %v459, %v466
    %v475 = vadd.f32 %v473, %v474
    %v476 = vtanh.pop %v475
    %v477 = vmul.f32 %v472, %v476
    %s478 = scalar_lea.vmem %s0, 8
    %v479 = vld [vmem:[%s478] sm:$0xff]
    %480 = vmatprep.subr.mxu0 %v89
    %481 = vmatpush1.msra.mxu0 %v88
    %482 = vmatprep.subr.mxu0 %v93
    %483 = vmatpush1.msra.mxu0 %v92
    %484 = vmatprep.subr.mxu0 %v97
    %485 = vmatpush1.msra.mxu0 %v96
    %486 = vmatprep.subr.mxu0 %v101
    %487 = vmatpush1.msra.mxu0 %v100
    %488 = vmatprep.subr.mxu0 %v105
    %489 = vmatpush1.msra.mxu0 %v104
    %490 = vmatprep.subr.mxu0 %v109
    %491 = vmatpush1.msra.mxu0 %v108
    %492 = vmatprep.subr.mxu0 %v113
    %493 = vmatpush1.msra.mxu0 %v112
    %494 = vmatprep.subr.mxu0 %v117
    %495 = vmatpush1.msra.mxu0 %v116
    %496 = vmatprep.subr.mxu0 %v121
    %497 = vmatpush1.msra.mxu0 %v120
    %498 = vmatprep.subr.mxu0 %v125
    %499 = vmatpush1.msra.mxu0 %v124
    %500 = vmatprep.subr.mxu0 %v129
    %501 = vmatpush1.msra.mxu0 %v128
    %502 = vmatprep.subr.mxu0 %v133
    %503 = vmatpush1.msra.mxu0 %v132
    %504 = vmatprep.subr.mxu0 %v137
    %505 = vmatpush1.msra.mxu0 %v136
    %506 = vmatprep.subr.mxu0 %v141
    %507 = vmatpush1.msra.mxu0 %v140
    %508 = vmatprep.subr.mxu0 %v145
    %509 = vmatpush1.msra.mxu0 %v144
    %510 = vmatprep.subr.mxu0 %v149
    %511 = vmatpush1.msra.mxu0 %v148
    %512 = vmatprep.subr.mxu0 0.0
    %513 = vmatpush1.msra.mxu0 0.0
    %514 = vmatprep.subr.mxu0 0.0
    %515 = vmatpush1.msra.mxu0 0.0
    %516 = vmatprep.subr.mxu0 0.0
    %517 = vmatpush1.msra.mxu0 0.0
    %518 = vmatprep.subr.mxu0 0.0
    %519 = vmatpush1.msra.mxu0 0.0
    %520 = vmatprep.subr.mxu0 0.0
    %521 = vmatpush1.msra.mxu0 0.0
    %522 = vmatprep.subr.mxu0 0.0
    %523 = vmatpush1.msra.mxu0 0.0
    %524 = vmatprep.subr.mxu0 0.0
    %525 = vmatpush1.msra.mxu0 0.0
    %526 = vmatprep.subr.mxu0 0.0
    %527 = vmatpush1.msra.mxu0 0.0
    %528 = vmatprep.subr.mxu0 0.0
    %529 = vmatpush1.msra.mxu0 0.0
    %530 = vmatprep.subr.mxu0 0.0
    %531 = vmatpush1.msra.mxu0 0.0
    %532 = vmatprep.subr.mxu0 0.0
    %533 = vmatpush1.msra.mxu0 0.0
    %534 = vmatprep.subr.mxu0 0.0
    %535 = vmatpush1.msra.mxu0 0.0
    %536 = vmatprep.subr.mxu0 0.0
    %537 = vmatpush1.msra.mxu0 0.0
    %538 = vmatprep.subr.mxu0 0.0
    %539 = vmatpush1.msra.mxu0 0.0
    %540 = vmatprep.subr.mxu0 0.0
    %541 = vmatpush1.msra.mxu0 0.0
    %542 = vmatprep.subr.mxu0 0.0
    %543 = vmatpush1.msra.mxu0 0.0
    %544 = vmatprep.mubr.f32.mxu0 0.0
    %545 = vmatmul.mubr.f32.gmra.mrb[0].mxu0 %v477
    %v546 = vpop.f32.mrb[0].mxu0
    %v547 = vadd.f32 0.0, %v546
    %v548 = vpop.f32.mrb[0].mxu0
    %v549 = vadd.f32 0.0, %v548
    %550 = vdwg.mxu0
    %551 = vmatprep.subr.mxu0 %v91
    %552 = vmatpush1.msra.mxu0 %v90
    %553 = vmatprep.subr.mxu0 %v95
    %554 = vmatpush1.msra.mxu0 %v94
    %555 = vmatprep.subr.mxu0 %v99
    %556 = vmatpush1.msra.mxu0 %v98
    %557 = vmatprep.subr.mxu0 %v103
    %558 = vmatpush1.msra.mxu0 %v102
    %559 = vmatprep.subr.mxu0 %v107
    %560 = vmatpush1.msra.mxu0 %v106
    %561 = vmatprep.subr.mxu0 %v111
    %562 = vmatpush1.msra.mxu0 %v110
    %563 = vmatprep.subr.mxu0 %v115
    %564 = vmatpush1.msra.mxu0 %v114
    %565 = vmatprep.subr.mxu0 %v119
    %566 = vmatpush1.msra.mxu0 %v118
    %567 = vmatprep.subr.mxu0 %v123
    %568 = vmatpush1.msra.mxu0 %v122
    %569 = vmatprep.subr.mxu0 %v127
    %570 = vmatpush1.msra.mxu0 %v126
    %571 = vmatprep.subr.mxu0 %v131
    %572 = vmatpush1.msra.mxu0 %v130
    %573 = vmatprep.subr.mxu0 %v135
    %574 = vmatpush1.msra.mxu0 %v134
    %575 = vmatprep.subr.mxu0 %v139
    %576 = vmatpush1.msra.mxu0 %v138
    %577 = vmatprep.subr.mxu0 %v143
    %578 = vmatpush1.msra.mxu0 %v142
    %579 = vmatprep.subr.mxu0 %v147
    %580 = vmatpush1.msra.mxu0 %v146
    %581 = vmatprep.subr.mxu0 %v151
    %582 = vmatpush1.msra.mxu0 %v150
    %583 = vmatprep.subr.mxu0 0.0
    %584 = vmatpush1.msra.mxu0 0.0
    %585 = vmatprep.subr.mxu0 0.0
    %586 = vmatpush1.msra.mxu0 0.0
    %587 = vmatprep.subr.mxu0 0.0
    %588 = vmatpush1.msra.mxu0 0.0
    %589 = vmatprep.subr.mxu0 0.0
    %590 = vmatpush1.msra.mxu0 0.0
    %591 = vmatprep.subr.mxu0 0.0
    %592 = vmatpush1.msra.mxu0 0.0
    %593 = vmatprep.subr.mxu0 0.0
    %594 = vmatpush1.msra.mxu0 0.0
    %595 = vmatprep.subr.mxu0 0.0
    %596 = vmatpush1.msra.mxu0 0.0
    %597 = vmatprep.subr.mxu0 0.0
    %598 = vmatpush1.msra.mxu0 0.0
    %599 = vmatprep.subr.mxu0 0.0
    %600 = vmatpush1.msra.mxu0 0.0
    %601 = vmatprep.subr.mxu0 0.0
    %602 = vmatpush1.msra.mxu0 0.0
    %603 = vmatprep.subr.mxu0 0.0
    %604 = vmatpush1.msra.mxu0 0.0
    %605 = vmatprep.subr.mxu0 0.0
    %606 = vmatpush1.msra.mxu0 0.0
    %607 = vmatprep.subr.mxu0 0.0
    %608 = vmatpush1.msra.mxu0 0.0
    %609 = vmatprep.subr.mxu0 0.0
    %610 = vmatpush1.msra.mxu0 0.0
    %611 = vmatprep.subr.mxu0 0.0
    %612 = vmatpush1.msra.mxu0 0.0
    %613 = vmatprep.subr.mxu0 0.0
    %614 = vmatpush1.msra.mxu0 0.0
    %615 = vmatprep.mubr.f32.mxu0 0.0
    %616 = vmatmul.mubr.f32.gmra.mrb[0].mxu0 %v477
    %v617 = vpop.f32.mrb[0].mxu0
    %v618 = vadd.f32 0.0, %v617
    %v619 = vpop.f32.mrb[0].mxu0
    %v620 = vadd.f32 0.0, %v619
    %621 = vdwg.mxu0
    %v623 = vsel %vm295, %v479, 0
    %625 = vmatprep.subr.mxu0 %v49
    %626 = vmatpush1.msra.mxu0 %v48
    %627 = vmatprep.subr.mxu0 %v53
    %628 = vmatpush1.msra.mxu0 %v52
    %629 = vmatprep.subr.mxu0 %v57
    %630 = vmatpush1.msra.mxu0 %v56
    %631 = vmatprep.subr.mxu0 %v61
    %632 = vmatpush1.msra.mxu0 %v60
    %633 = vmatprep.subr.mxu0 %v65
    %634 = vmatpush1.msra.mxu0 %v64
    %635 = vmatprep.subr.mxu0 %v69
    %636 = vmatpush1.msra.mxu0 %v68
    %637 = vmatprep.subr.mxu0 %v73
    %638 = vmatpush1.msra.mxu0 %v72
    %639 = vmatprep.subr.mxu0 %v77
    %640 = vmatpush1.msra.mxu0 %v76
    %641 = vmatprep.subr.mxu0 %v81
    %642 = vmatpush1.msra.mxu0 %v80
    %643 = vmatprep.subr.mxu0 %v304
    %644 = vmatpush1.msra.mxu0 %v301
    %645 = vmatprep.subr.mxu0 0.0
    %646 = vmatpush1.msra.mxu0 0.0
    %647 = vmatprep.subr.mxu0 0.0
    %648 = vmatpush1.msra.mxu0 0.0
    %649 = vmatprep.subr.mxu0 0.0
    %650 = vmatpush1.msra.mxu0 0.0
    %651 = vmatprep.subr.mxu0 0.0
    %652 = vmatpush1.msra.mxu0 0.0
    %653 = vmatprep.subr.mxu0 0.0
    %654 = vmatpush1.msra.mxu0 0.0
    %655 = vmatprep.subr.mxu0 0.0
    %656 = vmatpush1.msra.mxu0 0.0
    %657 = vmatprep.subr.mxu0 0.0
    %658 = vmatpush1.msra.mxu0 0.0
    %659 = vmatprep.subr.mxu0 0.0
    %660 = vmatpush1.msra.mxu0 0.0
    %661 = vmatprep.subr.mxu0 0.0
    %662 = vmatpush1.msra.mxu0 0.0
    %663 = vmatprep.subr.mxu0 0.0
    %664 = vmatpush1.msra.mxu0 0.0
    %665 = vmatprep.subr.mxu0 0.0
    %666 = vmatpush1.msra.mxu0 0.0
    %667 = vmatprep.subr.mxu0 0.0
    %668 = vmatpush1.msra.mxu0 0.0
    %669 = vmatprep.subr.mxu0 0.0
    %670 = vmatpush1.msra.mxu0 0.0
    %671 = vmatprep.subr.mxu0 0.0
    %672 = vmatpush1.msra.mxu0 0.0
    %673 = vmatprep.subr.mxu0 0.0
    %674 = vmatpush1.msra.mxu0 0.0
    %675 = vmatprep.subr.mxu0 0.0
    %676 = vmatpush1.msra.mxu0 0.0
    %677 = vmatprep.subr.mxu0 0.0
    %678 = vmatpush1.msra.mxu0 0.0
    %679 = vmatprep.subr.mxu0 0.0
    %680 = vmatpush1.msra.mxu0 0.0
    %681 = vmatprep.subr.mxu0 0.0
    %682 = vmatpush1.msra.mxu0 0.0
    %683 = vmatprep.subr.mxu0 0.0
    %684 = vmatpush1.msra.mxu0 0.0
    %685 = vmatprep.subr.mxu0 0.0
    %686 = vmatpush1.msra.mxu0 0.0
    %687 = vmatprep.subr.mxu0 0.0
    %688 = vmatpush1.msra.mxu0 0.0
    %689 = vmatprep.mubr.f32.mxu0 0.0
    %690 = vmatmul.mubr.f32.gmra.mrb[0].mxu0 %v623
    %v691 = vpop.f32.mrb[0].mxu0
    %v692 = vadd.f32 %v547, %v691
    %v693 = vpop.f32.mrb[0].mxu0
    %v694 = vadd.f32 %v549, %v693
    %695 = vdwg.mxu0
    %696 = vmatprep.subr.mxu0 %v51
    %697 = vmatpush1.msra.mxu0 %v50
    %698 = vmatprep.subr.mxu0 %v55
    %699 = vmatpush1.msra.mxu0 %v54
    %700 = vmatprep.subr.mxu0 %v59
    %701 = vmatpush1.msra.mxu0 %v58
    %702 = vmatprep.subr.mxu0 %v63
    %703 = vmatpush1.msra.mxu0 %v62
    %704 = vmatprep.subr.mxu0 %v67
    %705 = vmatpush1.msra.mxu0 %v66
    %706 = vmatprep.subr.mxu0 %v71
    %707 = vmatpush1.msra.mxu0 %v70
    %708 = vmatprep.subr.mxu0 %v75
    %709 = vmatpush1.msra.mxu0 %v74
    %710 = vmatprep.subr.mxu0 %v79
    %711 = vmatpush1.msra.mxu0 %v78
    %712 = vmatprep.subr.mxu0 %v83
    %713 = vmatpush1.msra.mxu0 %v82
    %714 = vmatprep.subr.mxu0 %v310
    %715 = vmatpush1.msra.mxu0 %v307
    %716 = vmatprep.subr.mxu0 0.0
    %717 = vmatpush1.msra.mxu0 0.0
    %718 = vmatprep.subr.mxu0 0.0
    %719 = vmatpush1.msra.mxu0 0.0
    %720 = vmatprep.subr.mxu0 0.0
    %721 = vmatpush1.msra.mxu0 0.0
    %722 = vmatprep.subr.mxu0 0.0
    %723 = vmatpush1.msra.mxu0 0.0
    %724 = vmatprep.subr.mxu0 0.0
    %725 = vmatpush1.msra.mxu0 0.0
    %726 = vmatprep.subr.mxu0 0.0
    %727 = vmatpush1.msra.mxu0 0.0
    %728 = vmatprep.subr.mxu0 0.0
    %729 = vmatpush1.msra.mxu0 0.0
    %730 = vmatprep.subr.mxu0 0.0
    %731 = vmatpush1.msra.mxu0 0.0
    %732 = vmatprep.subr.mxu0 0.0
    %733 = vmatpush1.msra.mxu0 0.0
    %734 = vmatprep.subr.mxu0 0.0
    %735 = vmatpush1.msra.mxu0 0.0
    %736 = vmatprep.subr.mxu0 0.0
    %737 = vmatpush1.msra.mxu0 0.0
    %738 = vmatprep.subr.mxu0 0.0
    %739 = vmatpush1.msra.mxu0 0.0
    %740 = vmatprep.subr.mxu0 0.0
    %741 = vmatpush1.msra.mxu0 0.0
    %742 = vmatprep.subr.mxu0 0.0
    %743 = vmatpush1.msra.mxu0 0.0
    %744 = vmatprep.subr.mxu0 0.0
    %745 = vmatpush1.msra.mxu0 0.0
    %746 = vmatprep.subr.mxu0 0.0
    %747 = vmatpush1.msra.mxu0 0.0
    %748 = vmatprep.subr.mxu0 0.0
    %749 = vmatpush1.msra.mxu0 0.0
    %750 = vmatprep.subr.mxu0 0.0
    %751 = vmatpush1.msra.mxu0 0.0
    %752 = vmatprep.subr.mxu0 0.0
    %753 = vmatpush1.msra.mxu0 0.0
    %754 = vmatprep.subr.mxu0 0.0
    %755 = vmatpush1.msra.mxu0 0.0
    %756 = vmatprep.subr.mxu0 0.0
    %757 = vmatpush1.msra.mxu0 0.0
    %758 = vmatprep.subr.mxu0 0.0
    %759 = vmatpush1.msra.mxu0 0.0
    %760 = vmatprep.mubr.f32.mxu0 0.0
    %761 = vmatmul.mubr.f32.gmra.mrb[0].mxu0 %v623
    %v762 = vpop.f32.mrb[0].mxu0
    %v763 = vadd.f32 %v618, %v762
    %v764 = vpop.f32.mrb[0].mxu0
    %v765 = vadd.f32 %v620, %v764
    %766 = vdwg.mxu0
    %v767 = vxor.u32 %v692, 2147483648
    %v768 = vmul.f32 %v767, 1.442695
    %v769 = vpow.pop %v768
    %v770 = vadd.f32 %v769, 1.0
    %v771 = vrcp.pop %v770
    %v772 = vmul.f32 1.0, %v771
    %v773 = vxor.u32 %v694, 2147483648
    %v774 = vmul.f32 %v773, 1.442695
    %v775 = vpow.pop %v774
    %v776 = vadd.f32 %v775, 1.0
    %v777 = vrcp.pop %v776
    %v778 = vmul.f32 1.0, %v777
    %v779 = vtanh.pop %v763
    %v780 = vxor.u32 %v765, 2147483648
    %v781 = vmul.f32 %v780, 1.442695
    %v782 = vpow.pop %v781
    %v783 = vadd.f32 %v782, 1.0
    %v784 = vrcp.pop %v783
    %v785 = vmul.f32 1.0, %v784
    %v786 = vmul.f32 %v778, %v475
    %v787 = vmul.f32 %v772, %v779
    %v788 = vadd.f32 %v786, %v787
    %v789 = vtanh.pop %v788
    %v790 = vmul.f32 %v785, %v789
    %s791 = scalar_lea.vmem %s0, 16
    %v792 = vld [vmem:[%s791] sm:$0xff]
    %793 = vmatprep.subr.mxu0 %v89
    %794 = vmatpush1.msra.mxu0 %v88
    %795 = vmatprep.subr.mxu0 %v93
    %796 = vmatpush1.msra.mxu0 %v92
    %797 = vmatprep.subr.mxu0 %v97
    %798 = vmatpush1.msra.mxu0 %v96
    %799 = vmatprep.subr.mxu0 %v101
    %800 = vmatpush1.msra.mxu0 %v100
    %801 = vmatprep.subr.mxu0 %v105
    %802 = vmatpush1.msra.mxu0 %v104
    %803 = vmatprep.subr.mxu0 %v109
    %804 = vmatpush1.msra.mxu0 %v108
    %805 = vmatprep.subr.mxu0 %v113
    %806 = vmatpush1.msra.mxu0 %v112
    %807 = vmatprep.subr.mxu0 %v117
    %808 = vmatpush1.msra.mxu0 %v116
    %809 = vmatprep.subr.mxu0 %v121
    %810 = vmatpush1.msra.mxu0 %v120
    %811 = vmatprep.subr.mxu0 %v125
    %812 = vmatpush1.msra.mxu0 %v124
    %813 = vmatprep.subr.mxu0 %v129
    %814 = vmatpush1.msra.mxu0 %v128
    %815 = vmatprep.subr.mxu0 %v133
    %816 = vmatpush1.msra.mxu0 %v132
    %817 = vmatprep.subr.mxu0 %v137
    %818 = vmatpush1.msra.mxu0 %v136
    %819 = vmatprep.subr.mxu0 %v141
    %820 = vmatpush1.msra.mxu0 %v140
    %821 = vmatprep.subr.mxu0 %v145
    %822 = vmatpush1.msra.mxu0 %v144
    %823 = vmatprep.subr.mxu0 %v149
    %824 = vmatpush1.msra.mxu0 %v148
    %825 = vmatprep.subr.mxu0 0.0
    %826 = vmatpush1.msra.mxu0 0.0
    %827 = vmatprep.subr.mxu0 0.0
    %828 = vmatpush1.msra.mxu0 0.0
    %829 = vmatprep.subr.mxu0 0.0
    %830 = vmatpush1.msra.mxu0 0.0
    %831 = vmatprep.subr.mxu0 0.0
    %832 = vmatpush1.msra.mxu0 0.0
    %833 = vmatprep.subr.mxu0 0.0
    %834 = vmatpush1.msra.mxu0 0.0
    %835 = vmatprep.subr.mxu0 0.0
    %836 = vmatpush1.msra.mxu0 0.0
    %837 = vmatprep.subr.mxu0 0.0
    %838 = vmatpush1.msra.mxu0 0.0
    %839 = vmatprep.subr.mxu0 0.0
    %840 = vmatpush1.msra.mxu0 0.0
    %841 = vmatprep.subr.mxu0 0.0
    %842 = vmatpush1.msra.mxu0 0.0
    %843 = vmatprep.subr.mxu0 0.0
    %844 = vmatpush1.msra.mxu0 0.0
    %845 = vmatprep.subr.mxu0 0.0
    %846 = vmatpush1.msra.mxu0 0.0
    %847 = vmatprep.subr.mxu0 0.0
    %848 = vmatpush1.msra.mxu0 0.0
    %849 = vmatprep.subr.mxu0 0.0
    %850 = vmatpush1.msra.mxu0 0.0
    %851 = vmatprep.subr.mxu0 0.0
    %852 = vmatpush1.msra.mxu0 0.0
    %853 = vmatprep.subr.mxu0 0.0
    %854 = vmatpush1.msra.mxu0 0.0
    %855 = vmatprep.subr.mxu0 0.0
    %856 = vmatpush1.msra.mxu0 0.0
    %857 = vmatprep.mubr.f32.mxu0 0.0
    %858 = vmatmul.mubr.f32.gmra.mrb[0].mxu0 %v790
    %v859 = vpop.f32.mrb[0].mxu0
    %v860 = vadd.f32 0.0, %v859
    %v861 = vpop.f32.mrb[0].mxu0
    %v862 = vadd.f32 0.0, %v861
    %863 = vdwg.mxu0
    %864 = vmatprep.subr.mxu0 %v91
    %865 = vmatpush1.msra.mxu0 %v90
    %866 = vmatprep.subr.mxu0 %v95
    %867 = vmatpush1.msra.mxu0 %v94
    %868 = vmatprep.subr.mxu0 %v99
    %869 = vmatpush1.msra.mxu0 %v98
    %870 = vmatprep.subr.mxu0 %v103
    %871 = vmatpush1.msra.mxu0 %v102
    %872 = vmatprep.subr.mxu0 %v107
    %873 = vmatpush1.msra.mxu0 %v106
    %874 = vmatprep.subr.mxu0 %v111
    %875 = vmatpush1.msra.mxu0 %v110
    %876 = vmatprep.subr.mxu0 %v115
    %877 = vmatpush1.msra.mxu0 %v114
    %878 = vmatprep.subr.mxu0 %v119
    %879 = vmatpush1.msra.mxu0 %v118
    %880 = vmatprep.subr.mxu0 %v123
    %881 = vmatpush1.msra.mxu0 %v122
    %882 = vmatprep.subr.mxu0 %v127
    %883 = vmatpush1.msra.mxu0 %v126
    %884 = vmatprep.subr.mxu0 %v131
    %885 = vmatpush1.msra.mxu0 %v130
    %886 = vmatprep.subr.mxu0 %v135
    %887 = vmatpush1.msra.mxu0 %v134
    %888 = vmatprep.subr.mxu0 %v139
    %889 = vmatpush1.msra.mxu0 %v138
    %890 = vmatprep.subr.mxu0 %v143
    %891 = vmatpush1.msra.mxu0 %v142
    %892 = vmatprep.subr.mxu0 %v147
    %893 = vmatpush1.msra.mxu0 %v146
    %894 = vmatprep.subr.mxu0 %v151
    %895 = vmatpush1.msra.mxu0 %v150
    %896 = vmatprep.subr.mxu0 0.0
    %897 = vmatpush1.msra.mxu0 0.0
    %898 = vmatprep.subr.mxu0 0.0
    %899 = vmatpush1.msra.mxu0 0.0
    %900 = vmatprep.subr.mxu0 0.0
    %901 = vmatpush1.msra.mxu0 0.0
    %902 = vmatprep.subr.mxu0 0.0
    %903 = vmatpush1.msra.mxu0 0.0
    %904 = vmatprep.subr.mxu0 0.0
    %905 = vmatpush1.msra.mxu0 0.0
    %906 = vmatprep.subr.mxu0 0.0
    %907 = vmatpush1.msra.mxu0 0.0
    %908 = vmatprep.subr.mxu0 0.0
    %909 = vmatpush1.msra.mxu0 0.0
    %910 = vmatprep.subr.mxu0 0.0
    %911 = vmatpush1.msra.mxu0 0.0
    %912 = vmatprep.subr.mxu0 0.0
    %913 = vmatpush1.msra.mxu0 0.0
    %914 = vmatprep.subr.mxu0 0.0
    %915 = vmatpush1.msra.mxu0 0.0
    %916 = vmatprep.subr.mxu0 0.0
    %917 = vmatpush1.msra.mxu0 0.0
    %918 = vmatprep.subr.mxu0 0.0
    %919 = vmatpush1.msra.mxu0 0.0
    %920 = vmatprep.subr.mxu0 0.0
    %921 = vmatpush1.msra.mxu0 0.0
    %922 = vmatprep.subr.mxu0 0.0
    %923 = vmatpush1.msra.mxu0 0.0
    %924 = vmatprep.subr.mxu0 0.0
    %925 = vmatpush1.msra.mxu0 0.0
    %926 = vmatprep.subr.mxu0 0.0
    %927 = vmatpush1.msra.mxu0 0.0
    %928 = vmatprep.mubr.f32.mxu0 0.0
    %929 = vmatmul.mubr.f32.gmra.mrb[0].mxu0 %v790
    %v930 = vpop.f32.mrb[0].mxu0
    %v931 = vadd.f32 0.0, %v930
    %v932 = vpop.f32.mrb[0].mxu0
    %v933 = vadd.f32 0.0, %v932
    %934 = vdwg.mxu0
    %v936 = vsel %vm295, %v792, 0
    %938 = vmatprep.subr.mxu0 %v49
    %939 = vmatpush1.msra.mxu0 %v48
    %940 = vmatprep.subr.mxu0 %v53
    %941 = vmatpush1.msra.mxu0 %v52
    %942 = vmatprep.subr.mxu0 %v57
    %943 = vmatpush1.msra.mxu0 %v56
    %944 = vmatprep.subr.mxu0 %v61
    %945 = vmatpush1.msra.mxu0 %v60
    %946 = vmatprep.subr.mxu0 %v65
    %947 = vmatpush1.msra.mxu0 %v64
    %948 = vmatprep.subr.mxu0 %v69
    %949 = vmatpush1.msra.mxu0 %v68
    %950 = vmatprep.subr.mxu0 %v73
    %951 = vmatpush1.msra.mxu0 %v72
    %952 = vmatprep.subr.mxu0 %v77
    %953 = vmatpush1.msra.mxu0 %v76
    %954 = vmatprep.subr.mxu0 %v81
    %955 = vmatpush1.msra.mxu0 %v80
    %956 = vmatprep.subr.mxu0 %v304
    %957 = vmatpush1.msra.mxu0 %v301
    %958 = vmatprep.subr.mxu0 0.0
    %959 = vmatpush1.msra.mxu0 0.0
    %960 = vmatprep.subr.mxu0 0.0
    %961 = vmatpush1.msra.mxu0 0.0
    %962 = vmatprep.subr.mxu0 0.0
    %963 = vmatpush1.msra.mxu0 0.0
    %964 = vmatprep.subr.mxu0 0.0
    %965 = vmatpush1.msra.mxu0 0.0
    %966 = vmatprep.subr.mxu0 0.0
    %967 = vmatpush1.msra.mxu0 0.0
    %968 = vmatprep.subr.mxu0 0.0
    %969 = vmatpush1.msra.mxu0 0.0
    %970 = vmatprep.subr.mxu0 0.0
    %971 = vmatpush1.msra.mxu0 0.0
    %972 = vmatprep.subr.mxu0 0.0
    %973 = vmatpush1.msra.mxu0 0.0
    %974 = vmatprep.subr.mxu0 0.0
    %975 = vmatpush1.msra.mxu0 0.0
    %976 = vmatprep.subr.mxu0 0.0
    %977 = vmatpush1.msra.mxu0 0.0
    %978 = vmatprep.subr.mxu0 0.0
    %979 = vmatpush1.msra.mxu0 0.0
    %980 = vmatprep.subr.mxu0 0.0
    %981 = vmatpush1.msra.mxu0 0.0
    %982 = vmatprep.subr.mxu0 0.0
    %983 = vmatpush1.msra.mxu0 0.0
    %984 = vmatprep.subr.mxu0 0.0
    %985 = vmatpush1.msra.mxu0 0.0
    %986 = vmatprep.subr.mxu0 0.0
    %987 = vmatpush1.msra.mxu0 0.0
    %988 = vmatprep.subr.mxu0 0.0
    %989 = vmatpush1.msra.mxu0 0.0
    %990 = vmatprep.subr.mxu0 0.0
    %991 = vmatpush1.msra.mxu0 0.0
    %992 = vmatprep.subr.mxu0 0.0
    %993 = vmatpush1.msra.mxu0 0.0
    %994 = vmatprep.subr.mxu0 0.0
    %995 = vmatpush1.msra.mxu0 0.0
    %996 = vmatprep.subr.mxu0 0.0
    %997 = vmatpush1.msra.mxu0 0.0
    %998 = vmatprep.subr.mxu0 0.0
    %999 = vmatpush1.msra.mxu0 0.0
    %1000 = vmatprep.subr.mxu0 0.0
    %1001 = vmatpush1.msra.mxu0 0.0
    %1002 = vmatprep.mubr.f32.mxu0 0.0
    %1003 = vmatmul.mubr.f32.gmra.mrb[0].mxu0 %v936
    %v1004 = vpop.f32.mrb[0].mxu0
    %v1005 = vadd.f32 %v860, %v1004
    %v1006 = vpop.f32.mrb[0].mxu0
    %v1007 = vadd.f32 %v862, %v1006
    %1008 = vdwg.mxu0
    %1009 = vmatprep.subr.mxu0 %v51
    %1010 = vmatpush1.msra.mxu0 %v50
    %1011 = vmatprep.subr.mxu0 %v55
    %1012 = vmatpush1.msra.mxu0 %v54
    %1013 = vmatprep.subr.mxu0 %v59
    %1014 = vmatpush1.msra.mxu0 %v58
    %1015 = vmatprep.subr.mxu0 %v63
    %1016 = vmatpush1.msra.mxu0 %v62
    %1017 = vmatprep.subr.mxu0 %v67
    %1018 = vmatpush1.msra.mxu0 %v66
    %1019 = vmatprep.subr.mxu0 %v71
    %1020 = vmatpush1.msra.mxu0 %v70
    %1021 = vmatprep.subr.mxu0 %v75
    %1022 = vmatpush1.msra.mxu0 %v74
    %1023 = vmatprep.subr.mxu0 %v79
    %1024 = vmatpush1.msra.mxu0 %v78
    %1025 = vmatprep.subr.mxu0 %v83
    %1026 = vmatpush1.msra.mxu0 %v82
    %1027 = vmatprep.subr.mxu0 %v310
    %1028 = vmatpush1.msra.mxu0 %v307
    %1029 = vmatprep.subr.mxu0 0.0
    %1030 = vmatpush1.msra.mxu0 0.0
    %1031 = vmatprep.subr.mxu0 0.0
    %1032 = vmatpush1.msra.mxu0 0.0
    %1033 = vmatprep.subr.mxu0 0.0
    %1034 = vmatpush1.msra.mxu0 0.0
    %1035 = vmatprep.subr.mxu0 0.0
    %1036 = vmatpush1.msra.mxu0 0.0
    %1037 = vmatprep.subr.mxu0 0.0
    %1038 = vmatpush1.msra.mxu0 0.0
    %1039 = vmatprep.subr.mxu0 0.0
    %1040 = vmatpush1.msra.mxu0 0.0
    %1041 = vmatprep.subr.mxu0 0.0
    %1042 = vmatpush1.msra.mxu0 0.0
    %1043 = vmatprep.subr.mxu0 0.0
    %1044 = vmatpush1.msra.mxu0 0.0
    %1045 = vmatprep.subr.mxu0 0.0
    %1046 = vmatpush1.msra.mxu0 0.0
    %1047 = vmatprep.subr.mxu0 0.0
    %1048 = vmatpush1.msra.mxu0 0.0
    %1049 = vmatprep.subr.mxu0 0.0
    %1050 = vmatpush1.msra.mxu0 0.0
    %1051 = vmatprep.subr.mxu0 0.0
    %1052 = vmatpush1.msra.mxu0 0.0
    %1053 = vmatprep.subr.mxu0 0.0
    %1054 = vmatpush1.msra.mxu0 0.0
    %1055 = vmatprep.subr.mxu0 0.0
    %1056 = vmatpush1.msra.mxu0 0.0
    %1057 = vmatprep.subr.mxu0 0.0
    %1058 = vmatpush1.msra.mxu0 0.0
    %1059 = vmatprep.subr.mxu0 0.0
    %1060 = vmatpush1.msra.mxu0 0.0
    %1061 = vmatprep.subr.mxu0 0.0
    %1062 = vmatpush1.msra.mxu0 0.0
    %1063 = vmatprep.subr.mxu0 0.0
    %1064 = vmatpush1.msra.mxu0 0.0
    %1065 = vmatprep.subr.mxu0 0.0
    %1066 = vmatpush1.msra.mxu0 0.0
    %1067 = vmatprep.subr.mxu0 0.0
    %1068 = vmatpush1.msra.mxu0 0.0
    %1069 = vmatprep.subr.mxu0 0.0
    %1070 = vmatpush1.msra.mxu0 0.0
    %1071 = vmatprep.subr.mxu0 0.0
    %1072 = vmatpush1.msra.mxu0 0.0
    %1073 = vmatprep.mubr.f32.mxu0 0.0
    %1074 = vmatmul.mubr.f32.gmra.mrb[0].mxu0 %v936
    %v1075 = vpop.f32.mrb[0].mxu0
    %v1076 = vadd.f32 %v931, %v1075
    %v1077 = vpop.f32.mrb[0].mxu0
    %v1078 = vadd.f32 %v933, %v1077
    %1079 = vdwg.mxu0
    %v1080 = vxor.u32 %v1005, 2147483648
    %v1081 = vmul.f32 %v1080, 1.442695
    %v1082 = vpow.pop %v1081
    %v1083 = vadd.f32 %v1082, 1.0
    %v1084 = vrcp.pop %v1083
    %v1085 = vmul.f32 1.0, %v1084
    %v1086 = vxor.u32 %v1007, 2147483648
    %v1087 = vmul.f32 %v1086, 1.442695
    %v1088 = vpow.pop %v1087
    %v1089 = vadd.f32 %v1088, 1.0
    %v1090 = vrcp.pop %v1089
    %v1091 = vmul.f32 1.0, %v1090
    %v1092 = vtanh.pop %v1076
    %v1093 = vxor.u32 %v1078, 2147483648
    %v1094 = vmul.f32 %v1093, 1.442695
    %v1095 = vpow.pop %v1094
    %v1096 = vadd.f32 %v1095, 1.0
    %v1097 = vrcp.pop %v1096
    %v1098 = vmul.f32 1.0, %v1097
    %v1099 = vmul.f32 %v1091, %v788
    %v1100 = vmul.f32 %v1085, %v1092
    %v1101 = vadd.f32 %v1099, %v1100
    %v1102 = vtanh.pop %v1101
    %v1103 = vmul.f32 %v1098, %v1102
    %s1104 = scalar_lea.vmem %s0, 24
    %v1105 = vld [vmem:[%s1104] sm:$0xff]
    %1106 = vmatprep.subr.mxu0 %v89
    %1107 = vmatpush1.msra.mxu0 %v88
    %1108 = vmatprep.subr.mxu0 %v93
    %1109 = vmatpush1.msra.mxu0 %v92
    %1110 = vmatprep.subr.mxu0 %v97
    %1111 = vmatpush1.msra.mxu0 %v96
    %1112 = vmatprep.subr.mxu0 %v101
    %1113 = vmatpush1.msra.mxu0 %v100
    %1114 = vmatprep.subr.mxu0 %v105
    %1115 = vmatpush1.msra.mxu0 %v104
    %1116 = vmatprep.subr.mxu0 %v109
    %1117 = vmatpush1.msra.mxu0 %v108
    %1118 = vmatprep.subr.mxu0 %v113
    %1119 = vmatpush1.msra.mxu0 %v112
    %1120 = vmatprep.subr.mxu0 %v117
    %1121 = vmatpush1.msra.mxu0 %v116
    %1122 = vmatprep.subr.mxu0 %v121
    %1123 = vmatpush1.msra.mxu0 %v120
    %1124 = vmatprep.subr.mxu0 %v125
    %1125 = vmatpush1.msra.mxu0 %v124
    %1126 = vmatprep.subr.mxu0 %v129
    %1127 = vmatpush1.msra.mxu0 %v128
    %1128 = vmatprep.subr.mxu0 %v133
    %1129 = vmatpush1.msra.mxu0 %v132
    %1130 = vmatprep.subr.mxu0 %v137
    %1131 = vmatpush1.msra.mxu0 %v136
    %1132 = vmatprep.subr.mxu0 %v141
    %1133 = vmatpush1.msra.mxu0 %v140
    %1134 = vmatprep.subr.mxu0 %v145
    %1135 = vmatpush1.msra.mxu0 %v144
    %1136 = vmatprep.subr.mxu0 %v149
    %1137 = vmatpush1.msra.mxu0 %v148
    %1138 = vmatprep.subr.mxu0 0.0
    %1139 = vmatpush1.msra.mxu0 0.0
    %1140 = vmatprep.subr.mxu0 0.0
    %1141 = vmatpush1.msra.mxu0 0.0
    %1142 = vmatprep.subr.mxu0 0.0
    %1143 = vmatpush1.msra.mxu0 0.0
    %1144 = vmatprep.subr.mxu0 0.0
    %1145 = vmatpush1.msra.mxu0 0.0
    %1146 = vmatprep.subr.mxu0 0.0
    %1147 = vmatpush1.msra.mxu0 0.0
    %1148 = vmatprep.subr.mxu0 0.0
    %1149 = vmatpush1.msra.mxu0 0.0
    %1150 = vmatprep.subr.mxu0 0.0
    %1151 = vmatpush1.msra.mxu0 0.0
    %1152 = vmatprep.subr.mxu0 0.0
    %1153 = vmatpush1.msra.mxu0 0.0
    %1154 = vmatprep.subr.mxu0 0.0
    %1155 = vmatpush1.msra.mxu0 0.0
    %1156 = vmatprep.subr.mxu0 0.0
    %1157 = vmatpush1.msra.mxu0 0.0
    %1158 = vmatprep.subr.mxu0 0.0
    %1159 = vmatpush1.msra.mxu0 0.0
    %1160 = vmatprep.subr.mxu0 0.0
    %1161 = vmatpush1.msra.mxu0 0.0
    %1162 = vmatprep.subr.mxu0 0.0
    %1163 = vmatpush1.msra.mxu0 0.0
    %1164 = vmatprep.subr.mxu0 0.0
    %1165 = vmatpush1.msra.mxu0 0.0
    %1166 = vmatprep.subr.mxu0 0.0
    %1167 = vmatpush1.msra.mxu0 0.0
    %1168 = vmatprep.subr.mxu0 0.0
    %1169 = vmatpush1.msra.mxu0 0.0
    %1170 = vmatprep.mubr.f32.mxu0 0.0
    %1171 = vmatmul.mubr.f32.gmra.mrb[0].mxu0 %v1103
    %v1172 = vpop.f32.mrb[0].mxu0
    %v1173 = vadd.f32 0.0, %v1172
    %v1174 = vpop.f32.mrb[0].mxu0
    %v1175 = vadd.f32 0.0, %v1174
    %1176 = vdwg.mxu0
    %1177 = vmatprep.subr.mxu0 %v91
    %1178 = vmatpush1.msra.mxu0 %v90
    %1179 = vmatprep.subr.mxu0 %v95
    %1180 = vmatpush1.msra.mxu0 %v94
    %1181 = vmatprep.subr.mxu0 %v99
    %1182 = vmatpush1.msra.mxu0 %v98
    %1183 = vmatprep.subr.mxu0 %v103
    %1184 = vmatpush1.msra.mxu0 %v102
    %1185 = vmatprep.subr.mxu0 %v107
    %1186 = vmatpush1.msra.mxu0 %v106
    %1187 = vmatprep.subr.mxu0 %v111
    %1188 = vmatpush1.msra.mxu0 %v110
    %1189 = vmatprep.subr.mxu0 %v115
    %1190 = vmatpush1.msra.mxu0 %v114
    %1191 = vmatprep.subr.mxu0 %v119
    %1192 = vmatpush1.msra.mxu0 %v118
    %1193 = vmatprep.subr.mxu0 %v123
    %1194 = vmatpush1.msra.mxu0 %v122
    %1195 = vmatprep.subr.mxu0 %v127
    %1196 = vmatpush1.msra.mxu0 %v126
    %1197 = vmatprep.subr.mxu0 %v131
    %1198 = vmatpush1.msra.mxu0 %v130
    %1199 = vmatprep.subr.mxu0 %v135
    %1200 = vmatpush1.msra.mxu0 %v134
    %1201 = vmatprep.subr.mxu0 %v139
    %1202 = vmatpush1.msra.mxu0 %v138
    %1203 = vmatprep.subr.mxu0 %v143
    %1204 = vmatpush1.msra.mxu0 %v142
    %1205 = vmatprep.subr.mxu0 %v147
    %1206 = vmatpush1.msra.mxu0 %v146
    %1207 = vmatprep.subr.mxu0 %v151
    %1208 = vmatpush1.msra.mxu0 %v150
    %1209 = vmatprep.subr.mxu0 0.0
    %1210 = vmatpush1.msra.mxu0 0.0
    %1211 = vmatprep.subr.mxu0 0.0
    %1212 = vmatpush1.msra.mxu0 0.0
    %1213 = vmatprep.subr.mxu0 0.0
    %1214 = vmatpush1.msra.mxu0 0.0
    %1215 = vmatprep.subr.mxu0 0.0
    %1216 = vmatpush1.msra.mxu0 0.0
    %1217 = vmatprep.subr.mxu0 0.0
    %1218 = vmatpush1.msra.mxu0 0.0
    %1219 = vmatprep.subr.mxu0 0.0
    %1220 = vmatpush1.msra.mxu0 0.0
    %1221 = vmatprep.subr.mxu0 0.0
    %1222 = vmatpush1.msra.mxu0 0.0
    %1223 = vmatprep.subr.mxu0 0.0
    %1224 = vmatpush1.msra.mxu0 0.0
    %1225 = vmatprep.subr.mxu0 0.0
    %1226 = vmatpush1.msra.mxu0 0.0
    %1227 = vmatprep.subr.mxu0 0.0
    %1228 = vmatpush1.msra.mxu0 0.0
    %1229 = vmatprep.subr.mxu0 0.0
    %1230 = vmatpush1.msra.mxu0 0.0
    %1231 = vmatprep.subr.mxu0 0.0
    %1232 = vmatpush1.msra.mxu0 0.0
    %1233 = vmatprep.subr.mxu0 0.0
    %1234 = vmatpush1.msra.mxu0 0.0
    %1235 = vmatprep.subr.mxu0 0.0
    %1236 = vmatpush1.msra.mxu0 0.0
    %1237 = vmatprep.subr.mxu0 0.0
    %1238 = vmatpush1.msra.mxu0 0.0
    %1239 = vmatprep.subr.mxu0 0.0
    %1240 = vmatpush1.msra.mxu0 0.0
    %1241 = vmatprep.mubr.f32.mxu0 0.0
    %1242 = vmatmul.mubr.f32.gmra.mrb[0].mxu0 %v1103
    %v1243 = vpop.f32.mrb[0].mxu0
    %v1244 = vadd.f32 0.0, %v1243
    %v1245 = vpop.f32.mrb[0].mxu0
    %v1246 = vadd.f32 0.0, %v1245
    %1247 = vdwg.mxu0
    %v1249 = vsel %vm295, %v1105, 0
    %1251 = vmatprep.subr.mxu0 %v49
    %1252 = vmatpush1.msra.mxu0 %v48
    %1253 = vmatprep.subr.mxu0 %v53
    %1254 = vmatpush1.msra.mxu0 %v52
    %1255 = vmatprep.subr.mxu0 %v57
    %1256 = vmatpush1.msra.mxu0 %v56
    %1257 = vmatprep.subr.mxu0 %v61
    %1258 = vmatpush1.msra.mxu0 %v60
    %1259 = vmatprep.subr.mxu0 %v65
    %1260 = vmatpush1.msra.mxu0 %v64
    %1261 = vmatprep.subr.mxu0 %v69
    %1262 = vmatpush1.msra.mxu0 %v68
    %1263 = vmatprep.subr.mxu0 %v73
    %1264 = vmatpush1.msra.mxu0 %v72
    %1265 = vmatprep.subr.mxu0 %v77
    %1266 = vmatpush1.msra.mxu0 %v76
    %1267 = vmatprep.subr.mxu0 %v81
    %1268 = vmatpush1.msra.mxu0 %v80
    %1269 = vmatprep.subr.mxu0 %v304
    %1270 = vmatpush1.msra.mxu0 %v301
    %1271 = vmatprep.subr.mxu0 0.0
    %1272 = vmatpush1.msra.mxu0 0.0
    %1273 = vmatprep.subr.mxu0 0.0
    %1274 = vmatpush1.msra.mxu0 0.0
    %1275 = vmatprep.subr.mxu0 0.0
    %1276 = vmatpush1.msra.mxu0 0.0
    %1277 = vmatprep.subr.mxu0 0.0
    %1278 = vmatpush1.msra.mxu0 0.0
    %1279 = vmatprep.subr.mxu0 0.0
    %1280 = vmatpush1.msra.mxu0 0.0
    %1281 = vmatprep.subr.mxu0 0.0
    %1282 = vmatpush1.msra.mxu0 0.0
    %1283 = vmatprep.subr.mxu0 0.0
    %1284 = vmatpush1.msra.mxu0 0.0
    %1285 = vmatprep.subr.mxu0 0.0
    %1286 = vmatpush1.msra.mxu0 0.0
    %1287 = vmatprep.subr.mxu0 0.0
    %1288 = vmatpush1.msra.mxu0 0.0
    %1289 = vmatprep.subr.mxu0 0.0
    %1290 = vmatpush1.msra.mxu0 0.0
    %1291 = vmatprep.subr.mxu0 0.0
    %1292 = vmatpush1.msra.mxu0 0.0
    %1293 = vmatprep.subr.mxu0 0.0
    %1294 = vmatpush1.msra.mxu0 0.0
    %1295 = vmatprep.subr.mxu0 0.0
    %1296 = vmatpush1.msra.mxu0 0.0
    %1297 = vmatprep.subr.mxu0 0.0
    %1298 = vmatpush1.msra.mxu0 0.0
    %1299 = vmatprep.subr.mxu0 0.0
    %1300 = vmatpush1.msra.mxu0 0.0
    %1301 = vmatprep.subr.mxu0 0.0
    %1302 = vmatpush1.msra.mxu0 0.0
    %1303 = vmatprep.subr.mxu0 0.0
    %1304 = vmatpush1.msra.mxu0 0.0
    %1305 = vmatprep.subr.mxu0 0.0
    %1306 = vmatpush1.msra.mxu0 0.0
    %1307 = vmatprep.subr.mxu0 0.0
    %1308 = vmatpush1.msra.mxu0 0.0
    %1309 = vmatprep.subr.mxu0 0.0
    %1310 = vmatpush1.msra.mxu0 0.0
    %1311 = vmatprep.subr.mxu0 0.0
    %1312 = vmatpush1.msra.mxu0 0.0
    %1313 = vmatprep.subr.mxu0 0.0
    %1314 = vmatpush1.msra.mxu0 0.0
    %1315 = vmatprep.mubr.f32.mxu0 0.0
    %1316 = vmatmul.mubr.f32.gmra.mrb[0].mxu0 %v1249
    %v1317 = vpop.f32.mrb[0].mxu0
    %v1318 = vadd.f32 %v1173, %v1317
    %v1319 = vpop.f32.mrb[0].mxu0
    %v1320 = vadd.f32 %v1175, %v1319
    %1321 = vdwg.mxu0
    %1322 = vmatprep.subr.mxu0 %v51
    %1323 = vmatpush1.msra.mxu0 %v50
    %1324 = vmatprep.subr.mxu0 %v55
    %1325 = vmatpush1.msra.mxu0 %v54
    %1326 = vmatprep.subr.mxu0 %v59
    %1327 = vmatpush1.msra.mxu0 %v58
    %1328 = vmatprep.subr.mxu0 %v63
    %1329 = vmatpush1.msra.mxu0 %v62
    %1330 = vmatprep.subr.mxu0 %v67
    %1331 = vmatpush1.msra.mxu0 %v66
    %1332 = vmatprep.subr.mxu0 %v71
    %1333 = vmatpush1.msra.mxu0 %v70
    %1334 = vmatprep.subr.mxu0 %v75
    %1335 = vmatpush1.msra.mxu0 %v74
    %1336 = vmatprep.subr.mxu0 %v79
    %1337 = vmatpush1.msra.mxu0 %v78
    %1338 = vmatprep.subr.mxu0 %v83
    %1339 = vmatpush1.msra.mxu0 %v82
    %1340 = vmatprep.subr.mxu0 %v310
    %1341 = vmatpush1.msra.mxu0 %v307
    %1342 = vmatprep.subr.mxu0 0.0
    %1343 = vmatpush1.msra.mxu0 0.0
    %1344 = vmatprep.subr.mxu0 0.0
    %1345 = vmatpush1.msra.mxu0 0.0
    %1346 = vmatprep.subr.mxu0 0.0
    %1347 = vmatpush1.msra.mxu0 0.0
    %1348 = vmatprep.subr.mxu0 0.0
    %1349 = vmatpush1.msra.mxu0 0.0
    %1350 = vmatprep.subr.mxu0 0.0
    %1351 = vmatpush1.msra.mxu0 0.0
    %1352 = vmatprep.subr.mxu0 0.0
    %1353 = vmatpush1.msra.mxu0 0.0
    %1354 = vmatprep.subr.mxu0 0.0
    %1355 = vmatpush1.msra.mxu0 0.0
    %1356 = vmatprep.subr.mxu0 0.0
    %1357 = vmatpush1.msra.mxu0 0.0
    %1358 = vmatprep.subr.mxu0 0.0
    %1359 = vmatpush1.msra.mxu0 0.0
    %1360 = vmatprep.subr.mxu0 0.0
    %1361 = vmatpush1.msra.mxu0 0.0
    %1362 = vmatprep.subr.mxu0 0.0
    %1363 = vmatpush1.msra.mxu0 0.0
    %1364 = vmatprep.subr.mxu0 0.0
    %1365 = vmatpush1.msra.mxu0 0.0
    %1366 = vmatprep.subr.mxu0 0.0
    %1367 = vmatpush1.msra.mxu0 0.0
    %1368 = vmatprep.subr.mxu0 0.0
    %1369 = vmatpush1.msra.mxu0 0.0
    %1370 = vmatprep.subr.mxu0 0.0
    %1371 = vmatpush1.msra.mxu0 0.0
    %1372 = vmatprep.subr.mxu0 0.0
    %1373 = vmatpush1.msra.mxu0 0.0
    %1374 = vmatprep.subr.mxu0 0.0
    %1375 = vmatpush1.msra.mxu0 0.0
    %1376 = vmatprep.subr.mxu0 0.0
    %1377 = vmatpush1.msra.mxu0 0.0
    %1378 = vmatprep.subr.mxu0 0.0
    %1379 = vmatpush1.msra.mxu0 0.0
    %1380 = vmatprep.subr.mxu0 0.0
    %1381 = vmatpush1.msra.mxu0 0.0
    %1382 = vmatprep.subr.mxu0 0.0
    %1383 = vmatpush1.msra.mxu0 0.0
    %1384 = vmatprep.subr.mxu0 0.0
    %1385 = vmatpush1.msra.mxu0 0.0
    %1386 = vmatprep.mubr.f32.mxu0 0.0
    %1387 = vmatmul.mubr.f32.gmra.mrb[0].mxu0 %v1249
    %v1388 = vpop.f32.mrb[0].mxu0
    %v1389 = vadd.f32 %v1244, %v1388
    %v1390 = vpop.f32.mrb[0].mxu0
    %v1391 = vadd.f32 %v1246, %v1390
    %1392 = vdwg.mxu0
    %v1393 = vxor.u32 %v1318, 2147483648
    %v1394 = vmul.f32 %v1393, 1.442695
    %v1395 = vpow.pop %v1394
    %v1396 = vadd.f32 %v1395, 1.0
    %v1397 = vrcp.pop %v1396
    %v1398 = vmul.f32 1.0, %v1397
    %v1399 = vxor.u32 %v1320, 2147483648
    %v1400 = vmul.f32 %v1399, 1.442695
    %v1401 = vpow.pop %v1400
    %v1402 = vadd.f32 %v1401, 1.0
    %v1403 = vrcp.pop %v1402
    %v1404 = vmul.f32 1.0, %v1403
    %v1405 = vtanh.pop %v1389
    %v1406 = vxor.u32 %v1391, 2147483648
    %v1407 = vmul.f32 %v1406, 1.442695
    %v1408 = vpow.pop %v1407
    %v1409 = vadd.f32 %v1408, 1.0
    %v1410 = vrcp.pop %v1409
    %v1411 = vmul.f32 1.0, %v1410
    %v1412 = vmul.f32 %v1404, %v1101
    %v1413 = vmul.f32 %v1398, %v1405
    %v1414 = vadd.f32 %v1412, %v1413
    %v1415 = vtanh.pop %v1414
    %v1416 = vmul.f32 %v1411, %v1415
    %s1417 = scalar_lea.vmem %s0, 32
    %v1418 = vld [vmem:[%s1417] sm:$0xff]
    %1419 = vmatprep.subr.mxu0 %v89
    %1420 = vmatpush1.msra.mxu0 %v88
    %1421 = vmatprep.subr.mxu0 %v93
    %1422 = vmatpush1.msra.mxu0 %v92
    %1423 = vmatprep.subr.mxu0 %v97
    %1424 = vmatpush1.msra.mxu0 %v96
    %1425 = vmatprep.subr.mxu0 %v101
    %1426 = vmatpush1.msra.mxu0 %v100
    %1427 = vmatprep.subr.mxu0 %v105
    %1428 = vmatpush1.msra.mxu0 %v104
    %1429 = vmatprep.subr.mxu0 %v109
    %1430 = vmatpush1.msra.mxu0 %v108
    %1431 = vmatprep.subr.mxu0 %v113
    %1432 = vmatpush1.msra.mxu0 %v112
    %1433 = vmatprep.subr.mxu0 %v117
    %1434 = vmatpush1.msra.mxu0 %v116
    %1435 = vmatprep.subr.mxu0 %v121
    %1436 = vmatpush1.msra.mxu0 %v120
    %1437 = vmatprep.subr.mxu0 %v125
    %1438 = vmatpush1.msra.mxu0 %v124
    %1439 = vmatprep.subr.mxu0 %v129
    %1440 = vmatpush1.msra.mxu0 %v128
    %1441 = vmatprep.subr.mxu0 %v133
    %1442 = vmatpush1.msra.mxu0 %v132
    %1443 = vmatprep.subr.mxu0 %v137
    %1444 = vmatpush1.msra.mxu0 %v136
    %1445 = vmatprep.subr.mxu0 %v141
    %1446 = vmatpush1.msra.mxu0 %v140
    %1447 = vmatprep.subr.mxu0 %v145
    %1448 = vmatpush1.msra.mxu0 %v144
    %1449 = vmatprep.subr.mxu0 %v149
    %1450 = vmatpush1.msra.mxu0 %v148
    %1451 = vmatprep.subr.mxu0 0.0
    %1452 = vmatpush1.msra.mxu0 0.0
    %1453 = vmatprep.subr.mxu0 0.0
    %1454 = vmatpush1.msra.mxu0 0.0
    %1455 = vmatprep.subr.mxu0 0.0
    %1456 = vmatpush1.msra.mxu0 0.0
    %1457 = vmatprep.subr.mxu0 0.0
    %1458 = vmatpush1.msra.mxu0 0.0
    %1459 = vmatprep.subr.mxu0 0.0
    %1460 = vmatpush1.msra.mxu0 0.0
    %1461 = vmatprep.subr.mxu0 0.0
    %1462 = vmatpush1.msra.mxu0 0.0
    %1463 = vmatprep.subr.mxu0 0.0
    %1464 = vmatpush1.msra.mxu0 0.0
    %1465 = vmatprep.subr.mxu0 0.0
    %1466 = vmatpush1.msra.mxu0 0.0
    %1467 = vmatprep.subr.mxu0 0.0
    %1468 = vmatpush1.msra.mxu0 0.0
    %1469 = vmatprep.subr.mxu0 0.0
    %1470 = vmatpush1.msra.mxu0 0.0
    %1471 = vmatprep.subr.mxu0 0.0
    %1472 = vmatpush1.msra.mxu0 0.0
    %1473 = vmatprep.subr.mxu0 0.0
    %1474 = vmatpush1.msra.mxu0 0.0
    %1475 = vmatprep.subr.mxu0 0.0
    %1476 = vmatpush1.msra.mxu0 0.0
    %1477 = vmatprep.subr.mxu0 0.0
    %1478 = vmatpush1.msra.mxu0 0.0
    %1479 = vmatprep.subr.mxu0 0.0
    %1480 = vmatpush1.msra.mxu0 0.0
    %1481 = vmatprep.subr.mxu0 0.0
    %1482 = vmatpush1.msra.mxu0 0.0
    %1483 = vmatprep.mubr.f32.mxu0 0.0
    %1484 = vmatmul.mubr.f32.gmra.mrb[0].mxu0 %v1416
    %v1485 = vpop.f32.mrb[0].mxu0
    %v1486 = vadd.f32 0.0, %v1485
    %v1487 = vpop.f32.mrb[0].mxu0
    %v1488 = vadd.f32 0.0, %v1487
    %1489 = vdwg.mxu0
    %1490 = vmatprep.subr.mxu0 %v91
    %1491 = vmatpush1.msra.mxu0 %v90
    %1492 = vmatprep.subr.mxu0 %v95
    %1493 = vmatpush1.msra.mxu0 %v94
    %1494 = vmatprep.subr.mxu0 %v99
    %1495 = vmatpush1.msra.mxu0 %v98
    %1496 = vmatprep.subr.mxu0 %v103
    %1497 = vmatpush1.msra.mxu0 %v102
    %1498 = vmatprep.subr.mxu0 %v107
    %1499 = vmatpush1.msra.mxu0 %v106
    %1500 = vmatprep.subr.mxu0 %v111
    %1501 = vmatpush1.msra.mxu0 %v110
    %1502 = vmatprep.subr.mxu0 %v115
    %1503 = vmatpush1.msra.mxu0 %v114
    %1504 = vmatprep.subr.mxu0 %v119
    %1505 = vmatpush1.msra.mxu0 %v118
    %1506 = vmatprep.subr.mxu0 %v123
    %1507 = vmatpush1.msra.mxu0 %v122
    %1508 = vmatprep.subr.mxu0 %v127
    %1509 = vmatpush1.msra.mxu0 %v126
    %1510 = vmatprep.subr.mxu0 %v131
    %1511 = vmatpush1.msra.mxu0 %v130
    %1512 = vmatprep.subr.mxu0 %v135
    %1513 = vmatpush1.msra.mxu0 %v134
    %1514 = vmatprep.subr.mxu0 %v139
    %1515 = vmatpush1.msra.mxu0 %v138
    %1516 = vmatprep.subr.mxu0 %v143
    %1517 = vmatpush1.msra.mxu0 %v142
    %1518 = vmatprep.subr.mxu0 %v147
    %1519 = vmatpush1.msra.mxu0 %v146
    %1520 = vmatprep.subr.mxu0 %v151
    %1521 = vmatpush1.msra.mxu0 %v150
    %1522 = vmatprep.subr.mxu0 0.0
    %1523 = vmatpush1.msra.mxu0 0.0
    %1524 = vmatprep.subr.mxu0 0.0
    %1525 = vmatpush1.msra.mxu0 0.0
    %1526 = vmatprep.subr.mxu0 0.0
    %1527 = vmatpush1.msra.mxu0 0.0
    %1528 = vmatprep.subr.mxu0 0.0
    %1529 = vmatpush1.msra.mxu0 0.0
    %1530 = vmatprep.subr.mxu0 0.0
    %1531 = vmatpush1.msra.mxu0 0.0
    %1532 = vmatprep.subr.mxu0 0.0
    %1533 = vmatpush1.msra.mxu0 0.0
    %1534 = vmatprep.subr.mxu0 0.0
    %1535 = vmatpush1.msra.mxu0 0.0
    %1536 = vmatprep.subr.mxu0 0.0
    %1537 = vmatpush1.msra.mxu0 0.0
    %1538 = vmatprep.subr.mxu0 0.0
    %1539 = vmatpush1.msra.mxu0 0.0
    %1540 = vmatprep.subr.mxu0 0.0
    %1541 = vmatpush1.msra.mxu0 0.0
    %1542 = vmatprep.subr.mxu0 0.0
    %1543 = vmatpush1.msra.mxu0 0.0
    %1544 = vmatprep.subr.mxu0 0.0
    %1545 = vmatpush1.msra.mxu0 0.0
    %1546 = vmatprep.subr.mxu0 0.0
    %1547 = vmatpush1.msra.mxu0 0.0
    %1548 = vmatprep.subr.mxu0 0.0
    %1549 = vmatpush1.msra.mxu0 0.0
    %1550 = vmatprep.subr.mxu0 0.0
    %1551 = vmatpush1.msra.mxu0 0.0
    %1552 = vmatprep.subr.mxu0 0.0
    %1553 = vmatpush1.msra.mxu0 0.0
    %1554 = vmatprep.mubr.f32.mxu0 0.0
    %1555 = vmatmul.mubr.f32.gmra.mrb[0].mxu0 %v1416
    %v1556 = vpop.f32.mrb[0].mxu0
    %v1557 = vadd.f32 0.0, %v1556
    %v1558 = vpop.f32.mrb[0].mxu0
    %v1559 = vadd.f32 0.0, %v1558
    %1560 = vdwg.mxu0
    %v1562 = vsel %vm295, %v1418, 0
    %1564 = vmatprep.subr.mxu0 %v49
    %1565 = vmatpush1.msra.mxu0 %v48
    %1566 = vmatprep.subr.mxu0 %v53
    %1567 = vmatpush1.msra.mxu0 %v52
    %1568 = vmatprep.subr.mxu0 %v57
    %1569 = vmatpush1.msra.mxu0 %v56
    %1570 = vmatprep.subr.mxu0 %v61
    %1571 = vmatpush1.msra.mxu0 %v60
    %1572 = vmatprep.subr.mxu0 %v65
    %1573 = vmatpush1.msra.mxu0 %v64
    %1574 = vmatprep.subr.mxu0 %v69
    %1575 = vmatpush1.msra.mxu0 %v68
    %1576 = vmatprep.subr.mxu0 %v73
    %1577 = vmatpush1.msra.mxu0 %v72
    %1578 = vmatprep.subr.mxu0 %v77
    %1579 = vmatpush1.msra.mxu0 %v76
    %1580 = vmatprep.subr.mxu0 %v81
    %1581 = vmatpush1.msra.mxu0 %v80
    %1582 = vmatprep.subr.mxu0 %v304
    %1583 = vmatpush1.msra.mxu0 %v301
    %1584 = vmatprep.subr.mxu0 0.0
    %1585 = vmatpush1.msra.mxu0 0.0
    %1586 = vmatprep.subr.mxu0 0.0
    %1587 = vmatpush1.msra.mxu0 0.0
    %1588 = vmatprep.subr.mxu0 0.0
    %1589 = vmatpush1.msra.mxu0 0.0
    %1590 = vmatprep.subr.mxu0 0.0
    %1591 = vmatpush1.msra.mxu0 0.0
    %1592 = vmatprep.subr.mxu0 0.0
    %1593 = vmatpush1.msra.mxu0 0.0
    %1594 = vmatprep.subr.mxu0 0.0
    %1595 = vmatpush1.msra.mxu0 0.0
    %1596 = vmatprep.subr.mxu0 0.0
    %1597 = vmatpush1.msra.mxu0 0.0
    %1598 = vmatprep.subr.mxu0 0.0
    %1599 = vmatpush1.msra.mxu0 0.0
    %1600 = vmatprep.subr.mxu0 0.0
    %1601 = vmatpush1.msra.mxu0 0.0
    %1602 = vmatprep.subr.mxu0 0.0
    %1603 = vmatpush1.msra.mxu0 0.0
    %1604 = vmatprep.subr.mxu0 0.0
    %1605 = vmatpush1.msra.mxu0 0.0
    %1606 = vmatprep.subr.mxu0 0.0
    %1607 = vmatpush1.msra.mxu0 0.0
    %1608 = vmatprep.subr.mxu0 0.0
    %1609 = vmatpush1.msra.mxu0 0.0
    %1610 = vmatprep.subr.mxu0 0.0
    %1611 = vmatpush1.msra.mxu0 0.0
    %1612 = vmatprep.subr.mxu0 0.0
    %1613 = vmatpush1.msra.mxu0 0.0
    %1614 = vmatprep.subr.mxu0 0.0
    %1615 = vmatpush1.msra.mxu0 0.0
    %1616 = vmatprep.subr.mxu0 0.0
    %1617 = vmatpush1.msra.mxu0 0.0
    %1618 = vmatprep.subr.mxu0 0.0
    %1619 = vmatpush1.msra.mxu0 0.0
    %1620 = vmatprep.subr.mxu0 0.0
    %1621 = vmatpush1.msra.mxu0 0.0
    %1622 = vmatprep.subr.mxu0 0.0
    %1623 = vmatpush1.msra.mxu0 0.0
    %1624 = vmatprep.subr.mxu0 0.0
    %1625 = vmatpush1.msra.mxu0 0.0
    %1626 = vmatprep.subr.mxu0 0.0
    %1627 = vmatpush1.msra.mxu0 0.0
    %1628 = vmatprep.mubr.f32.mxu0 0.0
    %1629 = vmatmul.mubr.f32.gmra.mrb[0].mxu0 %v1562
    %v1630 = vpop.f32.mrb[0].mxu0
    %v1631 = vadd.f32 %v1486, %v1630
    %v1632 = vpop.f32.mrb[0].mxu0
    %v1633 = vadd.f32 %v1488, %v1632
    %1634 = vdwg.mxu0
    %1635 = vmatprep.subr.mxu0 %v51
    %1636 = vmatpush1.msra.mxu0 %v50
    %1637 = vmatprep.subr.mxu0 %v55
    %1638 = vmatpush1.msra.mxu0 %v54
    %1639 = vmatprep.subr.mxu0 %v59
    %1640 = vmatpush1.msra.mxu0 %v58
    %1641 = vmatprep.subr.mxu0 %v63
    %1642 = vmatpush1.msra.mxu0 %v62
    %1643 = vmatprep.subr.mxu0 %v67
    %1644 = vmatpush1.msra.mxu0 %v66
    %1645 = vmatprep.subr.mxu0 %v71
    %1646 = vmatpush1.msra.mxu0 %v70
    %1647 = vmatprep.subr.mxu0 %v75
    %1648 = vmatpush1.msra.mxu0 %v74
    %1649 = vmatprep.subr.mxu0 %v79
    %1650 = vmatpush1.msra.mxu0 %v78
    %1651 = vmatprep.subr.mxu0 %v83
    %1652 = vmatpush1.msra.mxu0 %v82
    %1653 = vmatprep.subr.mxu0 %v310
    %1654 = vmatpush1.msra.mxu0 %v307
    %1655 = vmatprep.subr.mxu0 0.0
    %1656 = vmatpush1.msra.mxu0 0.0
    %1657 = vmatprep.subr.mxu0 0.0
    %1658 = vmatpush1.msra.mxu0 0.0
    %1659 = vmatprep.subr.mxu0 0.0
    %1660 = vmatpush1.msra.mxu0 0.0
    %1661 = vmatprep.subr.mxu0 0.0
    %1662 = vmatpush1.msra.mxu0 0.0
    %1663 = vmatprep.subr.mxu0 0.0
    %1664 = vmatpush1.msra.mxu0 0.0
    %1665 = vmatprep.subr.mxu0 0.0
    %1666 = vmatpush1.msra.mxu0 0.0
    %1667 = vmatprep.subr.mxu0 0.0
    %1668 = vmatpush1.msra.mxu0 0.0
    %1669 = vmatprep.subr.mxu0 0.0
    %1670 = vmatpush1.msra.mxu0 0.0
    %1671 = vmatprep.subr.mxu0 0.0
    %1672 = vmatpush1.msra.mxu0 0.0
    %1673 = vmatprep.subr.mxu0 0.0
    %1674 = vmatpush1.msra.mxu0 0.0
    %1675 = vmatprep.subr.mxu0 0.0
    %1676 = vmatpush1.msra.mxu0 0.0
    %1677 = vmatprep.subr.mxu0 0.0
    %1678 = vmatpush1.msra.mxu0 0.0
    %1679 = vmatprep.subr.mxu0 0.0
    %1680 = vmatpush1.msra.mxu0 0.0
    %1681 = vmatprep.subr.mxu0 0.0
    %1682 = vmatpush1.msra.mxu0 0.0
    %1683 = vmatprep.subr.mxu0 0.0
    %1684 = vmatpush1.msra.mxu0 0.0
    %1685 = vmatprep.subr.mxu0 0.0
    %1686 = vmatpush1.msra.mxu0 0.0
    %1687 = vmatprep.subr.mxu0 0.0
    %1688 = vmatpush1.msra.mxu0 0.0
    %1689 = vmatprep.subr.mxu0 0.0
    %1690 = vmatpush1.msra.mxu0 0.0
    %1691 = vmatprep.subr.mxu0 0.0
    %1692 = vmatpush1.msra.mxu0 0.0
    %1693 = vmatprep.subr.mxu0 0.0
    %1694 = vmatpush1.msra.mxu0 0.0
    %1695 = vmatprep.subr.mxu0 0.0
    %1696 = vmatpush1.msra.mxu0 0.0
    %1697 = vmatprep.subr.mxu0 0.0
    %1698 = vmatpush1.msra.mxu0 0.0
    %1699 = vmatprep.mubr.f32.mxu0 0.0
    %1700 = vmatmul.mubr.f32.gmra.mrb[0].mxu0 %v1562
    %v1701 = vpop.f32.mrb[0].mxu0
    %v1702 = vadd.f32 %v1557, %v1701
    %v1703 = vpop.f32.mrb[0].mxu0
    %v1704 = vadd.f32 %v1559, %v1703
    %1705 = vdwg.mxu0
    %v1706 = vxor.u32 %v1631, 2147483648
    %v1707 = vmul.f32 %v1706, 1.442695
    %v1708 = vpow.pop %v1707
    %v1709 = vadd.f32 %v1708, 1.0
    %v1710 = vrcp.pop %v1709
    %v1711 = vmul.f32 1.0, %v1710
    %v1712 = vxor.u32 %v1633, 2147483648
    %v1713 = vmul.f32 %v1712, 1.442695
    %v1714 = vpow.pop %v1713
    %v1715 = vadd.f32 %v1714, 1.0
    %v1716 = vrcp.pop %v1715
    %v1717 = vmul.f32 1.0, %v1716
    %v1718 = vtanh.pop %v1702
    %v1719 = vxor.u32 %v1704, 2147483648
    %v1720 = vmul.f32 %v1719, 1.442695
    %v1721 = vpow.pop %v1720
    %v1722 = vadd.f32 %v1721, 1.0
    %v1723 = vrcp.pop %v1722
    %v1724 = vmul.f32 1.0, %v1723
    %v1725 = vmul.f32 %v1717, %v1414
    %v1726 = vmul.f32 %v1711, %v1718
    %v1727 = vadd.f32 %v1725, %v1726
    %v1728 = vtanh.pop %v1727
    %v1729 = vmul.f32 %v1724, %v1728
    %s1730 = scalar_lea.vmem %s0, 40
    %v1731 = vld [vmem:[%s1730] sm:$0xff]
    %1732 = vmatprep.subr.mxu0 %v89
    %1733 = vmatpush1.msra.mxu0 %v88
    %1734 = vmatprep.subr.mxu0 %v93
    %1735 = vmatpush1.msra.mxu0 %v92
    %1736 = vmatprep.subr.mxu0 %v97
    %1737 = vmatpush1.msra.mxu0 %v96
    %1738 = vmatprep.subr.mxu0 %v101
    %1739 = vmatpush1.msra.mxu0 %v100
    %1740 = vmatprep.subr.mxu0 %v105
    %1741 = vmatpush1.msra.mxu0 %v104
    %1742 = vmatprep.subr.mxu0 %v109
    %1743 = vmatpush1.msra.mxu0 %v108
    %1744 = vmatprep.subr.mxu0 %v113
    %1745 = vmatpush1.msra.mxu0 %v112
    %1746 = vmatprep.subr.mxu0 %v117
    %1747 = vmatpush1.msra.mxu0 %v116
    %1748 = vmatprep.subr.mxu0 %v121
    %1749 = vmatpush1.msra.mxu0 %v120
    %1750 = vmatprep.subr.mxu0 %v125
    %1751 = vmatpush1.msra.mxu0 %v124
    %1752 = vmatprep.subr.mxu0 %v129
    %1753 = vmatpush1.msra.mxu0 %v128
    %1754 = vmatprep.subr.mxu0 %v133
    %1755 = vmatpush1.msra.mxu0 %v132
    %1756 = vmatprep.subr.mxu0 %v137
    %1757 = vmatpush1.msra.mxu0 %v136
    %1758 = vmatprep.subr.mxu0 %v141
    %1759 = vmatpush1.msra.mxu0 %v140
    %1760 = vmatprep.subr.mxu0 %v145
    %1761 = vmatpush1.msra.mxu0 %v144
    %1762 = vmatprep.subr.mxu0 %v149
    %1763 = vmatpush1.msra.mxu0 %v148
    %1764 = vmatprep.subr.mxu0 0.0
    %1765 = vmatpush1.msra.mxu0 0.0
    %1766 = vmatprep.subr.mxu0 0.0
    %1767 = vmatpush1.msra.mxu0 0.0
    %1768 = vmatprep.subr.mxu0 0.0
    %1769 = vmatpush1.msra.mxu0 0.0
    %1770 = vmatprep.subr.mxu0 0.0
    %1771 = vmatpush1.msra.mxu0 0.0
    %1772 = vmatprep.subr.mxu0 0.0
    %1773 = vmatpush1.msra.mxu0 0.0
    %1774 = vmatprep.subr.mxu0 0.0
    %1775 = vmatpush1.msra.mxu0 0.0
    %1776 = vmatprep.subr.mxu0 0.0
    %1777 = vmatpush1.msra.mxu0 0.0
    %1778 = vmatprep.subr.mxu0 0.0
    %1779 = vmatpush1.msra.mxu0 0.0
    %1780 = vmatprep.subr.mxu0 0.0
    %1781 = vmatpush1.msra.mxu0 0.0
    %1782 = vmatprep.subr.mxu0 0.0
    %1783 = vmatpush1.msra.mxu0 0.0
    %1784 = vmatprep.subr.mxu0 0.0
    %1785 = vmatpush1.msra.mxu0 0.0
    %1786 = vmatprep.subr.mxu0 0.0
    %1787 = vmatpush1.msra.mxu0 0.0
    %1788 = vmatprep.subr.mxu0 0.0
    %1789 = vmatpush1.msra.mxu0 0.0
    %1790 = vmatprep.subr.mxu0 0.0
    %1791 = vmatpush1.msra.mxu0 0.0
    %1792 = vmatprep.subr.mxu0 0.0
    %1793 = vmatpush1.msra.mxu0 0.0
    %1794 = vmatprep.subr.mxu0 0.0
    %1795 = vmatpush1.msra.mxu0 0.0
    %1796 = vmatprep.mubr.f32.mxu0 0.0
    %1797 = vmatmul.mubr.f32.gmra.mrb[0].mxu0 %v1729
    %v1798 = vpop.f32.mrb[0].mxu0
    %v1799 = vadd.f32 0.0, %v1798
    %v1800 = vpop.f32.mrb[0].mxu0
    %v1801 = vadd.f32 0.0, %v1800
    %1802 = vdwg.mxu0
    %1803 = vmatprep.subr.mxu0 %v91
    %1804 = vmatpush1.msra.mxu0 %v90
    %1805 = vmatprep.subr.mxu0 %v95
    %1806 = vmatpush1.msra.mxu0 %v94
    %1807 = vmatprep.subr.mxu0 %v99
    %1808 = vmatpush1.msra.mxu0 %v98
    %1809 = vmatprep.subr.mxu0 %v103
    %1810 = vmatpush1.msra.mxu0 %v102
    %1811 = vmatprep.subr.mxu0 %v107
    %1812 = vmatpush1.msra.mxu0 %v106
    %1813 = vmatprep.subr.mxu0 %v111
    %1814 = vmatpush1.msra.mxu0 %v110
    %1815 = vmatprep.subr.mxu0 %v115
    %1816 = vmatpush1.msra.mxu0 %v114
    %1817 = vmatprep.subr.mxu0 %v119
    %1818 = vmatpush1.msra.mxu0 %v118
    %1819 = vmatprep.subr.mxu0 %v123
    %1820 = vmatpush1.msra.mxu0 %v122
    %1821 = vmatprep.subr.mxu0 %v127
    %1822 = vmatpush1.msra.mxu0 %v126
    %1823 = vmatprep.subr.mxu0 %v131
    %1824 = vmatpush1.msra.mxu0 %v130
    %1825 = vmatprep.subr.mxu0 %v135
    %1826 = vmatpush1.msra.mxu0 %v134
    %1827 = vmatprep.subr.mxu0 %v139
    %1828 = vmatpush1.msra.mxu0 %v138
    %1829 = vmatprep.subr.mxu0 %v143
    %1830 = vmatpush1.msra.mxu0 %v142
    %1831 = vmatprep.subr.mxu0 %v147
    %1832 = vmatpush1.msra.mxu0 %v146
    %1833 = vmatprep.subr.mxu0 %v151
    %1834 = vmatpush1.msra.mxu0 %v150
    %1835 = vmatprep.subr.mxu0 0.0
    %1836 = vmatpush1.msra.mxu0 0.0
    %1837 = vmatprep.subr.mxu0 0.0
    %1838 = vmatpush1.msra.mxu0 0.0
    %1839 = vmatprep.subr.mxu0 0.0
    %1840 = vmatpush1.msra.mxu0 0.0
    %1841 = vmatprep.subr.mxu0 0.0
    %1842 = vmatpush1.msra.mxu0 0.0
    %1843 = vmatprep.subr.mxu0 0.0
    %1844 = vmatpush1.msra.mxu0 0.0
    %1845 = vmatprep.subr.mxu0 0.0
    %1846 = vmatpush1.msra.mxu0 0.0
    %1847 = vmatprep.subr.mxu0 0.0
    %1848 = vmatpush1.msra.mxu0 0.0
    %1849 = vmatprep.subr.mxu0 0.0
    %1850 = vmatpush1.msra.mxu0 0.0
    %1851 = vmatprep.subr.mxu0 0.0
    %1852 = vmatpush1.msra.mxu0 0.0
    %1853 = vmatprep.subr.mxu0 0.0
    %1854 = vmatpush1.msra.mxu0 0.0
    %1855 = vmatprep.subr.mxu0 0.0
    %1856 = vmatpush1.msra.mxu0 0.0
    %1857 = vmatprep.subr.mxu0 0.0
    %1858 = vmatpush1.msra.mxu0 0.0
    %1859 = vmatprep.subr.mxu0 0.0
    %1860 = vmatpush1.msra.mxu0 0.0
    %1861 = vmatprep.subr.mxu0 0.0
    %1862 = vmatpush1.msra.mxu0 0.0
    %1863 = vmatprep.subr.mxu0 0.0
    %1864 = vmatpush1.msra.mxu0 0.0
    %1865 = vmatprep.subr.mxu0 0.0
    %1866 = vmatpush1.msra.mxu0 0.0
    %1867 = vmatprep.mubr.f32.mxu0 0.0
    %1868 = vmatmul.mubr.f32.gmra.mrb[0].mxu0 %v1729
    %v1869 = vpop.f32.mrb[0].mxu0
    %v1870 = vadd.f32 0.0, %v1869
    %v1871 = vpop.f32.mrb[0].mxu0
    %v1872 = vadd.f32 0.0, %v1871
    %1873 = vdwg.mxu0
    %v1875 = vsel %vm295, %v1731, 0
    %1877 = vmatprep.subr.mxu0 %v49
    %1878 = vmatpush1.msra.mxu0 %v48
    %1879 = vmatprep.subr.mxu0 %v53
    %1880 = vmatpush1.msra.mxu0 %v52
    %1881 = vmatprep.subr.mxu0 %v57
    %1882 = vmatpush1.msra.mxu0 %v56
    %1883 = vmatprep.subr.mxu0 %v61
    %1884 = vmatpush1.msra.mxu0 %v60
    %1885 = vmatprep.subr.mxu0 %v65
    %1886 = vmatpush1.msra.mxu0 %v64
    %1887 = vmatprep.subr.mxu0 %v69
    %1888 = vmatpush1.msra.mxu0 %v68
    %1889 = vmatprep.subr.mxu0 %v73
    %1890 = vmatpush1.msra.mxu0 %v72
    %1891 = vmatprep.subr.mxu0 %v77
    %1892 = vmatpush1.msra.mxu0 %v76
    %1893 = vmatprep.subr.mxu0 %v81
    %1894 = vmatpush1.msra.mxu0 %v80
    %1895 = vmatprep.subr.mxu0 %v304
    %1896 = vmatpush1.msra.mxu0 %v301
    %1897 = vmatprep.subr.mxu0 0.0
    %1898 = vmatpush1.msra.mxu0 0.0
    %1899 = vmatprep.subr.mxu0 0.0
    %1900 = vmatpush1.msra.mxu0 0.0
    %1901 = vmatprep.subr.mxu0 0.0
    %1902 = vmatpush1.msra.mxu0 0.0
    %1903 = vmatprep.subr.mxu0 0.0
    %1904 = vmatpush1.msra.mxu0 0.0
    %1905 = vmatprep.subr.mxu0 0.0
    %1906 = vmatpush1.msra.mxu0 0.0
    %1907 = vmatprep.subr.mxu0 0.0
    %1908 = vmatpush1.msra.mxu0 0.0
    %1909 = vmatprep.subr.mxu0 0.0
    %1910 = vmatpush1.msra.mxu0 0.0
    %1911 = vmatprep.subr.mxu0 0.0
    %1912 = vmatpush1.msra.mxu0 0.0
    %1913 = vmatprep.subr.mxu0 0.0
    %1914 = vmatpush1.msra.mxu0 0.0
    %1915 = vmatprep.subr.mxu0 0.0
    %1916 = vmatpush1.msra.mxu0 0.0
    %1917 = vmatprep.subr.mxu0 0.0
    %1918 = vmatpush1.msra.mxu0 0.0
    %1919 = vmatprep.subr.mxu0 0.0
    %1920 = vmatpush1.msra.mxu0 0.0
    %1921 = vmatprep.subr.mxu0 0.0
    %1922 = vmatpush1.msra.mxu0 0.0
    %1923 = vmatprep.subr.mxu0 0.0
    %1924 = vmatpush1.msra.mxu0 0.0
    %1925 = vmatprep.subr.mxu0 0.0
    %1926 = vmatpush1.msra.mxu0 0.0
    %1927 = vmatprep.subr.mxu0 0.0
    %1928 = vmatpush1.msra.mxu0 0.0
    %1929 = vmatprep.subr.mxu0 0.0
    %1930 = vmatpush1.msra.mxu0 0.0
    %1931 = vmatprep.subr.mxu0 0.0
    %1932 = vmatpush1.msra.mxu0 0.0
    %1933 = vmatprep.subr.mxu0 0.0
    %1934 = vmatpush1.msra.mxu0 0.0
    %1935 = vmatprep.subr.mxu0 0.0
    %1936 = vmatpush1.msra.mxu0 0.0
    %1937 = vmatprep.subr.mxu0 0.0
    %1938 = vmatpush1.msra.mxu0 0.0
    %1939 = vmatprep.subr.mxu0 0.0
    %1940 = vmatpush1.msra.mxu0 0.0
    %1941 = vmatprep.mubr.f32.mxu0 0.0
    %1942 = vmatmul.mubr.f32.gmra.mrb[0].mxu0 %v1875
    %v1943 = vpop.f32.mrb[0].mxu0
    %v1944 = vadd.f32 %v1799, %v1943
    %v1945 = vpop.f32.mrb[0].mxu0
    %v1946 = vadd.f32 %v1801, %v1945
    %1947 = vdwg.mxu0
    %1948 = vmatprep.subr.mxu0 %v51
    %1949 = vmatpush1.msra.mxu0 %v50
    %1950 = vmatprep.subr.mxu0 %v55
    %1951 = vmatpush1.msra.mxu0 %v54
    %1952 = vmatprep.subr.mxu0 %v59
    %1953 = vmatpush1.msra.mxu0 %v58
    %1954 = vmatprep.subr.mxu0 %v63
    %1955 = vmatpush1.msra.mxu0 %v62
    %1956 = vmatprep.subr.mxu0 %v67
    %1957 = vmatpush1.msra.mxu0 %v66
    %1958 = vmatprep.subr.mxu0 %v71
    %1959 = vmatpush1.msra.mxu0 %v70
    %1960 = vmatprep.subr.mxu0 %v75
    %1961 = vmatpush1.msra.mxu0 %v74
    %1962 = vmatprep.subr.mxu0 %v79
    %1963 = vmatpush1.msra.mxu0 %v78
    %1964 = vmatprep.subr.mxu0 %v83
    %1965 = vmatpush1.msra.mxu0 %v82
    %1966 = vmatprep.subr.mxu0 %v310
    %1967 = vmatpush1.msra.mxu0 %v307
    %1968 = vmatprep.subr.mxu0 0.0
    %1969 = vmatpush1.msra.mxu0 0.0
    %1970 = vmatprep.subr.mxu0 0.0
    %1971 = vmatpush1.msra.mxu0 0.0
    %1972 = vmatprep.subr.mxu0 0.0
    %1973 = vmatpush1.msra.mxu0 0.0
    %1974 = vmatprep.subr.mxu0 0.0
    %1975 = vmatpush1.msra.mxu0 0.0
    %1976 = vmatprep.subr.mxu0 0.0
    %1977 = vmatpush1.msra.mxu0 0.0
    %1978 = vmatprep.subr.mxu0 0.0
    %1979 = vmatpush1.msra.mxu0 0.0
    %1980 = vmatprep.subr.mxu0 0.0
    %1981 = vmatpush1.msra.mxu0 0.0
    %1982 = vmatprep.subr.mxu0 0.0
    %1983 = vmatpush1.msra.mxu0 0.0
    %1984 = vmatprep.subr.mxu0 0.0
    %1985 = vmatpush1.msra.mxu0 0.0
    %1986 = vmatprep.subr.mxu0 0.0
    %1987 = vmatpush1.msra.mxu0 0.0
    %1988 = vmatprep.subr.mxu0 0.0
    %1989 = vmatpush1.msra.mxu0 0.0
    %1990 = vmatprep.subr.mxu0 0.0
    %1991 = vmatpush1.msra.mxu0 0.0
    %1992 = vmatprep.subr.mxu0 0.0
    %1993 = vmatpush1.msra.mxu0 0.0
    %1994 = vmatprep.subr.mxu0 0.0
    %1995 = vmatpush1.msra.mxu0 0.0
    %1996 = vmatprep.subr.mxu0 0.0
    %1997 = vmatpush1.msra.mxu0 0.0
    %1998 = vmatprep.subr.mxu0 0.0
    %1999 = vmatpush1.msra.mxu0 0.0
    %2000 = vmatprep.subr.mxu0 0.0
    %2001 = vmatpush1.msra.mxu0 0.0
    %2002 = vmatprep.subr.mxu0 0.0
    %2003 = vmatpush1.msra.mxu0 0.0
    %2004 = vmatprep.subr.mxu0 0.0
    %2005 = vmatpush1.msra.mxu0 0.0
    %2006 = vmatprep.subr.mxu0 0.0
    %2007 = vmatpush1.msra.mxu0 0.0
    %2008 = vmatprep.subr.mxu0 0.0
    %2009 = vmatpush1.msra.mxu0 0.0
    %2010 = vmatprep.subr.mxu0 0.0
    %2011 = vmatpush1.msra.mxu0 0.0
    %2012 = vmatprep.mubr.f32.mxu0 0.0
    %2013 = vmatmul.mubr.f32.gmra.mrb[0].mxu0 %v1875
    %v2014 = vpop.f32.mrb[0].mxu0
    %v2015 = vadd.f32 %v1870, %v2014
    %v2016 = vpop.f32.mrb[0].mxu0
    %v2017 = vadd.f32 %v1872, %v2016
    %2018 = vdwg.mxu0
    %v2019 = vxor.u32 %v1944, 2147483648
    %v2020 = vmul.f32 %v2019, 1.442695
    %v2021 = vpow.pop %v2020
    %v2022 = vadd.f32 %v2021, 1.0
    %v2023 = vrcp.pop %v2022
    %v2024 = vmul.f32 1.0, %v2023
    %v2025 = vxor.u32 %v1946, 2147483648
    %v2026 = vmul.f32 %v2025, 1.442695
    %v2027 = vpow.pop %v2026
    %v2028 = vadd.f32 %v2027, 1.0
    %v2029 = vrcp.pop %v2028
    %v2030 = vmul.f32 1.0, %v2029
    %v2031 = vtanh.pop %v2015
    %v2032 = vxor.u32 %v2017, 2147483648
    %v2033 = vmul.f32 %v2032, 1.442695
    %v2034 = vpow.pop %v2033
    %v2035 = vadd.f32 %v2034, 1.0
    %v2036 = vrcp.pop %v2035
    %v2037 = vmul.f32 1.0, %v2036
    %v2038 = vmul.f32 %v2030, %v1727
    %v2039 = vmul.f32 %v2024, %v2031
    %v2040 = vadd.f32 %v2038, %v2039
    %v2041 = vtanh.pop %v2040
    %v2042 = vmul.f32 %v2037, %v2041
    %s2043 = scalar_lea.vmem %s0, 48
    %v2044 = vld [vmem:[%s2043] sm:$0xff]
    %2045 = vmatprep.subr.mxu0 %v89
    %2046 = vmatpush1.msra.mxu0 %v88
    %2047 = vmatprep.subr.mxu0 %v93
    %2048 = vmatpush1.msra.mxu0 %v92
    %2049 = vmatprep.subr.mxu0 %v97
    %2050 = vmatpush1.msra.mxu0 %v96
    %2051 = vmatprep.subr.mxu0 %v101
    %2052 = vmatpush1.msra.mxu0 %v100
    %2053 = vmatprep.subr.mxu0 %v105
    %2054 = vmatpush1.msra.mxu0 %v104
    %2055 = vmatprep.subr.mxu0 %v109
    %2056 = vmatpush1.msra.mxu0 %v108
    %2057 = vmatprep.subr.mxu0 %v113
    %2058 = vmatpush1.msra.mxu0 %v112
    %2059 = vmatprep.subr.mxu0 %v117
    %2060 = vmatpush1.msra.mxu0 %v116
    %2061 = vmatprep.subr.mxu0 %v121
    %2062 = vmatpush1.msra.mxu0 %v120
    %2063 = vmatprep.subr.mxu0 %v125
    %2064 = vmatpush1.msra.mxu0 %v124
    %2065 = vmatprep.subr.mxu0 %v129
    %2066 = vmatpush1.msra.mxu0 %v128
    %2067 = vmatprep.subr.mxu0 %v133
    %2068 = vmatpush1.msra.mxu0 %v132
    %2069 = vmatprep.subr.mxu0 %v137
    %2070 = vmatpush1.msra.mxu0 %v136
    %2071 = vmatprep.subr.mxu0 %v141
    %2072 = vmatpush1.msra.mxu0 %v140
    %2073 = vmatprep.subr.mxu0 %v145
    %2074 = vmatpush1.msra.mxu0 %v144
    %2075 = vmatprep.subr.mxu0 %v149
    %2076 = vmatpush1.msra.mxu0 %v148
    %2077 = vmatprep.subr.mxu0 0.0
    %2078 = vmatpush1.msra.mxu0 0.0
    %2079 = vmatprep.subr.mxu0 0.0
    %2080 = vmatpush1.msra.mxu0 0.0
    %2081 = vmatprep.subr.mxu0 0.0
    %2082 = vmatpush1.msra.mxu0 0.0
    %2083 = vmatprep.subr.mxu0 0.0
    %2084 = vmatpush1.msra.mxu0 0.0
    %2085 = vmatprep.subr.mxu0 0.0
    %2086 = vmatpush1.msra.mxu0 0.0
    %2087 = vmatprep.subr.mxu0 0.0
    %2088 = vmatpush1.msra.mxu0 0.0
    %2089 = vmatprep.subr.mxu0 0.0
    %2090 = vmatpush1.msra.mxu0 0.0
    %2091 = vmatprep.subr.mxu0 0.0
    %2092 = vmatpush1.msra.mxu0 0.0
    %2093 = vmatprep.subr.mxu0 0.0
    %2094 = vmatpush1.msra.mxu0 0.0
    %2095 = vmatprep.subr.mxu0 0.0
    %2096 = vmatpush1.msra.mxu0 0.0
    %2097 = vmatprep.subr.mxu0 0.0
    %2098 = vmatpush1.msra.mxu0 0.0
    %2099 = vmatprep.subr.mxu0 0.0
    %2100 = vmatpush1.msra.mxu0 0.0
    %2101 = vmatprep.subr.mxu0 0.0
    %2102 = vmatpush1.msra.mxu0 0.0
    %2103 = vmatprep.subr.mxu0 0.0
    %2104 = vmatpush1.msra.mxu0 0.0
    %2105 = vmatprep.subr.mxu0 0.0
    %2106 = vmatpush1.msra.mxu0 0.0
    %2107 = vmatprep.subr.mxu0 0.0
    %2108 = vmatpush1.msra.mxu0 0.0
    %2109 = vmatprep.mubr.f32.mxu0 0.0
    %2110 = vmatmul.mubr.f32.gmra.mrb[0].mxu0 %v2042
    %v2111 = vpop.f32.mrb[0].mxu0
    %v2112 = vadd.f32 0.0, %v2111
    %v2113 = vpop.f32.mrb[0].mxu0
    %v2114 = vadd.f32 0.0, %v2113
    %2115 = vdwg.mxu0
    %2116 = vmatprep.subr.mxu0 %v91
    %2117 = vmatpush1.msra.mxu0 %v90
    %2118 = vmatprep.subr.mxu0 %v95
    %2119 = vmatpush1.msra.mxu0 %v94
    %2120 = vmatprep.subr.mxu0 %v99
    %2121 = vmatpush1.msra.mxu0 %v98
    %2122 = vmatprep.subr.mxu0 %v103
    %2123 = vmatpush1.msra.mxu0 %v102
    %2124 = vmatprep.subr.mxu0 %v107
    %2125 = vmatpush1.msra.mxu0 %v106
    %2126 = vmatprep.subr.mxu0 %v111
    %2127 = vmatpush1.msra.mxu0 %v110
    %2128 = vmatprep.subr.mxu0 %v115
    %2129 = vmatpush1.msra.mxu0 %v114
    %2130 = vmatprep.subr.mxu0 %v119
    %2131 = vmatpush1.msra.mxu0 %v118
    %2132 = vmatprep.subr.mxu0 %v123
    %2133 = vmatpush1.msra.mxu0 %v122
    %2134 = vmatprep.subr.mxu0 %v127
    %2135 = vmatpush1.msra.mxu0 %v126
    %2136 = vmatprep.subr.mxu0 %v131
    %2137 = vmatpush1.msra.mxu0 %v130
    %2138 = vmatprep.subr.mxu0 %v135
    %2139 = vmatpush1.msra.mxu0 %v134
    %2140 = vmatprep.subr.mxu0 %v139
    %2141 = vmatpush1.msra.mxu0 %v138
    %2142 = vmatprep.subr.mxu0 %v143
    %2143 = vmatpush1.msra.mxu0 %v142
    %2144 = vmatprep.subr.mxu0 %v147
    %2145 = vmatpush1.msra.mxu0 %v146
    %2146 = vmatprep.subr.mxu0 %v151
    %2147 = vmatpush1.msra.mxu0 %v150
    %2148 = vmatprep.subr.mxu0 0.0
    %2149 = vmatpush1.msra.mxu0 0.0
    %2150 = vmatprep.subr.mxu0 0.0
    %2151 = vmatpush1.msra.mxu0 0.0
    %2152 = vmatprep.subr.mxu0 0.0
    %2153 = vmatpush1.msra.mxu0 0.0
    %2154 = vmatprep.subr.mxu0 0.0
    %2155 = vmatpush1.msra.mxu0 0.0
    %2156 = vmatprep.subr.mxu0 0.0
    %2157 = vmatpush1.msra.mxu0 0.0
    %2158 = vmatprep.subr.mxu0 0.0
    %2159 = vmatpush1.msra.mxu0 0.0
    %2160 = vmatprep.subr.mxu0 0.0
    %2161 = vmatpush1.msra.mxu0 0.0
    %2162 = vmatprep.subr.mxu0 0.0
    %2163 = vmatpush1.msra.mxu0 0.0
    %2164 = vmatprep.subr.mxu0 0.0
    %2165 = vmatpush1.msra.mxu0 0.0
    %2166 = vmatprep.subr.mxu0 0.0
    %2167 = vmatpush1.msra.mxu0 0.0
    %2168 = vmatprep.subr.mxu0 0.0
    %2169 = vmatpush1.msra.mxu0 0.0
    %2170 = vmatprep.subr.mxu0 0.0
    %2171 = vmatpush1.msra.mxu0 0.0
    %2172 = vmatprep.subr.mxu0 0.0
    %2173 = vmatpush1.msra.mxu0 0.0
    %2174 = vmatprep.subr.mxu0 0.0
    %2175 = vmatpush1.msra.mxu0 0.0
    %2176 = vmatprep.subr.mxu0 0.0
    %2177 = vmatpush1.msra.mxu0 0.0
    %2178 = vmatprep.subr.mxu0 0.0
    %2179 = vmatpush1.msra.mxu0 0.0
    %2180 = vmatprep.mubr.f32.mxu0 0.0
    %2181 = vmatmul.mubr.f32.gmra.mrb[0].mxu0 %v2042
    %v2182 = vpop.f32.mrb[0].mxu0
    %v2183 = vadd.f32 0.0, %v2182
    %v2184 = vpop.f32.mrb[0].mxu0
    %v2185 = vadd.f32 0.0, %v2184
    %2186 = vdwg.mxu0
    %v2188 = vsel %vm295, %v2044, 0
    %2190 = vmatprep.subr.mxu0 %v49
    %2191 = vmatpush1.msra.mxu0 %v48
    %2192 = vmatprep.subr.mxu0 %v53
    %2193 = vmatpush1.msra.mxu0 %v52
    %2194 = vmatprep.subr.mxu0 %v57
    %2195 = vmatpush1.msra.mxu0 %v56
    %2196 = vmatprep.subr.mxu0 %v61
    %2197 = vmatpush1.msra.mxu0 %v60
    %2198 = vmatprep.subr.mxu0 %v65
    %2199 = vmatpush1.msra.mxu0 %v64
    %2200 = vmatprep.subr.mxu0 %v69
    %2201 = vmatpush1.msra.mxu0 %v68
    %2202 = vmatprep.subr.mxu0 %v73
    %2203 = vmatpush1.msra.mxu0 %v72
    %2204 = vmatprep.subr.mxu0 %v77
    %2205 = vmatpush1.msra.mxu0 %v76
    %2206 = vmatprep.subr.mxu0 %v81
    %2207 = vmatpush1.msra.mxu0 %v80
    %2208 = vmatprep.subr.mxu0 %v304
    %2209 = vmatpush1.msra.mxu0 %v301
    %2210 = vmatprep.subr.mxu0 0.0
    %2211 = vmatpush1.msra.mxu0 0.0
    %2212 = vmatprep.subr.mxu0 0.0
    %2213 = vmatpush1.msra.mxu0 0.0
    %2214 = vmatprep.subr.mxu0 0.0
    %2215 = vmatpush1.msra.mxu0 0.0
    %2216 = vmatprep.subr.mxu0 0.0
    %2217 = vmatpush1.msra.mxu0 0.0
    %2218 = vmatprep.subr.mxu0 0.0
    %2219 = vmatpush1.msra.mxu0 0.0
    %2220 = vmatprep.subr.mxu0 0.0
    %2221 = vmatpush1.msra.mxu0 0.0
    %2222 = vmatprep.subr.mxu0 0.0
    %2223 = vmatpush1.msra.mxu0 0.0
    %2224 = vmatprep.subr.mxu0 0.0
    %2225 = vmatpush1.msra.mxu0 0.0
    %2226 = vmatprep.subr.mxu0 0.0
    %2227 = vmatpush1.msra.mxu0 0.0
    %2228 = vmatprep.subr.mxu0 0.0
    %2229 = vmatpush1.msra.mxu0 0.0
    %2230 = vmatprep.subr.mxu0 0.0
    %2231 = vmatpush1.msra.mxu0 0.0
    %2232 = vmatprep.subr.mxu0 0.0
    %2233 = vmatpush1.msra.mxu0 0.0
    %2234 = vmatprep.subr.mxu0 0.0
    %2235 = vmatpush1.msra.mxu0 0.0
    %2236 = vmatprep.subr.mxu0 0.0
    %2237 = vmatpush1.msra.mxu0 0.0
    %2238 = vmatprep.subr.mxu0 0.0
    %2239 = vmatpush1.msra.mxu0 0.0
    %2240 = vmatprep.subr.mxu0 0.0
    %2241 = vmatpush1.msra.mxu0 0.0
    %2242 = vmatprep.subr.mxu0 0.0
    %2243 = vmatpush1.msra.mxu0 0.0
    %2244 = vmatprep.subr.mxu0 0.0
    %2245 = vmatpush1.msra.mxu0 0.0
    %2246 = vmatprep.subr.mxu0 0.0
    %2247 = vmatpush1.msra.mxu0 0.0
    %2248 = vmatprep.subr.mxu0 0.0
    %2249 = vmatpush1.msra.mxu0 0.0
    %2250 = vmatprep.subr.mxu0 0.0
    %2251 = vmatpush1.msra.mxu0 0.0
    %2252 = vmatprep.subr.mxu0 0.0
    %2253 = vmatpush1.msra.mxu0 0.0
    %2254 = vmatprep.mubr.f32.mxu0 0.0
    %2255 = vmatmul.mubr.f32.gmra.mrb[0].mxu0 %v2188
    %v2256 = vpop.f32.mrb[0].mxu0
    %v2257 = vadd.f32 %v2112, %v2256
    %v2258 = vpop.f32.mrb[0].mxu0
    %v2259 = vadd.f32 %v2114, %v2258
    %2260 = vdwg.mxu0
    %2261 = vmatprep.subr.mxu0 %v51
    %2262 = vmatpush1.msra.mxu0 %v50
    %2263 = vmatprep.subr.mxu0 %v55
    %2264 = vmatpush1.msra.mxu0 %v54
    %2265 = vmatprep.subr.mxu0 %v59
    %2266 = vmatpush1.msra.mxu0 %v58
    %2267 = vmatprep.subr.mxu0 %v63
    %2268 = vmatpush1.msra.mxu0 %v62
    %2269 = vmatprep.subr.mxu0 %v67
    %2270 = vmatpush1.msra.mxu0 %v66
    %2271 = vmatprep.subr.mxu0 %v71
    %2272 = vmatpush1.msra.mxu0 %v70
    %2273 = vmatprep.subr.mxu0 %v75
    %2274 = vmatpush1.msra.mxu0 %v74
    %2275 = vmatprep.subr.mxu0 %v79
    %2276 = vmatpush1.msra.mxu0 %v78
    %2277 = vmatprep.subr.mxu0 %v83
    %2278 = vmatpush1.msra.mxu0 %v82
    %2279 = vmatprep.subr.mxu0 %v310
    %2280 = vmatpush1.msra.mxu0 %v307
    %2281 = vmatprep.subr.mxu0 0.0
    %2282 = vmatpush1.msra.mxu0 0.0
    %2283 = vmatprep.subr.mxu0 0.0
    %2284 = vmatpush1.msra.mxu0 0.0
    %2285 = vmatprep.subr.mxu0 0.0
    %2286 = vmatpush1.msra.mxu0 0.0
    %2287 = vmatprep.subr.mxu0 0.0
    %2288 = vmatpush1.msra.mxu0 0.0
    %2289 = vmatprep.subr.mxu0 0.0
    %2290 = vmatpush1.msra.mxu0 0.0
    %2291 = vmatprep.subr.mxu0 0.0
    %2292 = vmatpush1.msra.mxu0 0.0
    %2293 = vmatprep.subr.mxu0 0.0
    %2294 = vmatpush1.msra.mxu0 0.0
    %2295 = vmatprep.subr.mxu0 0.0
    %2296 = vmatpush1.msra.mxu0 0.0
    %2297 = vmatprep.subr.mxu0 0.0
    %2298 = vmatpush1.msra.mxu0 0.0
    %2299 = vmatprep.subr.mxu0 0.0
    %2300 = vmatpush1.msra.mxu0 0.0
    %2301 = vmatprep.subr.mxu0 0.0
    %2302 = vmatpush1.msra.mxu0 0.0
    %2303 = vmatprep.subr.mxu0 0.0
    %2304 = vmatpush1.msra.mxu0 0.0
    %2305 = vmatprep.subr.mxu0 0.0
    %2306 = vmatpush1.msra.mxu0 0.0
    %2307 = vmatprep.subr.mxu0 0.0
    %2308 = vmatpush1.msra.mxu0 0.0
    %2309 = vmatprep.subr.mxu0 0.0
    %2310 = vmatpush1.msra.mxu0 0.0
    %2311 = vmatprep.subr.mxu0 0.0
    %2312 = vmatpush1.msra.mxu0 0.0
    %2313 = vmatprep.subr.mxu0 0.0
    %2314 = vmatpush1.msra.mxu0 0.0
    %2315 = vmatprep.subr.mxu0 0.0
    %2316 = vmatpush1.msra.mxu0 0.0
    %2317 = vmatprep.subr.mxu0 0.0
    %2318 = vmatpush1.msra.mxu0 0.0
    %2319 = vmatprep.subr.mxu0 0.0
    %2320 = vmatpush1.msra.mxu0 0.0
    %2321 = vmatprep.subr.mxu0 0.0
    %2322 = vmatpush1.msra.mxu0 0.0
    %2323 = vmatprep.subr.mxu0 0.0
    %2324 = vmatpush1.msra.mxu0 0.0
    %2325 = vmatprep.mubr.f32.mxu0 0.0
    %2326 = vmatmul.mubr.f32.gmra.mrb[0].mxu0 %v2188
    %v2327 = vpop.f32.mrb[0].mxu0
    %v2328 = vadd.f32 %v2183, %v2327
    %v2329 = vpop.f32.mrb[0].mxu0
    %v2330 = vadd.f32 %v2185, %v2329
    %2331 = vdwg.mxu0
    %v2332 = vxor.u32 %v2257, 2147483648
    %v2333 = vmul.f32 %v2332, 1.442695
    %v2334 = vpow.pop %v2333
    %v2335 = vadd.f32 %v2334, 1.0
    %v2336 = vrcp.pop %v2335
    %v2337 = vmul.f32 1.0, %v2336
    %v2338 = vxor.u32 %v2259, 2147483648
    %v2339 = vmul.f32 %v2338, 1.442695
    %v2340 = vpow.pop %v2339
    %v2341 = vadd.f32 %v2340, 1.0
    %v2342 = vrcp.pop %v2341
    %v2343 = vmul.f32 1.0, %v2342
    %v2344 = vtanh.pop %v2328
    %v2345 = vxor.u32 %v2330, 2147483648
    %v2346 = vmul.f32 %v2345, 1.442695
    %v2347 = vpow.pop %v2346
    %v2348 = vadd.f32 %v2347, 1.0
    %v2349 = vrcp.pop %v2348
    %v2350 = vmul.f32 1.0, %v2349
    %v2351 = vmul.f32 %v2343, %v2040
    %v2352 = vmul.f32 %v2337, %v2344
    %v2353 = vadd.f32 %v2351, %v2352
    %v2354 = vtanh.pop %v2353
    %v2355 = vmul.f32 %v2350, %v2354
    %s2356 = scalar_lea.vmem %s0, 56
    %v2357 = vld [vmem:[%s2356] sm:$0xff]
    %2358 = vmatprep.subr.mxu0 %v89
    %2359 = vmatpush1.msra.mxu0 %v88
    %2360 = vmatprep.subr.mxu0 %v93
    %2361 = vmatpush1.msra.mxu0 %v92
    %2362 = vmatprep.subr.mxu0 %v97
    %2363 = vmatpush1.msra.mxu0 %v96
    %2364 = vmatprep.subr.mxu0 %v101
    %2365 = vmatpush1.msra.mxu0 %v100
    %2366 = vmatprep.subr.mxu0 %v105
    %2367 = vmatpush1.msra.mxu0 %v104
    %2368 = vmatprep.subr.mxu0 %v109
    %2369 = vmatpush1.msra.mxu0 %v108
    %2370 = vmatprep.subr.mxu0 %v113
    %2371 = vmatpush1.msra.mxu0 %v112
    %2372 = vmatprep.subr.mxu0 %v117
    %2373 = vmatpush1.msra.mxu0 %v116
    %2374 = vmatprep.subr.mxu0 %v121
    %2375 = vmatpush1.msra.mxu0 %v120
    %2376 = vmatprep.subr.mxu0 %v125
    %2377 = vmatpush1.msra.mxu0 %v124
    %2378 = vmatprep.subr.mxu0 %v129
    %2379 = vmatpush1.msra.mxu0 %v128
    %2380 = vmatprep.subr.mxu0 %v133
    %2381 = vmatpush1.msra.mxu0 %v132
    %2382 = vmatprep.subr.mxu0 %v137
    %2383 = vmatpush1.msra.mxu0 %v136
    %2384 = vmatprep.subr.mxu0 %v141
    %2385 = vmatpush1.msra.mxu0 %v140
    %2386 = vmatprep.subr.mxu0 %v145
    %2387 = vmatpush1.msra.mxu0 %v144
    %2388 = vmatprep.subr.mxu0 %v149
    %2389 = vmatpush1.msra.mxu0 %v148
    %2390 = vmatprep.subr.mxu0 0.0
    %2391 = vmatpush1.msra.mxu0 0.0
    %2392 = vmatprep.subr.mxu0 0.0
    %2393 = vmatpush1.msra.mxu0 0.0
    %2394 = vmatprep.subr.mxu0 0.0
    %2395 = vmatpush1.msra.mxu0 0.0
    %2396 = vmatprep.subr.mxu0 0.0
    %2397 = vmatpush1.msra.mxu0 0.0
    %2398 = vmatprep.subr.mxu0 0.0
    %2399 = vmatpush1.msra.mxu0 0.0
    %2400 = vmatprep.subr.mxu0 0.0
    %2401 = vmatpush1.msra.mxu0 0.0
    %2402 = vmatprep.subr.mxu0 0.0
    %2403 = vmatpush1.msra.mxu0 0.0
    %2404 = vmatprep.subr.mxu0 0.0
    %2405 = vmatpush1.msra.mxu0 0.0
    %2406 = vmatprep.subr.mxu0 0.0
    %2407 = vmatpush1.msra.mxu0 0.0
    %2408 = vmatprep.subr.mxu0 0.0
    %2409 = vmatpush1.msra.mxu0 0.0
    %2410 = vmatprep.subr.mxu0 0.0
    %2411 = vmatpush1.msra.mxu0 0.0
    %2412 = vmatprep.subr.mxu0 0.0
    %2413 = vmatpush1.msra.mxu0 0.0
    %2414 = vmatprep.subr.mxu0 0.0
    %2415 = vmatpush1.msra.mxu0 0.0
    %2416 = vmatprep.subr.mxu0 0.0
    %2417 = vmatpush1.msra.mxu0 0.0
    %2418 = vmatprep.subr.mxu0 0.0
    %2419 = vmatpush1.msra.mxu0 0.0
    %2420 = vmatprep.subr.mxu0 0.0
    %2421 = vmatpush1.msra.mxu0 0.0
    %2422 = vmatprep.mubr.f32.mxu0 0.0
    %2423 = vmatmul.mubr.f32.gmra.mrb[0].mxu0 %v2355
    %v2424 = vpop.f32.mrb[0].mxu0
    %v2425 = vadd.f32 0.0, %v2424
    %v2426 = vpop.f32.mrb[0].mxu0
    %v2427 = vadd.f32 0.0, %v2426
    %2428 = vdwg.mxu0
    %2429 = vmatprep.subr.mxu0 %v91
    %2430 = vmatpush1.msra.mxu0 %v90
    %2431 = vmatprep.subr.mxu0 %v95
    %2432 = vmatpush1.msra.mxu0 %v94
    %2433 = vmatprep.subr.mxu0 %v99
    %2434 = vmatpush1.msra.mxu0 %v98
    %2435 = vmatprep.subr.mxu0 %v103
    %2436 = vmatpush1.msra.mxu0 %v102
    %2437 = vmatprep.subr.mxu0 %v107
    %2438 = vmatpush1.msra.mxu0 %v106
    %2439 = vmatprep.subr.mxu0 %v111
    %2440 = vmatpush1.msra.mxu0 %v110
    %2441 = vmatprep.subr.mxu0 %v115
    %2442 = vmatpush1.msra.mxu0 %v114
    %2443 = vmatprep.subr.mxu0 %v119
    %2444 = vmatpush1.msra.mxu0 %v118
    %2445 = vmatprep.subr.mxu0 %v123
    %2446 = vmatpush1.msra.mxu0 %v122
    %2447 = vmatprep.subr.mxu0 %v127
    %2448 = vmatpush1.msra.mxu0 %v126
    %2449 = vmatprep.subr.mxu0 %v131
    %2450 = vmatpush1.msra.mxu0 %v130
    %2451 = vmatprep.subr.mxu0 %v135
    %2452 = vmatpush1.msra.mxu0 %v134
    %2453 = vmatprep.subr.mxu0 %v139
    %2454 = vmatpush1.msra.mxu0 %v138
    %2455 = vmatprep.subr.mxu0 %v143
    %2456 = vmatpush1.msra.mxu0 %v142
    %2457 = vmatprep.subr.mxu0 %v147
    %2458 = vmatpush1.msra.mxu0 %v146
    %2459 = vmatprep.subr.mxu0 %v151
    %2460 = vmatpush1.msra.mxu0 %v150
    %2461 = vmatprep.subr.mxu0 0.0
    %2462 = vmatpush1.msra.mxu0 0.0
    %2463 = vmatprep.subr.mxu0 0.0
    %2464 = vmatpush1.msra.mxu0 0.0
    %2465 = vmatprep.subr.mxu0 0.0
    %2466 = vmatpush1.msra.mxu0 0.0
    %2467 = vmatprep.subr.mxu0 0.0
    %2468 = vmatpush1.msra.mxu0 0.0
    %2469 = vmatprep.subr.mxu0 0.0
    %2470 = vmatpush1.msra.mxu0 0.0
    %2471 = vmatprep.subr.mxu0 0.0
    %2472 = vmatpush1.msra.mxu0 0.0
    %2473 = vmatprep.subr.mxu0 0.0
    %2474 = vmatpush1.msra.mxu0 0.0
    %2475 = vmatprep.subr.mxu0 0.0
    %2476 = vmatpush1.msra.mxu0 0.0
    %2477 = vmatprep.subr.mxu0 0.0
    %2478 = vmatpush1.msra.mxu0 0.0
    %2479 = vmatprep.subr.mxu0 0.0
    %2480 = vmatpush1.msra.mxu0 0.0
    %2481 = vmatprep.subr.mxu0 0.0
    %2482 = vmatpush1.msra.mxu0 0.0
    %2483 = vmatprep.subr.mxu0 0.0
    %2484 = vmatpush1.msra.mxu0 0.0
    %2485 = vmatprep.subr.mxu0 0.0
    %2486 = vmatpush1.msra.mxu0 0.0
    %2487 = vmatprep.subr.mxu0 0.0
    %2488 = vmatpush1.msra.mxu0 0.0
    %2489 = vmatprep.subr.mxu0 0.0
    %2490 = vmatpush1.msra.mxu0 0.0
    %2491 = vmatprep.subr.mxu0 0.0
    %2492 = vmatpush1.msra.mxu0 0.0
    %2493 = vmatprep.mubr.f32.mxu0 0.0
    %2494 = vmatmul.mubr.f32.gmra.mrb[0].mxu0 %v2355
    %v2495 = vpop.f32.mrb[0].mxu0
    %v2496 = vadd.f32 0.0, %v2495
    %v2497 = vpop.f32.mrb[0].mxu0
    %2498 = vdwg.mxu0
    %v2500 = vsel %vm295, %v2357, 0
    %2502 = vmatprep.subr.mxu0 %v49
    %2503 = vmatpush1.msra.mxu0 %v48
    %2504 = vmatprep.subr.mxu0 %v53
    %2505 = vmatpush1.msra.mxu0 %v52
    %2506 = vmatprep.subr.mxu0 %v57
    %2507 = vmatpush1.msra.mxu0 %v56
    %2508 = vmatprep.subr.mxu0 %v61
    %2509 = vmatpush1.msra.mxu0 %v60
    %2510 = vmatprep.subr.mxu0 %v65
    %2511 = vmatpush1.msra.mxu0 %v64
    %2512 = vmatprep.subr.mxu0 %v69
    %2513 = vmatpush1.msra.mxu0 %v68
    %2514 = vmatprep.subr.mxu0 %v73
    %2515 = vmatpush1.msra.mxu0 %v72
    %2516 = vmatprep.subr.mxu0 %v77
    %2517 = vmatpush1.msra.mxu0 %v76
    %2518 = vmatprep.subr.mxu0 %v81
    %2519 = vmatpush1.msra.mxu0 %v80
    %2520 = vmatprep.subr.mxu0 %v304
    %2521 = vmatpush1.msra.mxu0 %v301
    %2522 = vmatprep.subr.mxu0 0.0
    %2523 = vmatpush1.msra.mxu0 0.0
    %2524 = vmatprep.subr.mxu0 0.0
    %2525 = vmatpush1.msra.mxu0 0.0
    %2526 = vmatprep.subr.mxu0 0.0
    %2527 = vmatpush1.msra.mxu0 0.0
    %2528 = vmatprep.subr.mxu0 0.0
    %2529 = vmatpush1.msra.mxu0 0.0
    %2530 = vmatprep.subr.mxu0 0.0
    %2531 = vmatpush1.msra.mxu0 0.0
    %2532 = vmatprep.subr.mxu0 0.0
    %2533 = vmatpush1.msra.mxu0 0.0
    %2534 = vmatprep.subr.mxu0 0.0
    %2535 = vmatpush1.msra.mxu0 0.0
    %2536 = vmatprep.subr.mxu0 0.0
    %2537 = vmatpush1.msra.mxu0 0.0
    %2538 = vmatprep.subr.mxu0 0.0
    %2539 = vmatpush1.msra.mxu0 0.0
    %2540 = vmatprep.subr.mxu0 0.0
    %2541 = vmatpush1.msra.mxu0 0.0
    %2542 = vmatprep.subr.mxu0 0.0
    %2543 = vmatpush1.msra.mxu0 0.0
    %2544 = vmatprep.subr.mxu0 0.0
    %2545 = vmatpush1.msra.mxu0 0.0
    %2546 = vmatprep.subr.mxu0 0.0
    %2547 = vmatpush1.msra.mxu0 0.0
    %2548 = vmatprep.subr.mxu0 0.0
    %2549 = vmatpush1.msra.mxu0 0.0
    %2550 = vmatprep.subr.mxu0 0.0
    %2551 = vmatpush1.msra.mxu0 0.0
    %2552 = vmatprep.subr.mxu0 0.0
    %2553 = vmatpush1.msra.mxu0 0.0
    %2554 = vmatprep.subr.mxu0 0.0
    %2555 = vmatpush1.msra.mxu0 0.0
    %2556 = vmatprep.subr.mxu0 0.0
    %2557 = vmatpush1.msra.mxu0 0.0
    %2558 = vmatprep.subr.mxu0 0.0
    %2559 = vmatpush1.msra.mxu0 0.0
    %2560 = vmatprep.subr.mxu0 0.0
    %2561 = vmatpush1.msra.mxu0 0.0
    %2562 = vmatprep.subr.mxu0 0.0
    %2563 = vmatpush1.msra.mxu0 0.0
    %2564 = vmatprep.subr.mxu0 0.0
    %2565 = vmatpush1.msra.mxu0 0.0
    %2566 = vmatprep.mubr.f32.mxu0 0.0
    %2567 = vmatmul.mubr.f32.gmra.mrb[0].mxu0 %v2500
    %v2568 = vpop.f32.mrb[0].mxu0
    %v2569 = vadd.f32 %v2425, %v2568
    %v2570 = vpop.f32.mrb[0].mxu0
    %v2571 = vadd.f32 %v2427, %v2570
    %2572 = vdwg.mxu0
    %2573 = vmatprep.subr.mxu0 %v51
    %2574 = vmatpush1.msra.mxu0 %v50
    %2575 = vmatprep.subr.mxu0 %v55
    %2576 = vmatpush1.msra.mxu0 %v54
    %2577 = vmatprep.subr.mxu0 %v59
    %2578 = vmatpush1.msra.mxu0 %v58
    %2579 = vmatprep.subr.mxu0 %v63
    %2580 = vmatpush1.msra.mxu0 %v62
    %2581 = vmatprep.subr.mxu0 %v67
    %2582 = vmatpush1.msra.mxu0 %v66
    %2583 = vmatprep.subr.mxu0 %v71
    %2584 = vmatpush1.msra.mxu0 %v70
    %2585 = vmatprep.subr.mxu0 %v75
    %2586 = vmatpush1.msra.mxu0 %v74
    %2587 = vmatprep.subr.mxu0 %v79
    %2588 = vmatpush1.msra.mxu0 %v78
    %2589 = vmatprep.subr.mxu0 %v83
    %2590 = vmatpush1.msra.mxu0 %v82
    %2591 = vmatprep.subr.mxu0 %v310
    %2592 = vmatpush1.msra.mxu0 %v307
    %2593 = vmatprep.subr.mxu0 0.0
    %2594 = vmatpush1.msra.mxu0 0.0
    %2595 = vmatprep.subr.mxu0 0.0
    %2596 = vmatpush1.msra.mxu0 0.0
    %2597 = vmatprep.subr.mxu0 0.0
    %2598 = vmatpush1.msra.mxu0 0.0
    %2599 = vmatprep.subr.mxu0 0.0
    %2600 = vmatpush1.msra.mxu0 0.0
    %2601 = vmatprep.subr.mxu0 0.0
    %2602 = vmatpush1.msra.mxu0 0.0
    %2603 = vmatprep.subr.mxu0 0.0
    %2604 = vmatpush1.msra.mxu0 0.0
    %2605 = vmatprep.subr.mxu0 0.0
    %2606 = vmatpush1.msra.mxu0 0.0
    %2607 = vmatprep.subr.mxu0 0.0
    %2608 = vmatpush1.msra.mxu0 0.0
    %2609 = vmatprep.subr.mxu0 0.0
    %2610 = vmatpush1.msra.mxu0 0.0
    %2611 = vmatprep.subr.mxu0 0.0
    %2612 = vmatpush1.msra.mxu0 0.0
    %2613 = vmatprep.subr.mxu0 0.0
    %2614 = vmatpush1.msra.mxu0 0.0
    %2615 = vmatprep.subr.mxu0 0.0
    %2616 = vmatpush1.msra.mxu0 0.0
    %2617 = vmatprep.subr.mxu0 0.0
    %2618 = vmatpush1.msra.mxu0 0.0
    %2619 = vmatprep.subr.mxu0 0.0
    %2620 = vmatpush1.msra.mxu0 0.0
    %2621 = vmatprep.subr.mxu0 0.0
    %2622 = vmatpush1.msra.mxu0 0.0
    %2623 = vmatprep.subr.mxu0 0.0
    %2624 = vmatpush1.msra.mxu0 0.0
    %2625 = vmatprep.subr.mxu0 0.0
    %2626 = vmatpush1.msra.mxu0 0.0
    %2627 = vmatprep.subr.mxu0 0.0
    %2628 = vmatpush1.msra.mxu0 0.0
    %2629 = vmatprep.subr.mxu0 0.0
    %2630 = vmatpush1.msra.mxu0 0.0
    %2631 = vmatprep.subr.mxu0 0.0
    %2632 = vmatpush1.msra.mxu0 0.0
    %2633 = vmatprep.subr.mxu0 0.0
    %2634 = vmatpush1.msra.mxu0 0.0
    %2635 = vmatprep.subr.mxu0 0.0
    %2636 = vmatpush1.msra.mxu0 0.0
    %2637 = vmatprep.mubr.f32.mxu0 0.0
    %2638 = vmatmul.mubr.f32.gmra.mrb[0].mxu0 %v2500
    %v2639 = vpop.f32.mrb[0].mxu0
    %v2640 = vadd.f32 %v2496, %v2639
    %v2641 = vpop.f32.mrb[0].mxu0
    %2642 = vdwg.mxu0
    %v2643 = vxor.u32 %v2569, 2147483648
    %v2644 = vmul.f32 %v2643, 1.442695
    %v2645 = vpow.pop %v2644
    %v2646 = vadd.f32 %v2645, 1.0
    %v2647 = vrcp.pop %v2646
    %v2648 = vmul.f32 1.0, %v2647
    %v2649 = vxor.u32 %v2571, 2147483648
    %v2650 = vmul.f32 %v2649, 1.442695
    %v2651 = vpow.pop %v2650
    %v2652 = vadd.f32 %v2651, 1.0
    %v2653 = vrcp.pop %v2652
    %v2654 = vmul.f32 1.0, %v2653
    %v2655 = vtanh.pop %v2640
    %v2656 = vmul.f32 %v2654, %v2353
    %v2657 = vmul.f32 %v2648, %v2655
    %v2658 = vadd.f32 %v2656, %v2657
    %v2659 = vld [vmem:[%s3] sm:$0xff]
    %v2660 = vld [vmem:[%s3 + $0x8] sm:$0xff]
    %v2661 = vld [vmem:[%s3 + $0x10] sm:$0xff]
    %v2662 = vld [vmem:[%s3 + $0x18] sm:$0xff]
    %v2663 = vld [vmem:[%s3 + $0x20] sm:$0xff]
    %v2664 = vld [vmem:[%s3 + $0x28] sm:$0xff]
    %v2665 = vld [vmem:[%s3 + $0x30] sm:$0xff]
    %v2666 = vld [vmem:[%s3 + $0x38] sm:$0xff]
    %v2667 = vld [vmem:[%s3 + $0x40] sm:$0xff]
    %v2668 = vld [vmem:[%s3 + $0x48] sm:$0xff]
    %v2669 = vld [vmem:[%s3 + $0x50] sm:$0xff]
    %v2670 = vld [vmem:[%s3 + $0x58] sm:$0xff]
    %v2671 = vld [vmem:[%s3 + $0x60] sm:$0xff]
    %v2672 = vld [vmem:[%s3 + $0x68] sm:$0xff]
    %v2673 = vld [vmem:[%s3 + $0x70] sm:$0xff]
    %v2674 = vld [vmem:[%s3 + $0x78] sm:$0xff]
    %v2675 = vld [vmem:[%s4] sm:$0x1]
    %v2677 = vlaneseq
    %v2678 = vshrl.u32 %v2677, 7
    %v2679 = vsub.s32 0, %v2678
    %v2680 = vrot.slane %v2675, %v2679
    %2682 = vmatprep.subr.mxu0 0.0
    %2683 = vmatpush1.msra.mxu0 %v2659
    %2684 = vmatprep.subr.mxu0 0.0
    %2685 = vmatpush1.msra.mxu0 %v2660
    %2686 = vmatprep.subr.mxu0 0.0
    %2687 = vmatpush1.msra.mxu0 %v2661
    %2688 = vmatprep.subr.mxu0 0.0
    %2689 = vmatpush1.msra.mxu0 %v2662
    %2690 = vmatprep.subr.mxu0 0.0
    %2691 = vmatpush1.msra.mxu0 %v2663
    %2692 = vmatprep.subr.mxu0 0.0
    %2693 = vmatpush1.msra.mxu0 %v2664
    %2694 = vmatprep.subr.mxu0 0.0
    %2695 = vmatpush1.msra.mxu0 %v2665
    %2696 = vmatprep.subr.mxu0 0.0
    %2697 = vmatpush1.msra.mxu0 %v2666
    %2698 = vmatprep.subr.mxu0 0.0
    %2699 = vmatpush1.msra.mxu0 %v2667
    %2700 = vmatprep.subr.mxu0 0.0
    %2701 = vmatpush1.msra.mxu0 %v2668
    %2702 = vmatprep.subr.mxu0 0.0
    %2703 = vmatpush1.msra.mxu0 %v2669
    %2704 = vmatprep.subr.mxu0 0.0
    %2705 = vmatpush1.msra.mxu0 %v2670
    %2706 = vmatprep.subr.mxu0 0.0
    %2707 = vmatpush1.msra.mxu0 %v2671
    %2708 = vmatprep.subr.mxu0 0.0
    %2709 = vmatpush1.msra.mxu0 %v2672
    %2710 = vmatprep.subr.mxu0 0.0
    %2711 = vmatpush1.msra.mxu0 %v2673
    %2712 = vmatprep.subr.mxu0 0.0
    %2713 = vmatpush1.msra.mxu0 %v2674
    %2714 = vmatprep.subr.mxu0 0.0
    %2715 = vmatpush1.msra.mxu0 0.0
    %2716 = vmatprep.subr.mxu0 0.0
    %2717 = vmatpush1.msra.mxu0 0.0
    %2718 = vmatprep.subr.mxu0 0.0
    %2719 = vmatpush1.msra.mxu0 0.0
    %2720 = vmatprep.subr.mxu0 0.0
    %2721 = vmatpush1.msra.mxu0 0.0
    %2722 = vmatprep.subr.mxu0 0.0
    %2723 = vmatpush1.msra.mxu0 0.0
    %2724 = vmatprep.subr.mxu0 0.0
    %2725 = vmatpush1.msra.mxu0 0.0
    %2726 = vmatprep.subr.mxu0 0.0
    %2727 = vmatpush1.msra.mxu0 0.0
    %2728 = vmatprep.subr.mxu0 0.0
    %2729 = vmatpush1.msra.mxu0 0.0
    %2730 = vmatprep.subr.mxu0 0.0
    %2731 = vmatpush1.msra.mxu0 0.0
    %2732 = vmatprep.subr.mxu0 0.0
    %2733 = vmatpush1.msra.mxu0 0.0
    %2734 = vmatprep.subr.mxu0 0.0
    %2735 = vmatpush1.msra.mxu0 0.0
    %2736 = vmatprep.subr.mxu0 0.0
    %2737 = vmatpush1.msra.mxu0 0.0
    %2738 = vmatprep.subr.mxu0 0.0
    %2739 = vmatpush1.msra.mxu0 0.0
    %2740 = vmatprep.subr.mxu0 0.0
    %2741 = vmatpush1.msra.mxu0 0.0
    %2742 = vmatprep.subr.mxu0 0.0
    %2743 = vmatpush1.msra.mxu0 0.0
    %2744 = vmatprep.subr.mxu0 0.0
    %2745 = vmatpush1.msra.mxu0 0.0
    %2746 = vmatprep.mubr.f32.mxu0 0.0
    %2747 = vmatmul.mubr.f32.gmra.mrb[0].mxu0 %v2658
    %v2748 = vpop.f32.mrb[0].mxu0
    %v2749 = vadd.f32 %v2680, %v2748
    %v2750 = vpop.f32.mrb[0].mxu0
    %2751 = vdwg.mxu0
    %vm2752 = vcmask 15360
    %2753 = vst.msk [vmem:[%s5] sm:$0xff] %vm2752, %v2749
    // Predicated region
    $region30: #{tpu_custom_call.1} parent=1 // pred_check
      _
    $region31: #{tpu_custom_call.1} parent=1 // pred_check_branch
      %2755 = sbr.rel (0) target = $region33
    $region32: #{tpu_custom_call.1} parent=1 // pred_region
      _
    $region33: #{tpu_custom_call.1} parent=1 // pred_fallthru
      _
    // Predicated region
    $region34: #{tpu_custom_call.1} parent=1 // pred_check
      _
    $region35: #{tpu_custom_call.1} parent=1 // pred_check_branch
      %2757 = sbr.rel (0) target = $region37
    $region36: #{tpu_custom_call.1} parent=1 // pred_region
      _
    $region37: #{tpu_custom_call.1} parent=1 // pred_fallthru
      _
    %2758 = vsyncpa [#allocation3], 1
    %2759 = vsyncpa [#allocation5], 1

</llo_original>
